<compile_context>
chip_gen: v7x
topology: tpu7x:2x2x1
jax: 0.10.0
libtpu: 0.0.40
codegen_flags: <defaults>
</compile_context>

<pallas_src>
import math
import jax
import jax.numpy as jnp
from jax.experimental import pallas as pl
from jax.experimental.pallas import tpu as pltpu

# ------------------------- small stand-in config -------------------------
BATCH = 2
IN_CH = 3
IMG = 32
PATCH = 16
N_PATCH = (IMG // PATCH) ** 2          # 4 patches
SEQ = N_PATCH + 1                      # 5 real tokens (cls + patches)
SEQ_PAD = 8                            # pad token axis to a full sublane group
TOK = BATCH * SEQ_PAD                  # 16 rows: batch folded into the block
HIDDEN = 128                           # 768 in ViT-B/16
HEADS = 4                              # 12 in ViT-B/16
HEAD_DIM = HIDDEN // HEADS             # 32
LAYERS = 2                             # 12 in ViT-B/16
MLP_DIM = 256                          # 3072 in ViT-B/16
HEAD_HIDDEN = 64                       # 512 in the original custom head
NUM_CLASSES = 4
PATCH_DIM = IN_CH * PATCH * PATCH      # 768
EPS = 1e-6                             # torchvision ViT LayerNorm eps


# ------------------------------ helpers ------------------------------
def _layernorm(x, w, b):
    mu = jnp.mean(x, axis=-1, keepdims=True)
    var = jnp.mean(jnp.square(x - mu), axis=-1, keepdims=True)
    return (x - mu) * jax.lax.rsqrt(var + EPS) * w + b


def _gelu(x):
    # TODO(synk): torch nn.GELU uses the exact erf form; tanh approximation used here.
    c = math.sqrt(2.0 / math.pi)
    return 0.5 * x * (1.0 + jnp.tanh(c * (x + 0.044715 * x * x * x)))


# --------------------------- fused ViT kernel ---------------------------
# grid = (LAYERS,).  The running token state (TOK, D) lives in a VMEM scratch
# carried across the layer axis.  Patch embedding runs under pl.when(l == 0),
# the final LN + classifier head under pl.when(l == last), emitting only logits.
def vit_kernel(patches_ref, cw_ref, base_ref,
               ln1w_ref, ln1b_ref, wqkv_ref, bqkv_ref, wo_ref, bo_ref,
               ln2w_ref, ln2b_ref, w1_ref, b1_ref, w2_ref, b2_ref,
               lnfw_ref, lnfb_ref, hw1_ref, hb1_ref, hw2_ref, hb2_ref,
               out_ref, state):
    l = pl.program_id(0)

    @pl.when(l == 0)
    def _():
        # Conv2d(3, D, 16, stride=16) as one (TOK, PATCH_DIM) @ (PATCH_DIM, D) matmul.
        # cls token, pos embedding and conv bias are pre-baked into `base`; the
        # zero-padded cls/pad rows of `patches` contribute nothing to the matmul.
        state[...] = base_ref[...] + jnp.dot(
            patches_ref[...].astype(jnp.bfloat16), cw_ref[...],
            preferred_element_type=jnp.float32)

    x = state[...]                                         # (TOK, D) f32 residual stream

    # ---------------- multi-head self-attention ----------------
    h = _layernorm(x, ln1w_ref[0], ln1b_ref[0])
    qkv = jnp.dot(h.astype(jnp.bfloat16), wqkv_ref[0],
                  preferred_element_type=jnp.float32) + bqkv_ref[0]
    q = qkv[:, :HIDDEN]                     # 1/sqrt(HEAD_DIM) already folded into wqkv/bqkv
    k = qkv[:, HIDDEN:2 * HIDDEN]
    v = qkv[:, 2 * HIDDEN:]

    # mask padded key positions (real tokens are 0..SEQ-1 inside each example block)
    key_mask = jax.lax.broadcasted_iota(jnp.int32, (SEQ_PAD, SEQ_PAD), 1) < SEQ

    ctx_parts = []
    for b in range(BATCH):                  # static unroll; attention stays per-example
        r0 = b * SEQ_PAD
        qb = q[r0:r0 + SEQ_PAD, :]
        kb = k[r0:r0 + SEQ_PAD, :]
        vb = v[r0:r0 + SEQ_PAD, :]
        head_ctx = []
        for hd in range(HEADS):             # tiny static unroll (use fori_loop at real scale)
            c0 = hd * HEAD_DIM
            s = jax.lax.dot_general(
                qb[:, c0:c0 + HEAD_DIM], kb[:, c0:c0 + HEAD_DIM],
                (((1,), (1,)), ((), ())), preferred_element_type=jnp.float32)
            s = jnp.where(key_mask, s, -1e30)
            s = s - jnp.max(s, axis=-1, keepdims=True)
            p = jnp.exp(s)
            p = p * pl.reciprocal(jnp.sum(p, axis=-1, keepdims=True), approx=True)
            head_ctx.append(jnp.dot(p, vb[:, c0:c0 + HEAD_DIM],
                                    preferred_element_type=jnp.float32))
        ctx_parts.append(jnp.concatenate(head_ctx, axis=-1))   # (SEQ_PAD, D)
    ctx = jnp.concatenate(ctx_parts, axis=0)                   # (TOK, D)

    # single concatenated K=128 output projection instead of 4 K=32 per-head matmuls
    x = x + jnp.dot(ctx.astype(jnp.bfloat16), wo_ref[0],
                    preferred_element_type=jnp.float32) + bo_ref[0]

    # ---------------- MLP block ----------------
    h = _layernorm(x, ln2w_ref[0], ln2b_ref[0])
    h = jnp.dot(h.astype(jnp.bfloat16), w1_ref[0],
                preferred_element_type=jnp.float32) + b1_ref[0]
    h = _gelu(h)
    h = jnp.dot(h.astype(jnp.bfloat16), w2_ref[0],
                preferred_element_type=jnp.float32) + b2_ref[0]
    x = x + h

    state[...] = x

    @pl.when(l == pl.num_programs(0) - 1)
    def _():
        # final encoder LN (per-token, so applying it to the cls rows only is exact)
        # + Linear(D, HEAD_HIDDEN) + ReLU + (Dropout=identity) + Linear(HEAD_HIDDEN, C)
        cls_tok = jnp.concatenate(
            [x[b * SEQ_PAD:b * SEQ_PAD + 1, :] for b in range(BATCH)], axis=0)
        c = _layernorm(cls_tok, lnfw_ref[...], lnfb_ref[...])
        hh = jnp.dot(c, hw1_ref[...], preferred_element_type=jnp.float32) + hb1_ref[...]
        hh = jnp.maximum(hh, 0.0)
        out_ref[...] = jnp.dot(hh, hw2_ref[...],
                               preferred_element_type=jnp.float32) + hb2_ref[...]


# ------------------------------ glue / params ------------------------------
def extract_patches(x):
    # NCHW -> (B, n_patches, C*PATCH*PATCH), ordered (c, kh, kw) to match conv weight.
    b, c, hh, ww = x.shape
    gh, gw = hh // PATCH, ww // PATCH
    x = x.reshape(b, c, gh, PATCH, gw, PATCH)
    x = jnp.transpose(x, (0, 2, 4, 1, 3, 5))
    return x.reshape(b, gh * gw, c * PATCH * PATCH)


def init_params(key):
    keys = iter(jax.random.split(key, 16))
    nrm = lambda shape: (0.02 * jax.random.normal(next(keys), shape)).astype(jnp.float32)
    scale = 1.0 / math.sqrt(HEAD_DIM)
    p = {}

    # Conv2d(3, D, 16, 16): torch layout (D, C, kh, kw) -> (C*kh*kw, D) for x @ W, bf16.
    conv_w = nrm((HIDDEN, IN_CH, PATCH, PATCH))
    p["conv_w"] = conv_w.reshape(HIDDEN, PATCH_DIM).T.astype(jnp.bfloat16)
    p["conv_b"] = nrm((1, HIDDEN))
    p["class_token"] = nrm((1, 1, HIDDEN))
    p["pos"] = nrm((1, SEQ, HIDDEN))

    # stacked per-layer encoder weights, pre-transposed to (in, out) for x @ W.
    p["ln1w"] = jnp.ones((LAYERS, 1, HIDDEN), jnp.float32)
    p["ln1b"] = jnp.zeros((LAYERS, 1, HIDDEN), jnp.float32)
    wqkv = nrm((LAYERS, HIDDEN, 3 * HIDDEN))
    bqkv = nrm((LAYERS, 1, 3 * HIDDEN))
    # fold the attention 1/sqrt(head_dim) scale into the Q projection at init time
    wqkv = wqkv.at[:, :, :HIDDEN].multiply(scale)
    bqkv = bqkv.at[:, :, :HIDDEN].multiply(scale)
    p["wqkv"] = wqkv.astype(jnp.bfloat16)
    p["bqkv"] = bqkv
    p["wo"] = nrm((LAYERS, HIDDEN, HIDDEN)).astype(jnp.bfloat16)
    p["bo"] = nrm((LAYERS, 1, HIDDEN))
    p["ln2w"] = jnp.ones((LAYERS, 1, HIDDEN), jnp.float32)
    p["ln2b"] = jnp.zeros((LAYERS, 1, HIDDEN), jnp.float32)
    p["w1"] = nrm((LAYERS, HIDDEN, MLP_DIM)).astype(jnp.bfloat16)
    p["b1"] = nrm((LAYERS, 1, MLP_DIM))
    p["w2"] = nrm((LAYERS, MLP_DIM, HIDDEN)).astype(jnp.bfloat16)
    p["b2"] = nrm((LAYERS, 1, HIDDEN))

    # final encoder LN + custom classifier head (tiny -> keep f32)
    p["lnf_w"] = jnp.ones((1, HIDDEN), jnp.float32)
    p["lnf_b"] = jnp.zeros((1, HIDDEN), jnp.float32)
    p["hw1"] = nrm((HIDDEN, HEAD_HIDDEN))
    p["hb1"] = nrm((1, HEAD_HIDDEN))
    p["hw2"] = nrm((HEAD_HIDDEN, NUM_CLASSES))
    p["hb2"] = nrm((1, NUM_CLASSES))
    return p


def mobile_retina_vit(x, p):
    assert x.shape[0] == BATCH

    # im2col, padded so row b*SEQ_PAD is the (zero) cls slot and rows 5..7 are pad.
    patches = extract_patches(x)                                  # (B, N_PATCH, PATCH_DIM)
    patches_pad = jnp.zeros((BATCH, SEQ_PAD, PATCH_DIM), jnp.float32)
    patches_pad = patches_pad.at[:, 1:1 + N_PATCH, :].set(patches)
    patches_pad = patches_pad.reshape(TOK, PATCH_DIM)

    # token template: cls+pos[0] on cls rows, pos+conv_bias on patch rows, 0 on pad rows.
    base_one = jnp.zeros((SEQ_PAD, HIDDEN), jnp.float32)
    base_one = base_one.at[0, :].set(p["class_token"][0, 0] + p["pos"][0, 0])
    base_one = base_one.at[1:SEQ, :].set(p["pos"][0, 1:SEQ] + p["conv_b"])
    base = jnp.tile(base_one[None], (BATCH, 1, 1)).reshape(TOK, HIDDEN)

    fixed = lambda shape: pl.BlockSpec(shape, lambda l: (0, 0))
    per_layer = lambda shape: pl.BlockSpec(shape, lambda l: (l, 0, 0))

    return pl.pallas_call(
        vit_kernel,
        out_shape=jax.ShapeDtypeStruct((BATCH, NUM_CLASSES), jnp.float32),
        grid=(LAYERS,),
        in_specs=[
            fixed((TOK, PATCH_DIM)),                     # padded im2col patches
            fixed((PATCH_DIM, HIDDEN)),                  # conv weight (bf16)
            fixed((TOK, HIDDEN)),                        # cls/pos/conv-bias template
            per_layer((1, 1, HIDDEN)),                   # ln1 w
            per_layer((1, 1, HIDDEN)),                   # ln1 b
            per_layer((1, HIDDEN, 3 * HIDDEN)),          # wqkv (bf16)
            per_layer((1, 1, 3 * HIDDEN)),               # bqkv
            per_layer((1, HIDDEN, HIDDEN)),              # wo (bf16)
            per_layer((1, 1, HIDDEN)),                   # bo
            per_layer((1, 1, HIDDEN)),                   # ln2 w
            per_layer((1, 1, HIDDEN)),                   # ln2 b
            per_layer((1, HIDDEN, MLP_DIM)),             # w1 (bf16)
            per_layer((1, 1, MLP_DIM)),                  # b1
            per_layer((1, MLP_DIM, HIDDEN)),             # w2 (bf16)
            per_layer((1, 1, HIDDEN)),                   # b2
            fixed((1, HIDDEN)),                          # final LN w
            fixed((1, HIDDEN)),                          # final LN b
            fixed((HIDDEN, HEAD_HIDDEN)),                # head w1
            fixed((1, HEAD_HIDDEN)),                     # head b1
            fixed((HEAD_HIDDEN, NUM_CLASSES)),           # head w2
            fixed((1, NUM_CLASSES)),                     # head b2
        ],
        out_specs=pl.BlockSpec((BATCH, NUM_CLASSES), lambda l: (0, 0)),
        scratch_shapes=[pltpu.VMEM((TOK, HIDDEN), jnp.float32)],
        compiler_params=pltpu.CompilerParams(
            dimension_semantics=("arbitrary",)),         # state carried across layer axis
    )(patches_pad, p["conv_w"], base,
      p["ln1w"], p["ln1b"], p["wqkv"], p["bqkv"], p["wo"], p["bo"],
      p["ln2w"], p["ln2b"], p["w1"], p["b1"], p["w2"], p["b2"],
      p["lnf_w"], p["lnf_b"], p["hw1"], p["hb1"], p["hw2"], p["hb2"])


if __name__ == "__main__":
    key = jax.random.PRNGKey(0)
    kx, kp = jax.random.split(key)
    x = jax.random.normal(kx, (BATCH, IN_CH, IMG, IMG), dtype=jnp.float32)
    params = init_params(kp)
    logits = jax.block_until_ready(mobile_retina_vit(x, params))
    assert logits.shape == (BATCH, NUM_CLASSES)
    assert bool(jnp.all(jnp.isfinite(logits)))
    print("KERNEL_OK")
</pallas_src>

<mosaic_0001>
module attributes {stable_mosaic.version = 11 : i64} {
  func.func @vit_kernel(%arg0: i32, %arg1: memref<16x768xf32, #tpu.memory_space<vmem>>, %arg2: memref<768x128xbf16, #tpu.memory_space<vmem>>, %arg3: memref<16x128xf32, #tpu.memory_space<vmem>>, %arg4: memref<1x1x128xf32, #tpu.memory_space<vmem>>, %arg5: memref<1x1x128xf32, #tpu.memory_space<vmem>>, %arg6: memref<1x128x384xbf16, #tpu.memory_space<vmem>>, %arg7: memref<1x1x384xf32, #tpu.memory_space<vmem>>, %arg8: memref<1x128x128xbf16, #tpu.memory_space<vmem>>, %arg9: memref<1x1x128xf32, #tpu.memory_space<vmem>>, %arg10: memref<1x1x128xf32, #tpu.memory_space<vmem>>, %arg11: memref<1x1x128xf32, #tpu.memory_space<vmem>>, %arg12: memref<1x128x256xbf16, #tpu.memory_space<vmem>>, %arg13: memref<1x1x256xf32, #tpu.memory_space<vmem>>, %arg14: memref<1x256x128xbf16, #tpu.memory_space<vmem>>, %arg15: memref<1x1x128xf32, #tpu.memory_space<vmem>>, %arg16: memref<1x128xf32, #tpu.memory_space<vmem>>, %arg17: memref<1x128xf32, #tpu.memory_space<vmem>>, %arg18: memref<128x64xf32, #tpu.memory_space<vmem>>, %arg19: memref<1x64xf32, #tpu.memory_space<vmem>>, %arg20: memref<64x4xf32, #tpu.memory_space<vmem>>, %arg21: memref<1x4xf32, #tpu.memory_space<vmem>>, %arg22: memref<2x4xf32, #tpu.memory_space<vmem>>, %arg23: memref<16x128xf32, #tpu.memory_space<vmem>>) attributes {dimension_semantics = [#tpu.dimension_semantics<arbitrary>], iteration_bounds = array<i64: 2>, scalar_prefetch = 0 : i64, scratch_operands = 1 : i64, tpu.core_type = #tpu.core_type<tc>, window_params = [{pipeline_mode = #tpu.pipeline_mode<synchronous>, transform_indices = @transform_0, window_bounds = array<i64: 16, 768>}, {pipeline_mode = #tpu.pipeline_mode<synchronous>, transform_indices = @transform_1, window_bounds = array<i64: 768, 128>}, {pipeline_mode = #tpu.pipeline_mode<synchronous>, transform_indices = @transform_2, window_bounds = array<i64: 16, 128>}, {transform_indices = @transform_3, window_bounds = array<i64: 1, 1, 128>}, {transform_indices = @transform_4, window_bounds = array<i64: 1, 1, 128>}, {transform_indices = @transform_5, window_bounds = array<i64: 1, 128, 384>}, {transform_indices = @transform_6, window_bounds = array<i64: 1, 1, 384>}, {transform_indices = @transform_7, window_bounds = array<i64: 1, 128, 128>}, {transform_indices = @transform_8, window_bounds = array<i64: 1, 1, 128>}, {transform_indices = @transform_9, window_bounds = array<i64: 1, 1, 128>}, {transform_indices = @transform_10, window_bounds = array<i64: 1, 1, 128>}, {transform_indices = @transform_11, window_bounds = array<i64: 1, 128, 256>}, {transform_indices = @transform_12, window_bounds = array<i64: 1, 1, 256>}, {transform_indices = @transform_13, window_bounds = array<i64: 1, 256, 128>}, {transform_indices = @transform_14, window_bounds = array<i64: 1, 1, 128>}, {pipeline_mode = #tpu.pipeline_mode<synchronous>, transform_indices = @transform_15, window_bounds = array<i64: 1, 128>}, {pipeline_mode = #tpu.pipeline_mode<synchronous>, transform_indices = @transform_16, window_bounds = array<i64: 1, 128>}, {pipeline_mode = #tpu.pipeline_mode<synchronous>, transform_indices = @transform_17, window_bounds = array<i64: 128, 64>}, {pipeline_mode = #tpu.pipeline_mode<synchronous>, transform_indices = @transform_18, window_bounds = array<i64: 1, 64>}, {pipeline_mode = #tpu.pipeline_mode<synchronous>, transform_indices = @transform_19, window_bounds = array<i64: 64, 4>}, {pipeline_mode = #tpu.pipeline_mode<synchronous>, transform_indices = @transform_20, window_bounds = array<i64: 1, 4>}, {pipeline_mode = #tpu.pipeline_mode<synchronous>, transform_indices = @transform_21, window_bounds = array<i64: 2, 4>}]} {
    %c0_i32 = arith.constant 0 : i32
    %0 = arith.cmpi eq, %arg0, %c0_i32 : i32
    %1 = arith.extui %0 : i1 to i32
    %c0_i32_0 = arith.constant 0 : i32
    %2 = arith.cmpi ne, %1, %c0_i32_0 : i32
    scf.if %2 {
      %c0_98 = arith.constant 0 : index
      %c0_99 = arith.constant 0 : index
      %258 = vector.load %arg3[%c0_98, %c0_99] : memref<16x128xf32, #tpu.memory_space<vmem>>, vector<16x128xf32>
      %c0_100 = arith.constant 0 : index
      %c0_101 = arith.constant 0 : index
      %259 = vector.load %arg1[%c0_100, %c0_101] : memref<16x768xf32, #tpu.memory_space<vmem>>, vector<16x768xf32>
      %260 = arith.truncf %259 : vector<16x768xf32> to vector<16x768xbf16>
      %c0_102 = arith.constant 0 : index
      %c0_103 = arith.constant 0 : index
      %261 = vector.load %arg2[%c0_102, %c0_103] : memref<768x128xbf16, #tpu.memory_space<vmem>>, vector<768x128xbf16>
      %cst_104 = arith.constant dense<0.000000e+00> : vector<16x128xf32>
      %262 = tpu.matmul %260, %261, %cst_104 {dimension_numbers = #tpu.dot_dimension_numbers<[1], [0], [0], [1], [0, 0, 1, 1], [], []>} : vector<16x768xbf16>, vector<768x128xbf16>, vector<16x128xf32> -> vector<16x128xf32>
      %263 = arith.addf %258, %262 : vector<16x128xf32>
      %c0_105 = arith.constant 0 : index
      %c0_106 = arith.constant 0 : index
      %264 = vector.load %arg23[%c0_105, %c0_106] : memref<16x128xf32, #tpu.memory_space<vmem>>, vector<16x128xf32>
      tpu.vector_store %arg23[%c0_105, %c0_106], %263 {strides = array<i32>} : memref<16x128xf32, #tpu.memory_space<vmem>>, vector<16x128xf32>,
    } else {
    }
    %c0 = arith.constant 0 : index
    %c0_1 = arith.constant 0 : index
    %3 = vector.load %arg23[%c0, %c0_1] : memref<16x128xf32, #tpu.memory_space<vmem>>, vector<16x128xf32>
    %c0_2 = arith.constant 0 : index
    %c0_3 = arith.constant 0 : index
    %c0_4 = arith.constant 0 : index
    %4 = vector.load %arg4[%c0_2, %c0_3, %c0_4] : memref<1x1x128xf32, #tpu.memory_space<vmem>>, vector<1x1x128xf32>
    %5 = vector.shape_cast %4 : vector<1x1x128xf32> to vector<1x128xf32>
    %c0_5 = arith.constant 0 : index
    %c0_6 = arith.constant 0 : index
    %c0_7 = arith.constant 0 : index
    %6 = vector.load %arg5[%c0_5, %c0_6, %c0_7] : memref<1x1x128xf32, #tpu.memory_space<vmem>>, vector<1x1x128xf32>
    %7 = vector.shape_cast %6 : vector<1x1x128xf32> to vector<1x128xf32>
    %cst = arith.constant dense<0.000000e+00> : vector<16xf32>
    %8 = vector.multi_reduction <add>, %3, %cst [1] : vector<16x128xf32> to vector<16xf32>
    %9 = vector.shape_cast %8 : vector<16xf32> to vector<16x1xf32>
    %cst_8 = arith.constant 1.280000e+02 : f32
    %10 = vector.broadcast %cst_8 : f32 to vector<16x1xf32>
    %11 = arith.divf %9, %10 : vector<16x1xf32>
    %12 = vector.broadcast %11 : vector<16x1xf32> to vector<16x128xf32>
    %13 = arith.subf %3, %12 : vector<16x128xf32>
    %14 = arith.mulf %13, %13 : vector<16x128xf32>
    %cst_9 = arith.constant dense<0.000000e+00> : vector<16xf32>
    %15 = vector.multi_reduction <add>, %14, %cst_9 [1] : vector<16x128xf32> to vector<16xf32>
    %16 = vector.shape_cast %15 : vector<16xf32> to vector<16x1xf32>
    %cst_10 = arith.constant 1.280000e+02 : f32
    %17 = vector.broadcast %cst_10 : f32 to vector<16x1xf32>
    %18 = arith.divf %16, %17 : vector<16x1xf32>
    %19 = vector.broadcast %11 : vector<16x1xf32> to vector<16x128xf32>
    %20 = arith.subf %3, %19 : vector<16x128xf32>
    %cst_11 = arith.constant 9.99999997E-7 : f32
    %21 = vector.broadcast %cst_11 : f32 to vector<16x1xf32>
    %22 = arith.addf %18, %21 : vector<16x1xf32>
    %23 = math.rsqrt %22 : vector<16x1xf32>
    %24 = vector.broadcast %23 : vector<16x1xf32> to vector<16x128xf32>
    %25 = arith.mulf %20, %24 : vector<16x128xf32>
    %26 = vector.broadcast %5 : vector<1x128xf32> to vector<16x128xf32>
    %27 = arith.mulf %25, %26 : vector<16x128xf32>
    %28 = vector.broadcast %7 : vector<1x128xf32> to vector<16x128xf32>
    %29 = arith.addf %27, %28 : vector<16x128xf32>
    %30 = arith.truncf %29 : vector<16x128xf32> to vector<16x128xbf16>
    %c0_12 = arith.constant 0 : index
    %c0_13 = arith.constant 0 : index
    %c0_14 = arith.constant 0 : index
    %31 = vector.load %arg6[%c0_12, %c0_13, %c0_14] : memref<1x128x384xbf16, #tpu.memory_space<vmem>>, vector<1x128x384xbf16>
    %32 = vector.shape_cast %31 : vector<1x128x384xbf16> to vector<128x384xbf16>
    %cst_15 = arith.constant dense<0.000000e+00> : vector<16x384xf32>
    %33 = tpu.matmul %30, %32, %cst_15 {dimension_numbers = #tpu.dot_dimension_numbers<[1], [0], [0], [1], [0, 0, 1, 1], [], []>} : vector<16x128xbf16>, vector<128x384xbf16>, vector<16x384xf32> -> vector<16x384xf32>
    %c0_16 = arith.constant 0 : index
    %c0_17 = arith.constant 0 : index
    %c0_18 = arith.constant 0 : index
    %34 = vector.load %arg7[%c0_16, %c0_17, %c0_18] : memref<1x1x384xf32, #tpu.memory_space<vmem>>, vector<1x1x384xf32>
    %35 = vector.shape_cast %34 : vector<1x1x384xf32> to vector<1x384xf32>
    %36 = vector.broadcast %35 : vector<1x384xf32> to vector<16x384xf32>
    %37 = arith.addf %33, %36 : vector<16x384xf32>
    %38 = vector.extract_strided_slice %37 {offsets = [0, 0], sizes = [16, 128], strides = [1, 1]} : vector<16x384xf32> to vector<16x128xf32>
    %39 = vector.extract_strided_slice %37 {offsets = [0, 128], sizes = [16, 128], strides = [1, 1]} : vector<16x384xf32> to vector<16x128xf32>
    %40 = vector.extract_strided_slice %37 {offsets = [0, 256], sizes = [16, 128], strides = [1, 1]} : vector<16x384xf32> to vector<16x128xf32>
    %41 = tpu.iota {dimensions = array<i32: 1>} : vector<8x8xi32>
    %c5_i32 = arith.constant 5 : i32
    %42 = vector.broadcast %c5_i32 : i32 to vector<8x8xi32>
    %43 = arith.cmpi slt, %41, %42 : vector<8x8xi32>
    %44 = vector.extract_strided_slice %38 {offsets = [0, 0], sizes = [8, 128], strides = [1, 1]} : vector<16x128xf32> to vector<8x128xf32>
    %45 = vector.extract_strided_slice %39 {offsets = [0, 0], sizes = [8, 128], strides = [1, 1]} : vector<16x128xf32> to vector<8x128xf32>
    %46 = vector.extract_strided_slice %40 {offsets = [0, 0], sizes = [8, 128], strides = [1, 1]} : vector<16x128xf32> to vector<8x128xf32>
    %47 = vector.extract_strided_slice %44 {offsets = [0, 0], sizes = [8, 32], strides = [1, 1]} : vector<8x128xf32> to vector<8x32xf32>
    %48 = vector.extract_strided_slice %45 {offsets = [0, 0], sizes = [8, 32], strides = [1, 1]} : vector<8x128xf32> to vector<8x32xf32>
    %cst_19 = arith.constant dense<0.000000e+00> : vector<8x8xf32>
    %49 = tpu.matmul %47, %48, %cst_19 {dimension_numbers = #tpu.dot_dimension_numbers<[1], [1], [0], [0], [0, 0, 1, 0], [], []>} : vector<8x32xf32>, vector<8x32xf32>, vector<8x8xf32> -> vector<8x8xf32>
    %cst_20 = arith.constant -1.000000e+30 : f32
    %50 = vector.broadcast %cst_20 : f32 to vector<8x8xf32>
    %51 = arith.select %43, %49, %50 : vector<8x8xi1>, vector<8x8xf32>
    %cst_21 = arith.constant dense<0xFF800000> : vector<8xf32>
    %52 = vector.multi_reduction <maximumf>, %51, %cst_21 [1] : vector<8x8xf32> to vector<8xf32>
    %53 = vector.shape_cast %52 : vector<8xf32> to vector<8x1xf32>
    %54 = vector.broadcast %53 : vector<8x1xf32> to vector<8x8xf32>
    %55 = arith.subf %51, %54 : vector<8x8xf32>
    %56 = math.exp %55 : vector<8x8xf32>
    %cst_22 = arith.constant dense<0.000000e+00> : vector<8xf32>
    %57 = vector.multi_reduction <add>, %56, %cst_22 [1] : vector<8x8xf32> to vector<8xf32>
    %58 = vector.shape_cast %57 : vector<8xf32> to vector<8x1xf32>
    %59 = tpu.reciprocal %58 {approx = true} : vector<8x1xf32> -> vector<8x1xf32>
    %60 = vector.broadcast %59 : vector<8x1xf32> to vector<8x8xf32>
    %61 = arith.mulf %56, %60 : vector<8x8xf32>
    %62 = vector.extract_strided_slice %46 {offsets = [0, 0], sizes = [8, 32], strides = [1, 1]} : vector<8x128xf32> to vector<8x32xf32>
    %cst_23 = arith.constant dense<0.000000e+00> : vector<8x32xf32>
    %63 = tpu.matmul %61, %62, %cst_23 {dimension_numbers = #tpu.dot_dimension_numbers<[1], [0], [0], [1], [0, 0, 1, 1], [], []>} : vector<8x8xf32>, vector<8x32xf32>, vector<8x32xf32> -> vector<8x32xf32>
    %64 = vector.extract_strided_slice %44 {offsets = [0, 32], sizes = [8, 32], strides = [1, 1]} : vector<8x128xf32> to vector<8x32xf32>
    %65 = vector.extract_strided_slice %45 {offsets = [0, 32], sizes = [8, 32], strides = [1, 1]} : vector<8x128xf32> to vector<8x32xf32>
    %cst_24 = arith.constant dense<0.000000e+00> : vector<8x8xf32>
    %66 = tpu.matmul %64, %65, %cst_24 {dimension_numbers = #tpu.dot_dimension_numbers<[1], [1], [0], [0], [0, 0, 1, 0], [], []>} : vector<8x32xf32>, vector<8x32xf32>, vector<8x8xf32> -> vector<8x8xf32>
    %cst_25 = arith.constant -1.000000e+30 : f32
    %67 = vector.broadcast %cst_25 : f32 to vector<8x8xf32>
    %68 = arith.select %43, %66, %67 : vector<8x8xi1>, vector<8x8xf32>
    %cst_26 = arith.constant dense<0xFF800000> : vector<8xf32>
    %69 = vector.multi_reduction <maximumf>, %68, %cst_26 [1] : vector<8x8xf32> to vector<8xf32>
    %70 = vector.shape_cast %69 : vector<8xf32> to vector<8x1xf32>
    %71 = vector.broadcast %70 : vector<8x1xf32> to vector<8x8xf32>
    %72 = arith.subf %68, %71 : vector<8x8xf32>
    %73 = math.exp %72 : vector<8x8xf32>
    %cst_27 = arith.constant dense<0.000000e+00> : vector<8xf32>
    %74 = vector.multi_reduction <add>, %73, %cst_27 [1] : vector<8x8xf32> to vector<8xf32>
    %75 = vector.shape_cast %74 : vector<8xf32> to vector<8x1xf32>
    %76 = tpu.reciprocal %75 {approx = true} : vector<8x1xf32> -> vector<8x1xf32>
    %77 = vector.broadcast %76 : vector<8x1xf32> to vector<8x8xf32>
    %78 = arith.mulf %73, %77 : vector<8x8xf32>
    %79 = vector.extract_strided_slice %46 {offsets = [0, 32], sizes = [8, 32], strides = [1, 1]} : vector<8x128xf32> to vector<8x32xf32>
    %cst_28 = arith.constant dense<0.000000e+00> : vector<8x32xf32>
    %80 = tpu.matmul %78, %79, %cst_28 {dimension_numbers = #tpu.dot_dimension_numbers<[1], [0], [0], [1], [0, 0, 1, 1], [], []>} : vector<8x8xf32>, vector<8x32xf32>, vector<8x32xf32> -> vector<8x32xf32>
    %81 = vector.extract_strided_slice %44 {offsets = [0, 64], sizes = [8, 32], strides = [1, 1]} : vector<8x128xf32> to vector<8x32xf32>
    %82 = vector.extract_strided_slice %45 {offsets = [0, 64], sizes = [8, 32], strides = [1, 1]} : vector<8x128xf32> to vector<8x32xf32>
    %cst_29 = arith.constant dense<0.000000e+00> : vector<8x8xf32>
    %83 = tpu.matmul %81, %82, %cst_29 {dimension_numbers = #tpu.dot_dimension_numbers<[1], [1], [0], [0], [0, 0, 1, 0], [], []>} : vector<8x32xf32>, vector<8x32xf32>, vector<8x8xf32> -> vector<8x8xf32>
    %cst_30 = arith.constant -1.000000e+30 : f32
    %84 = vector.broadcast %cst_30 : f32 to vector<8x8xf32>
    %85 = arith.select %43, %83, %84 : vector<8x8xi1>, vector<8x8xf32>
    %cst_31 = arith.constant dense<0xFF800000> : vector<8xf32>
    %86 = vector.multi_reduction <maximumf>, %85, %cst_31 [1] : vector<8x8xf32> to vector<8xf32>
    %87 = vector.shape_cast %86 : vector<8xf32> to vector<8x1xf32>
    %88 = vector.broadcast %87 : vector<8x1xf32> to vector<8x8xf32>
    %89 = arith.subf %85, %88 : vector<8x8xf32>
    %90 = math.exp %89 : vector<8x8xf32>
    %cst_32 = arith.constant dense<0.000000e+00> : vector<8xf32>
    %91 = vector.multi_reduction <add>, %90, %cst_32 [1] : vector<8x8xf32> to vector<8xf32>
    %92 = vector.shape_cast %91 : vector<8xf32> to vector<8x1xf32>
    %93 = tpu.reciprocal %92 {approx = true} : vector<8x1xf32> -> vector<8x1xf32>
    %94 = vector.broadcast %93 : vector<8x1xf32> to vector<8x8xf32>
    %95 = arith.mulf %90, %94 : vector<8x8xf32>
    %96 = vector.extract_strided_slice %46 {offsets = [0, 64], sizes = [8, 32], strides = [1, 1]} : vector<8x128xf32> to vector<8x32xf32>
    %cst_33 = arith.constant dense<0.000000e+00> : vector<8x32xf32>
    %97 = tpu.matmul %95, %96, %cst_33 {dimension_numbers = #tpu.dot_dimension_numbers<[1], [0], [0], [1], [0, 0, 1, 1], [], []>} : vector<8x8xf32>, vector<8x32xf32>, vector<8x32xf32> -> vector<8x32xf32>
    %98 = vector.extract_strided_slice %44 {offsets = [0, 96], sizes = [8, 32], strides = [1, 1]} : vector<8x128xf32> to vector<8x32xf32>
    %99 = vector.extract_strided_slice %45 {offsets = [0, 96], sizes = [8, 32], strides = [1, 1]} : vector<8x128xf32> to vector<8x32xf32>
    %cst_34 = arith.constant dense<0.000000e+00> : vector<8x8xf32>
    %100 = tpu.matmul %98, %99, %cst_34 {dimension_numbers = #tpu.dot_dimension_numbers<[1], [1], [0], [0], [0, 0, 1, 0], [], []>} : vector<8x32xf32>, vector<8x32xf32>, vector<8x8xf32> -> vector<8x8xf32>
    %cst_35 = arith.constant -1.000000e+30 : f32
    %101 = vector.broadcast %cst_35 : f32 to vector<8x8xf32>
    %102 = arith.select %43, %100, %101 : vector<8x8xi1>, vector<8x8xf32>
    %cst_36 = arith.constant dense<0xFF800000> : vector<8xf32>
    %103 = vector.multi_reduction <maximumf>, %102, %cst_36 [1] : vector<8x8xf32> to vector<8xf32>
    %104 = vector.shape_cast %103 : vector<8xf32> to vector<8x1xf32>
    %105 = vector.broadcast %104 : vector<8x1xf32> to vector<8x8xf32>
    %106 = arith.subf %102, %105 : vector<8x8xf32>
    %107 = math.exp %106 : vector<8x8xf32>
    %cst_37 = arith.constant dense<0.000000e+00> : vector<8xf32>
    %108 = vector.multi_reduction <add>, %107, %cst_37 [1] : vector<8x8xf32> to vector<8xf32>
    %109 = vector.shape_cast %108 : vector<8xf32> to vector<8x1xf32>
    %110 = tpu.reciprocal %109 {approx = true} : vector<8x1xf32> -> vector<8x1xf32>
    %111 = vector.broadcast %110 : vector<8x1xf32> to vector<8x8xf32>
    %112 = arith.mulf %107, %111 : vector<8x8xf32>
    %113 = vector.extract_strided_slice %46 {offsets = [0, 96], sizes = [8, 32], strides = [1, 1]} : vector<8x128xf32> to vector<8x32xf32>
    %cst_38 = arith.constant dense<0.000000e+00> : vector<8x32xf32>
    %114 = tpu.matmul %112, %113, %cst_38 {dimension_numbers = #tpu.dot_dimension_numbers<[1], [0], [0], [1], [0, 0, 1, 1], [], []>} : vector<8x8xf32>, vector<8x32xf32>, vector<8x32xf32> -> vector<8x32xf32>
    %115 = tpu.concatenate %63, %80, %97, %114 in 1 : vector<8x32xf32>, vector<8x32xf32>, vector<8x32xf32>, vector<8x32xf32> -> vector<8x128xf32>
    %116 = vector.extract_strided_slice %38 {offsets = [8, 0], sizes = [8, 128], strides = [1, 1]} : vector<16x128xf32> to vector<8x128xf32>
    %117 = vector.extract_strided_slice %39 {offsets = [8, 0], sizes = [8, 128], strides = [1, 1]} : vector<16x128xf32> to vector<8x128xf32>
    %118 = vector.extract_strided_slice %40 {offsets = [8, 0], sizes = [8, 128], strides = [1, 1]} : vector<16x128xf32> to vector<8x128xf32>
    %119 = vector.extract_strided_slice %116 {offsets = [0, 0], sizes = [8, 32], strides = [1, 1]} : vector<8x128xf32> to vector<8x32xf32>
    %120 = vector.extract_strided_slice %117 {offsets = [0, 0], sizes = [8, 32], strides = [1, 1]} : vector<8x128xf32> to vector<8x32xf32>
    %cst_39 = arith.constant dense<0.000000e+00> : vector<8x8xf32>
    %121 = tpu.matmul %119, %120, %cst_39 {dimension_numbers = #tpu.dot_dimension_numbers<[1], [1], [0], [0], [0, 0, 1, 0], [], []>} : vector<8x32xf32>, vector<8x32xf32>, vector<8x8xf32> -> vector<8x8xf32>
    %cst_40 = arith.constant -1.000000e+30 : f32
    %122 = vector.broadcast %cst_40 : f32 to vector<8x8xf32>
    %123 = arith.select %43, %121, %122 : vector<8x8xi1>, vector<8x8xf32>
    %cst_41 = arith.constant dense<0xFF800000> : vector<8xf32>
    %124 = vector.multi_reduction <maximumf>, %123, %cst_41 [1] : vector<8x8xf32> to vector<8xf32>
    %125 = vector.shape_cast %124 : vector<8xf32> to vector<8x1xf32>
    %126 = vector.broadcast %125 : vector<8x1xf32> to vector<8x8xf32>
    %127 = arith.subf %123, %126 : vector<8x8xf32>
    %128 = math.exp %127 : vector<8x8xf32>
    %cst_42 = arith.constant dense<0.000000e+00> : vector<8xf32>
    %129 = vector.multi_reduction <add>, %128, %cst_42 [1] : vector<8x8xf32> to vector<8xf32>
    %130 = vector.shape_cast %129 : vector<8xf32> to vector<8x1xf32>
    %131 = tpu.reciprocal %130 {approx = true} : vector<8x1xf32> -> vector<8x1xf32>
    %132 = vector.broadcast %131 : vector<8x1xf32> to vector<8x8xf32>
    %133 = arith.mulf %128, %132 : vector<8x8xf32>
    %134 = vector.extract_strided_slice %118 {offsets = [0, 0], sizes = [8, 32], strides = [1, 1]} : vector<8x128xf32> to vector<8x32xf32>
    %cst_43 = arith.constant dense<0.000000e+00> : vector<8x32xf32>
    %135 = tpu.matmul %133, %134, %cst_43 {dimension_numbers = #tpu.dot_dimension_numbers<[1], [0], [0], [1], [0, 0, 1, 1], [], []>} : vector<8x8xf32>, vector<8x32xf32>, vector<8x32xf32> -> vector<8x32xf32>
    %136 = vector.extract_strided_slice %116 {offsets = [0, 32], sizes = [8, 32], strides = [1, 1]} : vector<8x128xf32> to vector<8x32xf32>
    %137 = vector.extract_strided_slice %117 {offsets = [0, 32], sizes = [8, 32], strides = [1, 1]} : vector<8x128xf32> to vector<8x32xf32>
    %cst_44 = arith.constant dense<0.000000e+00> : vector<8x8xf32>
    %138 = tpu.matmul %136, %137, %cst_44 {dimension_numbers = #tpu.dot_dimension_numbers<[1], [1], [0], [0], [0, 0, 1, 0], [], []>} : vector<8x32xf32>, vector<8x32xf32>, vector<8x8xf32> -> vector<8x8xf32>
    %cst_45 = arith.constant -1.000000e+30 : f32
    %139 = vector.broadcast %cst_45 : f32 to vector<8x8xf32>
    %140 = arith.select %43, %138, %139 : vector<8x8xi1>, vector<8x8xf32>
    %cst_46 = arith.constant dense<0xFF800000> : vector<8xf32>
    %141 = vector.multi_reduction <maximumf>, %140, %cst_46 [1] : vector<8x8xf32> to vector<8xf32>
    %142 = vector.shape_cast %141 : vector<8xf32> to vector<8x1xf32>
    %143 = vector.broadcast %142 : vector<8x1xf32> to vector<8x8xf32>
    %144 = arith.subf %140, %143 : vector<8x8xf32>
    %145 = math.exp %144 : vector<8x8xf32>
    %cst_47 = arith.constant dense<0.000000e+00> : vector<8xf32>
    %146 = vector.multi_reduction <add>, %145, %cst_47 [1] : vector<8x8xf32> to vector<8xf32>
    %147 = vector.shape_cast %146 : vector<8xf32> to vector<8x1xf32>
    %148 = tpu.reciprocal %147 {approx = true} : vector<8x1xf32> -> vector<8x1xf32>
    %149 = vector.broadcast %148 : vector<8x1xf32> to vector<8x8xf32>
    %150 = arith.mulf %145, %149 : vector<8x8xf32>
    %151 = vector.extract_strided_slice %118 {offsets = [0, 32], sizes = [8, 32], strides = [1, 1]} : vector<8x128xf32> to vector<8x32xf32>
    %cst_48 = arith.constant dense<0.000000e+00> : vector<8x32xf32>
    %152 = tpu.matmul %150, %151, %cst_48 {dimension_numbers = #tpu.dot_dimension_numbers<[1], [0], [0], [1], [0, 0, 1, 1], [], []>} : vector<8x8xf32>, vector<8x32xf32>, vector<8x32xf32> -> vector<8x32xf32>
    %153 = vector.extract_strided_slice %116 {offsets = [0, 64], sizes = [8, 32], strides = [1, 1]} : vector<8x128xf32> to vector<8x32xf32>
    %154 = vector.extract_strided_slice %117 {offsets = [0, 64], sizes = [8, 32], strides = [1, 1]} : vector<8x128xf32> to vector<8x32xf32>
    %cst_49 = arith.constant dense<0.000000e+00> : vector<8x8xf32>
    %155 = tpu.matmul %153, %154, %cst_49 {dimension_numbers = #tpu.dot_dimension_numbers<[1], [1], [0], [0], [0, 0, 1, 0], [], []>} : vector<8x32xf32>, vector<8x32xf32>, vector<8x8xf32> -> vector<8x8xf32>
    %cst_50 = arith.constant -1.000000e+30 : f32
    %156 = vector.broadcast %cst_50 : f32 to vector<8x8xf32>
    %157 = arith.select %43, %155, %156 : vector<8x8xi1>, vector<8x8xf32>
    %cst_51 = arith.constant dense<0xFF800000> : vector<8xf32>
    %158 = vector.multi_reduction <maximumf>, %157, %cst_51 [1] : vector<8x8xf32> to vector<8xf32>
    %159 = vector.shape_cast %158 : vector<8xf32> to vector<8x1xf32>
    %160 = vector.broadcast %159 : vector<8x1xf32> to vector<8x8xf32>
    %161 = arith.subf %157, %160 : vector<8x8xf32>
    %162 = math.exp %161 : vector<8x8xf32>
    %cst_52 = arith.constant dense<0.000000e+00> : vector<8xf32>
    %163 = vector.multi_reduction <add>, %162, %cst_52 [1] : vector<8x8xf32> to vector<8xf32>
    %164 = vector.shape_cast %163 : vector<8xf32> to vector<8x1xf32>
    %165 = tpu.reciprocal %164 {approx = true} : vector<8x1xf32> -> vector<8x1xf32>
    %166 = vector.broadcast %165 : vector<8x1xf32> to vector<8x8xf32>
    %167 = arith.mulf %162, %166 : vector<8x8xf32>
    %168 = vector.extract_strided_slice %118 {offsets = [0, 64], sizes = [8, 32], strides = [1, 1]} : vector<8x128xf32> to vector<8x32xf32>
    %cst_53 = arith.constant dense<0.000000e+00> : vector<8x32xf32>
    %169 = tpu.matmul %167, %168, %cst_53 {dimension_numbers = #tpu.dot_dimension_numbers<[1], [0], [0], [1], [0, 0, 1, 1], [], []>} : vector<8x8xf32>, vector<8x32xf32>, vector<8x32xf32> -> vector<8x32xf32>
    %170 = vector.extract_strided_slice %116 {offsets = [0, 96], sizes = [8, 32], strides = [1, 1]} : vector<8x128xf32> to vector<8x32xf32>
    %171 = vector.extract_strided_slice %117 {offsets = [0, 96], sizes = [8, 32], strides = [1, 1]} : vector<8x128xf32> to vector<8x32xf32>
    %cst_54 = arith.constant dense<0.000000e+00> : vector<8x8xf32>
    %172 = tpu.matmul %170, %171, %cst_54 {dimension_numbers = #tpu.dot_dimension_numbers<[1], [1], [0], [0], [0, 0, 1, 0], [], []>} : vector<8x32xf32>, vector<8x32xf32>, vector<8x8xf32> -> vector<8x8xf32>
    %cst_55 = arith.constant -1.000000e+30 : f32
    %173 = vector.broadcast %cst_55 : f32 to vector<8x8xf32>
    %174 = arith.select %43, %172, %173 : vector<8x8xi1>, vector<8x8xf32>
    %cst_56 = arith.constant dense<0xFF800000> : vector<8xf32>
    %175 = vector.multi_reduction <maximumf>, %174, %cst_56 [1] : vector<8x8xf32> to vector<8xf32>
    %176 = vector.shape_cast %175 : vector<8xf32> to vector<8x1xf32>
    %177 = vector.broadcast %176 : vector<8x1xf32> to vector<8x8xf32>
    %178 = arith.subf %174, %177 : vector<8x8xf32>
    %179 = math.exp %178 : vector<8x8xf32>
    %cst_57 = arith.constant dense<0.000000e+00> : vector<8xf32>
    %180 = vector.multi_reduction <add>, %179, %cst_57 [1] : vector<8x8xf32> to vector<8xf32>
    %181 = vector.shape_cast %180 : vector<8xf32> to vector<8x1xf32>
    %182 = tpu.reciprocal %181 {approx = true} : vector<8x1xf32> -> vector<8x1xf32>
    %183 = vector.broadcast %182 : vector<8x1xf32> to vector<8x8xf32>
    %184 = arith.mulf %179, %183 : vector<8x8xf32>
    %185 = vector.extract_strided_slice %118 {offsets = [0, 96], sizes = [8, 32], strides = [1, 1]} : vector<8x128xf32> to vector<8x32xf32>
    %cst_58 = arith.constant dense<0.000000e+00> : vector<8x32xf32>
    %186 = tpu.matmul %184, %185, %cst_58 {dimension_numbers = #tpu.dot_dimension_numbers<[1], [0], [0], [1], [0, 0, 1, 1], [], []>} : vector<8x8xf32>, vector<8x32xf32>, vector<8x32xf32> -> vector<8x32xf32>
    %187 = tpu.concatenate %135, %152, %169, %186 in 1 : vector<8x32xf32>, vector<8x32xf32>, vector<8x32xf32>, vector<8x32xf32> -> vector<8x128xf32>
    %188 = tpu.concatenate %115, %187 in 0 : vector<8x128xf32>, vector<8x128xf32> -> vector<16x128xf32>
    %189 = arith.truncf %188 : vector<16x128xf32> to vector<16x128xbf16>
    %c0_59 = arith.constant 0 : index
    %c0_60 = arith.constant 0 : index
    %c0_61 = arith.constant 0 : index
    %190 = vector.load %arg8[%c0_59, %c0_60, %c0_61] : memref<1x128x128xbf16, #tpu.memory_space<vmem>>, vector<1x128x128xbf16>
    %191 = vector.shape_cast %190 : vector<1x128x128xbf16> to vector<128x128xbf16>
    %cst_62 = arith.constant dense<0.000000e+00> : vector<16x128xf32>
    %192 = tpu.matmul %189, %191, %cst_62 {dimension_numbers = #tpu.dot_dimension_numbers<[1], [0], [0], [1], [0, 0, 1, 1], [], []>} : vector<16x128xbf16>, vector<128x128xbf16>, vector<16x128xf32> -> vector<16x128xf32>
    %193 = arith.addf %3, %192 : vector<16x128xf32>
    %c0_63 = arith.constant 0 : index
    %c0_64 = arith.constant 0 : index
    %c0_65 = arith.constant 0 : index
    %194 = vector.load %arg9[%c0_63, %c0_64, %c0_65] : memref<1x1x128xf32, #tpu.memory_space<vmem>>, vector<1x1x128xf32>
    %195 = vector.shape_cast %194 : vector<1x1x128xf32> to vector<1x128xf32>
    %196 = vector.broadcast %195 : vector<1x128xf32> to vector<16x128xf32>
    %197 = arith.addf %193, %196 : vector<16x128xf32>
    %c0_66 = arith.constant 0 : index
    %c0_67 = arith.constant 0 : index
    %c0_68 = arith.constant 0 : index
    %198 = vector.load %arg10[%c0_66, %c0_67, %c0_68] : memref<1x1x128xf32, #tpu.memory_space<vmem>>, vector<1x1x128xf32>
    %199 = vector.shape_cast %198 : vector<1x1x128xf32> to vector<1x128xf32>
    %c0_69 = arith.constant 0 : index
    %c0_70 = arith.constant 0 : index
    %c0_71 = arith.constant 0 : index
    %200 = vector.load %arg11[%c0_69, %c0_70, %c0_71] : memref<1x1x128xf32, #tpu.memory_space<vmem>>, vector<1x1x128xf32>
    %201 = vector.shape_cast %200 : vector<1x1x128xf32> to vector<1x128xf32>
    %cst_72 = arith.constant dense<0.000000e+00> : vector<16xf32>
    %202 = vector.multi_reduction <add>, %197, %cst_72 [1] : vector<16x128xf32> to vector<16xf32>
    %203 = vector.shape_cast %202 : vector<16xf32> to vector<16x1xf32>
    %cst_73 = arith.constant 1.280000e+02 : f32
    %204 = vector.broadcast %cst_73 : f32 to vector<16x1xf32>
    %205 = arith.divf %203, %204 : vector<16x1xf32>
    %206 = vector.broadcast %205 : vector<16x1xf32> to vector<16x128xf32>
    %207 = arith.subf %197, %206 : vector<16x128xf32>
    %208 = arith.mulf %207, %207 : vector<16x128xf32>
    %cst_74 = arith.constant dense<0.000000e+00> : vector<16xf32>
    %209 = vector.multi_reduction <add>, %208, %cst_74 [1] : vector<16x128xf32> to vector<16xf32>
    %210 = vector.shape_cast %209 : vector<16xf32> to vector<16x1xf32>
    %cst_75 = arith.constant 1.280000e+02 : f32
    %211 = vector.broadcast %cst_75 : f32 to vector<16x1xf32>
    %212 = arith.divf %210, %211 : vector<16x1xf32>
    %213 = vector.broadcast %205 : vector<16x1xf32> to vector<16x128xf32>
    %214 = arith.subf %197, %213 : vector<16x128xf32>
    %cst_76 = arith.constant 9.99999997E-7 : f32
    %215 = vector.broadcast %cst_76 : f32 to vector<16x1xf32>
    %216 = arith.addf %212, %215 : vector<16x1xf32>
    %217 = math.rsqrt %216 : vector<16x1xf32>
    %218 = vector.broadcast %217 : vector<16x1xf32> to vector<16x128xf32>
    %219 = arith.mulf %214, %218 : vector<16x128xf32>
    %220 = vector.broadcast %199 : vector<1x128xf32> to vector<16x128xf32>
    %221 = arith.mulf %219, %220 : vector<16x128xf32>
    %222 = vector.broadcast %201 : vector<1x128xf32> to vector<16x128xf32>
    %223 = arith.addf %221, %222 : vector<16x128xf32>
    %224 = arith.truncf %223 : vector<16x128xf32> to vector<16x128xbf16>
    %c0_77 = arith.constant 0 : index
    %c0_78 = arith.constant 0 : index
    %c0_79 = arith.constant 0 : index
    %225 = vector.load %arg12[%c0_77, %c0_78, %c0_79] : memref<1x128x256xbf16, #tpu.memory_space<vmem>>, vector<1x128x256xbf16>
    %226 = vector.shape_cast %225 : vector<1x128x256xbf16> to vector<128x256xbf16>
    %cst_80 = arith.constant dense<0.000000e+00> : vector<16x256xf32>
    %227 = tpu.matmul %224, %226, %cst_80 {dimension_numbers = #tpu.dot_dimension_numbers<[1], [0], [0], [1], [0, 0, 1, 1], [], []>} : vector<16x128xbf16>, vector<128x256xbf16>, vector<16x256xf32> -> vector<16x256xf32>
    %c0_81 = arith.constant 0 : index
    %c0_82 = arith.constant 0 : index
    %c0_83 = arith.constant 0 : index
    %228 = vector.load %arg13[%c0_81, %c0_82, %c0_83] : memref<1x1x256xf32, #tpu.memory_space<vmem>>, vector<1x1x256xf32>
    %229 = vector.shape_cast %228 : vector<1x1x256xf32> to vector<1x256xf32>
    %230 = vector.broadcast %229 : vector<1x256xf32> to vector<16x256xf32>
    %231 = arith.addf %227, %230 : vector<16x256xf32>
    %cst_84 = arith.constant 5.000000e-01 : f32
    %232 = vector.broadcast %cst_84 : f32 to vector<16x256xf32>
    %233 = arith.mulf %232, %231 : vector<16x256xf32>
    %cst_85 = arith.constant 4.471500e-02 : f32
    %234 = vector.broadcast %cst_85 : f32 to vector<16x256xf32>
    %235 = arith.mulf %234, %231 : vector<16x256xf32>
    %236 = arith.mulf %235, %231 : vector<16x256xf32>
    %237 = arith.mulf %236, %231 : vector<16x256xf32>
    %238 = arith.addf %231, %237 : vector<16x256xf32>
    %cst_86 = arith.constant 0.797884583 : f32
    %239 = vector.broadcast %cst_86 : f32 to vector<16x256xf32>
    %240 = arith.mulf %239, %238 : vector<16x256xf32>
    %241 = math.tanh %240 : vector<16x256xf32>
    %cst_87 = arith.constant 1.000000e+00 : f32
    %242 = vector.broadcast %cst_87 : f32 to vector<16x256xf32>
    %243 = arith.addf %242, %241 : vector<16x256xf32>
    %244 = arith.mulf %233, %243 : vector<16x256xf32>
    %245 = arith.truncf %244 : vector<16x256xf32> to vector<16x256xbf16>
    %c0_88 = arith.constant 0 : index
    %c0_89 = arith.constant 0 : index
    %c0_90 = arith.constant 0 : index
    %246 = vector.load %arg14[%c0_88, %c0_89, %c0_90] : memref<1x256x128xbf16, #tpu.memory_space<vmem>>, vector<1x256x128xbf16>
    %247 = vector.shape_cast %246 : vector<1x256x128xbf16> to vector<256x128xbf16>
    %cst_91 = arith.constant dense<0.000000e+00> : vector<16x128xf32>
    %248 = tpu.matmul %245, %247, %cst_91 {dimension_numbers = #tpu.dot_dimension_numbers<[1], [0], [0], [1], [0, 0, 1, 1], [], []>} : vector<16x256xbf16>, vector<256x128xbf16>, vector<16x128xf32> -> vector<16x128xf32>
    %c0_92 = arith.constant 0 : index
    %c0_93 = arith.constant 0 : index
    %c0_94 = arith.constant 0 : index
    %249 = vector.load %arg15[%c0_92, %c0_93, %c0_94] : memref<1x1x128xf32, #tpu.memory_space<vmem>>, vector<1x1x128xf32>
    %250 = vector.shape_cast %249 : vector<1x1x128xf32> to vector<1x128xf32>
    %251 = vector.broadcast %250 : vector<1x128xf32> to vector<16x128xf32>
    %252 = arith.addf %248, %251 : vector<16x128xf32>
    %253 = arith.addf %197, %252 : vector<16x128xf32>
    %c0_95 = arith.constant 0 : index
    %c0_96 = arith.constant 0 : index
    %254 = vector.load %arg23[%c0_95, %c0_96] : memref<16x128xf32, #tpu.memory_space<vmem>>, vector<16x128xf32>
    tpu.vector_store %arg23[%c0_95, %c0_96], %253 {strides = array<i32>} : memref<16x128xf32, #tpu.memory_space<vmem>>, vector<16x128xf32>,
    %c1_i32 = arith.constant 1 : i32
    %255 = arith.cmpi eq, %arg0, %c1_i32 : i32
    %256 = arith.extui %255 : i1 to i32
    %c0_i32_97 = arith.constant 0 : i32
    %257 = arith.cmpi ne, %256, %c0_i32_97 : i32
    scf.if %257 {
      %258 = vector.extract_strided_slice %253 {offsets = [0, 0], sizes = [1, 128], strides = [1, 1]} : vector<16x128xf32> to vector<1x128xf32>
      %259 = vector.extract_strided_slice %253 {offsets = [8, 0], sizes = [1, 128], strides = [1, 1]} : vector<16x128xf32> to vector<1x128xf32>
      %260 = tpu.concatenate %258, %259 in 0 : vector<1x128xf32>, vector<1x128xf32> -> vector<2x128xf32>
      %c0_98 = arith.constant 0 : index
      %c0_99 = arith.constant 0 : index
      %261 = vector.load %arg16[%c0_98, %c0_99] : memref<1x128xf32, #tpu.memory_space<vmem>>, vector<1x128xf32>
      %c0_100 = arith.constant 0 : index
      %c0_101 = arith.constant 0 : index
      %262 = vector.load %arg17[%c0_100, %c0_101] : memref<1x128xf32, #tpu.memory_space<vmem>>, vector<1x128xf32>
      %cst_102 = arith.constant dense<0.000000e+00> : vector<2xf32>
      %263 = vector.multi_reduction <add>, %260, %cst_102 [1] : vector<2x128xf32> to vector<2xf32>
      %264 = vector.shape_cast %263 : vector<2xf32> to vector<2x1xf32>
      %cst_103 = arith.constant 1.280000e+02 : f32
      %265 = vector.broadcast %cst_103 : f32 to vector<2x1xf32>
      %266 = arith.divf %264, %265 : vector<2x1xf32>
      %267 = vector.broadcast %266 : vector<2x1xf32> to vector<2x128xf32>
      %268 = arith.subf %260, %267 : vector<2x128xf32>
      %269 = arith.mulf %268, %268 : vector<2x128xf32>
      %cst_104 = arith.constant dense<0.000000e+00> : vector<2xf32>
      %270 = vector.multi_reduction <add>, %269, %cst_104 [1] : vector<2x128xf32> to vector<2xf32>
      %271 = vector.shape_cast %270 : vector<2xf32> to vector<2x1xf32>
      %cst_105 = arith.constant 1.280000e+02 : f32
      %272 = vector.broadcast %cst_105 : f32 to vector<2x1xf32>
      %273 = arith.divf %271, %272 : vector<2x1xf32>
      %274 = vector.broadcast %266 : vector<2x1xf32> to vector<2x128xf32>
      %275 = arith.subf %260, %274 : vector<2x128xf32>
      %cst_106 = arith.constant 9.99999997E-7 : f32
      %276 = vector.broadcast %cst_106 : f32 to vector<2x1xf32>
      %277 = arith.addf %273, %276 : vector<2x1xf32>
      %278 = math.rsqrt %277 : vector<2x1xf32>
      %279 = vector.broadcast %278 : vector<2x1xf32> to vector<2x128xf32>
      %280 = arith.mulf %275, %279 : vector<2x128xf32>
      %281 = vector.broadcast %261 : vector<1x128xf32> to vector<2x128xf32>
      %282 = arith.mulf %280, %281 : vector<2x128xf32>
      %283 = vector.broadcast %262 : vector<1x128xf32> to vector<2x128xf32>
      %284 = arith.addf %282, %283 : vector<2x128xf32>
      %c0_107 = arith.constant 0 : index
      %c0_108 = arith.constant 0 : index
      %285 = vector.load %arg18[%c0_107, %c0_108] : memref<128x64xf32, #tpu.memory_space<vmem>>, vector<128x64xf32>
      %cst_109 = arith.constant dense<0.000000e+00> : vector<2x64xf32>
      %286 = tpu.matmul %284, %285, %cst_109 {dimension_numbers = #tpu.dot_dimension_numbers<[1], [0], [0], [1], [0, 0, 1, 1], [], []>} : vector<2x128xf32>, vector<128x64xf32>, vector<2x64xf32> -> vector<2x64xf32>
      %c0_110 = arith.constant 0 : index
      %c0_111 = arith.constant 0 : index
      %287 = vector.load %arg19[%c0_110, %c0_111] : memref<1x64xf32, #tpu.memory_space<vmem>>, vector<1x64xf32>
      %288 = vector.broadcast %287 : vector<1x64xf32> to vector<2x64xf32>
      %289 = arith.addf %286, %288 : vector<2x64xf32>
      %cst_112 = arith.constant 0.000000e+00 : f32
      %290 = vector.broadcast %cst_112 : f32 to vector<2x64xf32>
      %291 = arith.maximumf %289, %290 : vector<2x64xf32>
      %c0_113 = arith.constant 0 : index
      %c0_114 = arith.constant 0 : index
      %292 = vector.load %arg20[%c0_113, %c0_114] : memref<64x4xf32, #tpu.memory_space<vmem>>, vector<64x4xf32>
      %cst_115 = arith.constant dense<0.000000e+00> : vector<2x4xf32>
      %293 = tpu.matmul %291, %292, %cst_115 {dimension_numbers = #tpu.dot_dimension_numbers<[1], [0], [0], [1], [0, 0, 1, 1], [], []>} : vector<2x64xf32>, vector<64x4xf32>, vector<2x4xf32> -> vector<2x4xf32>
      %c0_116 = arith.constant 0 : index
      %c0_117 = arith.constant 0 : index
      %294 = vector.load %arg21[%c0_116, %c0_117] : memref<1x4xf32, #tpu.memory_space<vmem>>, vector<1x4xf32>
      %295 = vector.broadcast %294 : vector<1x4xf32> to vector<2x4xf32>
      %296 = arith.addf %293, %295 : vector<2x4xf32>
      %c0_118 = arith.constant 0 : index
      %c0_119 = arith.constant 0 : index
      %297 = vector.load %arg22[%c0_118, %c0_119] : memref<2x4xf32, #tpu.memory_space<vmem>>, vector<2x4xf32>
      tpu.vector_store %arg22[%c0_118, %c0_119], %296 {strides = array<i32>} : memref<2x4xf32, #tpu.memory_space<vmem>>, vector<2x4xf32>,
    } else {
    }
    return
  }
  func.func @transform_0(%arg0: i32) -> (i32, i32) {
    %c0_i32 = arith.constant 0 : i32
    %c0_i32_0 = arith.constant 0 : i32
    %c0_i32_1 = arith.constant 0 : i32
    return %c0_i32, %c0_i32_0 : i32, i32
  }
  func.func @transform_1(%arg0: i32) -> (i32, i32) {
    %c0_i32 = arith.constant 0 : i32
    %c0_i32_0 = arith.constant 0 : i32
    %c0_i32_1 = arith.constant 0 : i32
    return %c0_i32, %c0_i32_0 : i32, i32
  }
  func.func @transform_2(%arg0: i32) -> (i32, i32) {
    %c0_i32 = arith.constant 0 : i32
    %c0_i32_0 = arith.constant 0 : i32
    %c0_i32_1 = arith.constant 0 : i32
    return %c0_i32, %c0_i32_0 : i32, i32
  }
  func.func @transform_3(%arg0: i32) -> (i32, i32, i32) {
    %c0_i32 = arith.constant 0 : i32
    %c0_i32_0 = arith.constant 0 : i32
    %c0_i32_1 = arith.constant 0 : i32
    return %arg0, %c0_i32, %c0_i32_0 : i32, i32, i32
  }
  func.func @transform_4(%arg0: i32) -> (i32, i32, i32) {
    %c0_i32 = arith.constant 0 : i32
    %c0_i32_0 = arith.constant 0 : i32
    %c0_i32_1 = arith.constant 0 : i32
    return %arg0, %c0_i32, %c0_i32_0 : i32, i32, i32
  }
  func.func @transform_5(%arg0: i32) -> (i32, i32, i32) {
    %c0_i32 = arith.constant 0 : i32
    %c0_i32_0 = arith.constant 0 : i32
    %c0_i32_1 = arith.constant 0 : i32
    return %arg0, %c0_i32, %c0_i32_0 : i32, i32, i32
  }
  func.func @transform_6(%arg0: i32) -> (i32, i32, i32) {
    %c0_i32 = arith.constant 0 : i32
    %c0_i32_0 = arith.constant 0 : i32
    %c0_i32_1 = arith.constant 0 : i32
    return %arg0, %c0_i32, %c0_i32_0 : i32, i32, i32
  }
  func.func @transform_7(%arg0: i32) -> (i32, i32, i32) {
    %c0_i32 = arith.constant 0 : i32
    %c0_i32_0 = arith.constant 0 : i32
    %c0_i32_1 = arith.constant 0 : i32
    return %arg0, %c0_i32, %c0_i32_0 : i32, i32, i32
  }
  func.func @transform_8(%arg0: i32) -> (i32, i32, i32) {
    %c0_i32 = arith.constant 0 : i32
    %c0_i32_0 = arith.constant 0 : i32
    %c0_i32_1 = arith.constant 0 : i32
    return %arg0, %c0_i32, %c0_i32_0 : i32, i32, i32
  }
  func.func @transform_9(%arg0: i32) -> (i32, i32, i32) {
    %c0_i32 = arith.constant 0 : i32
    %c0_i32_0 = arith.constant 0 : i32
    %c0_i32_1 = arith.constant 0 : i32
    return %arg0, %c0_i32, %c0_i32_0 : i32, i32, i32
  }
  func.func @transform_10(%arg0: i32) -> (i32, i32, i32) {
    %c0_i32 = arith.constant 0 : i32
    %c0_i32_0 = arith.constant 0 : i32
    %c0_i32_1 = arith.constant 0 : i32
    return %arg0, %c0_i32, %c0_i32_0 : i32, i32, i32
  }
  func.func @transform_11(%arg0: i32) -> (i32, i32, i32) {
    %c0_i32 = arith.constant 0 : i32
    %c0_i32_0 = arith.constant 0 : i32
    %c0_i32_1 = arith.constant 0 : i32
    return %arg0, %c0_i32, %c0_i32_0 : i32, i32, i32
  }
  func.func @transform_12(%arg0: i32) -> (i32, i32, i32) {
    %c0_i32 = arith.constant 0 : i32
    %c0_i32_0 = arith.constant 0 : i32
    %c0_i32_1 = arith.constant 0 : i32
    return %arg0, %c0_i32, %c0_i32_0 : i32, i32, i32
  }
  func.func @transform_13(%arg0: i32) -> (i32, i32, i32) {
    %c0_i32 = arith.constant 0 : i32
    %c0_i32_0 = arith.constant 0 : i32
    %c0_i32_1 = arith.constant 0 : i32
    return %arg0, %c0_i32, %c0_i32_0 : i32, i32, i32
  }
  func.func @transform_14(%arg0: i32) -> (i32, i32, i32) {
    %c0_i32 = arith.constant 0 : i32
    %c0_i32_0 = arith.constant 0 : i32
    %c0_i32_1 = arith.constant 0 : i32
    return %arg0, %c0_i32, %c0_i32_0 : i32, i32, i32
  }
  func.func @transform_15(%arg0: i32) -> (i32, i32) {
    %c0_i32 = arith.constant 0 : i32
    %c0_i32_0 = arith.constant 0 : i32
    %c0_i32_1 = arith.constant 0 : i32
    return %c0_i32, %c0_i32_0 : i32, i32
  }
  func.func @transform_16(%arg0: i32) -> (i32, i32) {
    %c0_i32 = arith.constant 0 : i32
    %c0_i32_0 = arith.constant 0 : i32
    %c0_i32_1 = arith.constant 0 : i32
    return %c0_i32, %c0_i32_0 : i32, i32
  }
  func.func @transform_17(%arg0: i32) -> (i32, i32) {
    %c0_i32 = arith.constant 0 : i32
    %c0_i32_0 = arith.constant 0 : i32
    %c0_i32_1 = arith.constant 0 : i32
    return %c0_i32, %c0_i32_0 : i32, i32
  }
  func.func @transform_18(%arg0: i32) -> (i32, i32) {
    %c0_i32 = arith.constant 0 : i32
    %c0_i32_0 = arith.constant 0 : i32
    %c0_i32_1 = arith.constant 0 : i32
    return %c0_i32, %c0_i32_0 : i32, i32
  }
  func.func @transform_19(%arg0: i32) -> (i32, i32) {
    %c0_i32 = arith.constant 0 : i32
    %c0_i32_0 = arith.constant 0 : i32
    %c0_i32_1 = arith.constant 0 : i32
    return %c0_i32, %c0_i32_0 : i32, i32
  }
  func.func @transform_20(%arg0: i32) -> (i32, i32) {
    %c0_i32 = arith.constant 0 : i32
    %c0_i32_0 = arith.constant 0 : i32
    %c0_i32_1 = arith.constant 0 : i32
    return %c0_i32, %c0_i32_0 : i32, i32
  }
  func.func @transform_21(%arg0: i32) -> (i32, i32) {
    %c0_i32 = arith.constant 0 : i32
    %c0_i32_0 = arith.constant 0 : i32
    %c0_i32_1 = arith.constant 0 : i32
    return %c0_i32, %c0_i32_0 : i32, i32
  }
}

</mosaic_0001>

<llo_original>
// kernel: tpu_custom_call.1
$region0: #{tpu_custom_call.1}
  #allocation0 [shape = 'u32[]', space=smem, size = 0x4, offset = 0x4, fixed_abs, tag = 'smem constant byte address 0x4 - core index']
  #allocation1 [shape = 'u32[144,128]{1,0:T(1,128)}', space=vmem, size = 0x12000, scoped, tag = 'internal scratch']
  #allocation2 [shape = 'f32[16,128]{1,0:T(8,128)}', space=vmem, size = 0x2000, scoped, tag = 'scratch operand']
  %s0 = inlined_call_operand.hbm [shape: f32[16,768], index: 0, kind: input, shape index: {}]
  %s1 = inlined_call_operand.hbm [shape: bf16[768,128], index: 1, kind: input, shape index: {}]
  %s2 = inlined_call_operand.hbm [shape: f32[16,128], index: 2, kind: input, shape index: {}]
  %s3 = inlined_call_operand.hbm [shape: f32[2,1,128], index: 3, kind: input, shape index: {}]
  %s4 = inlined_call_operand.hbm [shape: f32[2,1,128], index: 4, kind: input, shape index: {}]
  %s5 = inlined_call_operand.hbm [shape: bf16[2,128,384], index: 5, kind: input, shape index: {}]
  %s6 = inlined_call_operand.hbm [shape: f32[2,1,384], index: 6, kind: input, shape index: {}]
  %s7 = inlined_call_operand.hbm [shape: bf16[2,128,128], index: 7, kind: input, shape index: {}]
  %s8 = inlined_call_operand.hbm [shape: f32[2,1,128], index: 8, kind: input, shape index: {}]
  %s9 = inlined_call_operand.hbm [shape: f32[2,1,128], index: 9, kind: input, shape index: {}]
  %s10 = inlined_call_operand.hbm [shape: f32[2,1,128], index: 10, kind: input, shape index: {}]
  %s11 = inlined_call_operand.vmem [shape: bf16[2,128,256], index: 11, kind: input, shape index: {}]
  %s12 = inlined_call_operand.hbm [shape: f32[2,1,256], index: 12, kind: input, shape index: {}]
  %s13 = inlined_call_operand.hbm [shape: bf16[2,256,128], index: 13, kind: input, shape index: {}]
  %s14 = inlined_call_operand.hbm [shape: f32[2,1,128], index: 14, kind: input, shape index: {}]
  %s15 = inlined_call_operand.hbm [shape: f32[1,128], index: 15, kind: input, shape index: {}]
  %s16 = inlined_call_operand.hbm [shape: f32[1,128], index: 16, kind: input, shape index: {}]
  %s17 = inlined_call_operand.vmem [shape: f32[128,64], index: 17, kind: input, shape index: {}]
  %s18 = inlined_call_operand.vmem [shape: f32[1,64], index: 18, kind: input, shape index: {}]
  %s19 = inlined_call_operand.vmem [shape: f32[64,4], index: 19, kind: input, shape index: {}]
  %s20 = inlined_call_operand.vmem [shape: f32[1,4], index: 20, kind: input, shape index: {}]
  %s21 = inlined_call_operand.hbm [shape: f32[2,4], index: 21, kind: output, shape index: {}]
  %s22 = sld [smem:[#allocation0]]
  $region189: #{tpu_custom_call.1} parent=0
    _
  %s24 = ssub.s32 1, %s22
  %s25 = scalar_select 0, %s24, %s22
  $region1: #{tpu_custom_call.1} parent=0
    #allocation3 [shape = 'u8[49152]{0}', space=vmem, size = 0xc000, scoped, tag = 'input window, operand 0, single buffered']
    #allocation4 [shape = 's32[2]{0}', space=sflag, size = 0x8, scoped, tag = 'scoped memory for tpu_custom_call.1']
    #allocation5 [shape = 's32[2]{0}', space=sflag, size = 0x8, scoped, tag = 'scoped memory for tpu_custom_call.1']
    #allocation6 [shape = 'u8[196608]{0}', space=vmem, size = 0x30000, scoped, tag = 'input window, operand 1, single buffered']
    #allocation7 [shape = 's32[1]{0}', space=sflag, size = 0x4, scoped, tag = 'scoped memory for tpu_custom_call.1']
    #allocation8 [shape = 'u8[8192]{0}', space=vmem, size = 0x2000, scoped, tag = 'input window, operand 2, single buffered']
    #allocation9 [shape = 'u8[1024]{0}', space=vmem, size = 0x400, scoped, tag = 'input window, operand 3']
    #allocation10 [shape = 's32[2]{0}', space=sflag, size = 0x8, scoped, tag = 'scoped memory for tpu_custom_call.1']
    #allocation11 [shape = 'u8[1024]{0}', space=vmem, size = 0x400, scoped, tag = 'input window, operand 4']
    #allocation12 [shape = 'u8[196608]{0}', space=vmem, size = 0x30000, scoped, tag = 'input window, operand 5']
    #allocation13 [shape = 's32[2]{0}', space=sflag, size = 0x8, scoped, tag = 'scoped memory for tpu_custom_call.1']
    #allocation14 [shape = 'u8[3072]{0}', space=vmem, size = 0xc00, scoped, tag = 'input window, operand 6']
    #allocation15 [shape = 'u8[65536]{0}', space=vmem, size = 0x10000, scoped, tag = 'input window, operand 7']
    #allocation16 [shape = 's32[2]{0}', space=sflag, size = 0x8, scoped, tag = 'scoped memory for tpu_custom_call.1']
    #allocation17 [shape = 'u8[1024]{0}', space=vmem, size = 0x400, scoped, tag = 'input window, operand 8']
    #allocation18 [shape = 'u8[1024]{0}', space=vmem, size = 0x400, scoped, tag = 'input window, operand 9']
    #allocation19 [shape = 's32[2]{0}', space=sflag, size = 0x8, scoped, tag = 'scoped memory for tpu_custom_call.1']
    #allocation20 [shape = 'u8[1024]{0}', space=vmem, size = 0x400, scoped, tag = 'input window, operand 10']
    #allocation21 [shape = 'u8[2048]{0}', space=vmem, size = 0x800, scoped, tag = 'input window, operand 12']
    #allocation22 [shape = 's32[2]{0}', space=sflag, size = 0x8, scoped, tag = 'scoped memory for tpu_custom_call.1']
    #allocation23 [shape = 'u8[131072]{0}', space=vmem, size = 0x20000, scoped, tag = 'input window, operand 13']
    #allocation24 [shape = 'u8[1024]{0}', space=vmem, size = 0x400, scoped, tag = 'input window, operand 14']
    #allocation25 [shape = 's32[2]{0}', space=sflag, size = 0x8, scoped, tag = 'scoped memory for tpu_custom_call.1']
    #allocation26 [shape = 'u8[512]{0}', space=vmem, size = 0x400, scoped, tag = 'input window, operand 15, single buffered']
    #allocation27 [shape = 'u8[512]{0}', space=vmem, size = 0x400, scoped, tag = 'input window, operand 16, single buffered']
    #allocation28 [shape = 's32[1]{0}', space=sflag, size = 0x4, scoped, tag = 'scoped memory for tpu_custom_call.1']
    #allocation29 [shape = 'u8[1024]{0}', space=vmem, size = 0x400, scoped, tag = 'output window, operand 0, single buffered']
    %26 = vsyncpa [#allocation4], 0
    %27 = vsyncpa [#allocation7], 0
    %28 = vsyncpa [#allocation10], 0
    %s29 = scalar_lea.sflag [#allocation10], 1
    %30 = vsyncpa %s29, 0
    %31 = vsyncpa [#allocation13], 0
    %s32 = scalar_lea.sflag [#allocation13], 1
    %33 = vsyncpa %s32, 0
    %34 = vsyncpa [#allocation16], 0
    %s35 = scalar_lea.sflag [#allocation16], 1
    %36 = vsyncpa %s35, 0
    %37 = vsyncpa [#allocation19], 0
    %s38 = scalar_lea.sflag [#allocation19], 1
    %39 = vsyncpa %s38, 0
    %40 = vsyncpa [#allocation22], 0
    %s41 = scalar_lea.sflag [#allocation22], 1
    %42 = vsyncpa %s41, 0
    %43 = vsyncpa [#allocation25], 0
    %s44 = scalar_lea.sflag [#allocation25], 1
    %45 = vsyncpa %s44, 0
    %46 = vsyncpa [#allocation28], 0
    %47 = vsyncpa [#allocation5], 0
    loop: start=0, step=1, limit=4
    $region2: #{tpu_custom_call.1} parent=1 // loop_pre_header
      _
    $region3: #{tpu_custom_call.1} parent=1 // loop_header
      %s49 = sphi 0, %s53
      %p50 = scmp.ge.s32.totalorder %s49, 4
      %s57 = sphi 0, %s57
      %s59 = sphi 0, %s57
      %s60 = sphi 0, %s59
      %s74 = sphi 0, %s60
      %s78 = sphi 0, %s78
      %s80 = sphi 0, %s78
      %s81 = sphi 0, %s80
      %s95 = sphi 0, %s81
      %s99 = sphi 0, %s99
      %s101 = sphi 0, %s99
      %s102 = sphi 0, %s101
      %s116 = sphi 0, %s102
      %s122 = sphi 0, %s124
      %s125 = sphi 0, %s122
      %s126 = sphi 0, %s125
      %s142 = sphi 0, %s126
      %s148 = sphi 0, %s150
      %s151 = sphi 0, %s148
      %s152 = sphi 0, %s151
      %s168 = sphi 0, %s152
      %s174 = sphi 0, %s176
      %s177 = sphi 0, %s174
      %s178 = sphi 0, %s177
      %s194 = sphi 0, %s178
      %s200 = sphi 0, %s202
      %s203 = sphi 0, %s200
      %s204 = sphi 0, %s203
      %s220 = sphi 0, %s204
      %s226 = sphi 0, %s228
      %s229 = sphi 0, %s226
      %s230 = sphi 0, %s229
      %s246 = sphi 0, %s230
      %s252 = sphi 0, %s254
      %s255 = sphi 0, %s252
      %s256 = sphi 0, %s255
      %s272 = sphi 0, %s256
      %s278 = sphi 0, %s280
      %s281 = sphi 0, %s278
      %s282 = sphi 0, %s281
      %s298 = sphi 0, %s282
      %s304 = sphi 0, %s306
      %s307 = sphi 0, %s304
      %s308 = sphi 0, %s307
      %s324 = sphi 0, %s308
      %s330 = sphi 0, %s332
      %s333 = sphi 0, %s330
      %s334 = sphi 0, %s333
      %s350 = sphi 0, %s334
      %s356 = sphi 0, %s358
      %s359 = sphi 0, %s356
      %s360 = sphi 0, %s359
      %s376 = sphi 0, %s360
      %s382 = sphi 0, %s384
      %s385 = sphi 0, %s382
      %s386 = sphi 0, %s385
      %s402 = sphi 0, %s386
      %s408 = sphi 0, %s410
      %s411 = sphi 0, %s408
      %s412 = sphi 0, %s411
      %s428 = sphi 0, %s412
      %s432 = sphi 0, %s432
      %s434 = sphi 0, %s432
      %s435 = sphi 0, %s434
      %s449 = sphi 0, %s435
      %s453 = sphi 0, %s453
      %s455 = sphi 0, %s453
      %s456 = sphi 0, %s455
      %s470 = sphi 0, %s456
      %s474 = sphi 0, %s474
      %s476 = sphi 0, %s474
      %s477 = sphi 0, %s476
      %s491 = sphi 0, %s477
      %s495 = sphi 0, %s495
      %s497 = sphi 0, %s495
      %s498 = sphi 0, %s497
      %s512 = sphi 0, %s498
      %s516 = sphi 0, %s516
      %s518 = sphi 0, %s516
      %s519 = sphi 0, %s518
      %s533 = sphi 0, %s519
      %s537 = sphi 0, %s537
      %s539 = sphi 0, %s537
      %s540 = sphi 0, %s539
      %s554 = sphi 0, %s540
      %s558 = sphi 0, %s558
      %s560 = sphi 0, %s558
      %s561 = sphi 0, %s560
      %s575 = sphi 0, %s561
    $region4: #{tpu_custom_call.1} parent=1 // loop_header_branch
      %52 = sbr.rel (%p50) target = $region8
    $region5: #{tpu_custom_call.1} parent=1 // loop_body
      %s54 = ssub.s32 %s49, 1
      %s55 = ssub.s32 %s49, 2
      %s56 = sadd.s32 %s49, 1
      %s58 = sadd.s32 %s57, 1
      %p61 = scmp.eq.s32.totalorder %s49, 1
      %p62 = scmp.ne.s32.totalorder %s57, %s59
      %p63 = scmp.eq.s32.totalorder %s49, 0
      %p64 = por %p62, %p63
      %p65 = scmp.ne.s32.totalorder %s57, %s59
      %p66 = scmp.eq.s32.totalorder %s54, 1
      %p67 = por %p65, %p66
      %p68 = scmp.ne.s32.totalorder %s59, %s60
      %p69 = scmp.eq.s32.totalorder %s54, 0
      %p70 = por %p68, %p69
      %p71 = scmp.ne.s32.totalorder %s59, %s60
      %p72 = scmp.eq.s32.totalorder %s55, 1
      %p73 = por %p71, %p72
      %p75 = scmp.ne.s32.totalorder %s60, %s74
      %p76 = scmp.eq.s32.totalorder %s55, 0
      %p77 = por %p75, %p76
      %s79 = sadd.s32 %s78, 1
      %p82 = scmp.eq.s32.totalorder %s49, 1
      %p83 = scmp.ne.s32.totalorder %s78, %s80
      %p84 = scmp.eq.s32.totalorder %s49, 0
      %p85 = por %p83, %p84
      %p86 = scmp.ne.s32.totalorder %s78, %s80
      %p87 = scmp.eq.s32.totalorder %s54, 1
      %p88 = por %p86, %p87
      %p89 = scmp.ne.s32.totalorder %s80, %s81
      %p90 = scmp.eq.s32.totalorder %s54, 0
      %p91 = por %p89, %p90
      %p92 = scmp.ne.s32.totalorder %s80, %s81
      %p93 = scmp.eq.s32.totalorder %s55, 1
      %p94 = por %p92, %p93
      %p96 = scmp.ne.s32.totalorder %s81, %s95
      %p97 = scmp.eq.s32.totalorder %s55, 0
      %p98 = por %p96, %p97
      %s100 = sadd.s32 %s99, 1
      %p103 = scmp.eq.s32.totalorder %s49, 1
      %p104 = scmp.ne.s32.totalorder %s99, %s101
      %p105 = scmp.eq.s32.totalorder %s49, 0
      %p106 = por %p104, %p105
      %p107 = scmp.ne.s32.totalorder %s99, %s101
      %p108 = scmp.eq.s32.totalorder %s54, 1
      %p109 = por %p107, %p108
      %p110 = scmp.ne.s32.totalorder %s101, %s102
      %p111 = scmp.eq.s32.totalorder %s54, 0
      %p112 = por %p110, %p111
      %p113 = scmp.ne.s32.totalorder %s101, %s102
      %p114 = scmp.eq.s32.totalorder %s55, 1
      %p115 = por %p113, %p114
      %p117 = scmp.ne.s32.totalorder %s102, %s116
      %p118 = scmp.eq.s32.totalorder %s55, 0
      %p119 = por %p117, %p118
      %s120 = ssub.s32 %s49, %s56
      %p121 = scmp.eq.s32.totalorder %s120, 0
      %s123 = sadd.s32 %s122, 1
      %s124 = scalar_select %p121, %s122, %s123
      %p127 = pneg %p121
      %p128 = scmp.eq.s32.totalorder %s49, 1
      %p129 = por %p127, %p128
      %p130 = scmp.ne.s32.totalorder %s122, %s125
      %p131 = scmp.eq.s32.totalorder %s49, 0
      %p132 = por %p130, %p131
      %p133 = scmp.ne.s32.totalorder %s122, %s125
      %p134 = scmp.eq.s32.totalorder %s54, 1
      %p135 = por %p133, %p134
      %p136 = scmp.ne.s32.totalorder %s125, %s126
      %p137 = scmp.eq.s32.totalorder %s54, 0
      %p138 = por %p136, %p137
      %p139 = scmp.ne.s32.totalorder %s125, %s126
      %p140 = scmp.eq.s32.totalorder %s55, 1
      %p141 = por %p139, %p140
      %p143 = scmp.ne.s32.totalorder %s126, %s142
      %p144 = scmp.eq.s32.totalorder %s55, 0
      %p145 = por %p143, %p144
      %s146 = ssub.s32 %s49, %s56
      %p147 = scmp.eq.s32.totalorder %s146, 0
      %s149 = sadd.s32 %s148, 1
      %s150 = scalar_select %p147, %s148, %s149
      %p153 = pneg %p147
      %p154 = scmp.eq.s32.totalorder %s49, 1
      %p155 = por %p153, %p154
      %p156 = scmp.ne.s32.totalorder %s148, %s151
      %p157 = scmp.eq.s32.totalorder %s49, 0
      %p158 = por %p156, %p157
      %p159 = scmp.ne.s32.totalorder %s148, %s151
      %p160 = scmp.eq.s32.totalorder %s54, 1
      %p161 = por %p159, %p160
      %p162 = scmp.ne.s32.totalorder %s151, %s152
      %p163 = scmp.eq.s32.totalorder %s54, 0
      %p164 = por %p162, %p163
      %p165 = scmp.ne.s32.totalorder %s151, %s152
      %p166 = scmp.eq.s32.totalorder %s55, 1
      %p167 = por %p165, %p166
      %p169 = scmp.ne.s32.totalorder %s152, %s168
      %p170 = scmp.eq.s32.totalorder %s55, 0
      %p171 = por %p169, %p170
      %s172 = ssub.s32 %s49, %s56
      %p173 = scmp.eq.s32.totalorder %s172, 0
      %s175 = sadd.s32 %s174, 1
      %s176 = scalar_select %p173, %s174, %s175
      %p179 = pneg %p173
      %p180 = scmp.eq.s32.totalorder %s49, 1
      %p181 = por %p179, %p180
      %p182 = scmp.ne.s32.totalorder %s174, %s177
      %p183 = scmp.eq.s32.totalorder %s49, 0
      %p184 = por %p182, %p183
      %p185 = scmp.ne.s32.totalorder %s174, %s177
      %p186 = scmp.eq.s32.totalorder %s54, 1
      %p187 = por %p185, %p186
      %p188 = scmp.ne.s32.totalorder %s177, %s178
      %p189 = scmp.eq.s32.totalorder %s54, 0
      %p190 = por %p188, %p189
      %p191 = scmp.ne.s32.totalorder %s177, %s178
      %p192 = scmp.eq.s32.totalorder %s55, 1
      %p193 = por %p191, %p192
      %p195 = scmp.ne.s32.totalorder %s178, %s194
      %p196 = scmp.eq.s32.totalorder %s55, 0
      %p197 = por %p195, %p196
      %s198 = ssub.s32 %s49, %s56
      %p199 = scmp.eq.s32.totalorder %s198, 0
      %s201 = sadd.s32 %s200, 1
      %s202 = scalar_select %p199, %s200, %s201
      %p205 = pneg %p199
      %p206 = scmp.eq.s32.totalorder %s49, 1
      %p207 = por %p205, %p206
      %p208 = scmp.ne.s32.totalorder %s200, %s203
      %p209 = scmp.eq.s32.totalorder %s49, 0
      %p210 = por %p208, %p209
      %p211 = scmp.ne.s32.totalorder %s200, %s203
      %p212 = scmp.eq.s32.totalorder %s54, 1
      %p213 = por %p211, %p212
      %p214 = scmp.ne.s32.totalorder %s203, %s204
      %p215 = scmp.eq.s32.totalorder %s54, 0
      %p216 = por %p214, %p215
      %p217 = scmp.ne.s32.totalorder %s203, %s204
      %p218 = scmp.eq.s32.totalorder %s55, 1
      %p219 = por %p217, %p218
      %p221 = scmp.ne.s32.totalorder %s204, %s220
      %p222 = scmp.eq.s32.totalorder %s55, 0
      %p223 = por %p221, %p222
      %s224 = ssub.s32 %s49, %s56
      %p225 = scmp.eq.s32.totalorder %s224, 0
      %s227 = sadd.s32 %s226, 1
      %s228 = scalar_select %p225, %s226, %s227
      %p231 = pneg %p225
      %p232 = scmp.eq.s32.totalorder %s49, 1
      %p233 = por %p231, %p232
      %p234 = scmp.ne.s32.totalorder %s226, %s229
      %p235 = scmp.eq.s32.totalorder %s49, 0
      %p236 = por %p234, %p235
      %p237 = scmp.ne.s32.totalorder %s226, %s229
      %p238 = scmp.eq.s32.totalorder %s54, 1
      %p239 = por %p237, %p238
      %p240 = scmp.ne.s32.totalorder %s229, %s230
      %p241 = scmp.eq.s32.totalorder %s54, 0
      %p242 = por %p240, %p241
      %p243 = scmp.ne.s32.totalorder %s229, %s230
      %p244 = scmp.eq.s32.totalorder %s55, 1
      %p245 = por %p243, %p244
      %p247 = scmp.ne.s32.totalorder %s230, %s246
      %p248 = scmp.eq.s32.totalorder %s55, 0
      %p249 = por %p247, %p248
      %s250 = ssub.s32 %s49, %s56
      %p251 = scmp.eq.s32.totalorder %s250, 0
      %s253 = sadd.s32 %s252, 1
      %s254 = scalar_select %p251, %s252, %s253
      %p257 = pneg %p251
      %p258 = scmp.eq.s32.totalorder %s49, 1
      %p259 = por %p257, %p258
      %p260 = scmp.ne.s32.totalorder %s252, %s255
      %p261 = scmp.eq.s32.totalorder %s49, 0
      %p262 = por %p260, %p261
      %p263 = scmp.ne.s32.totalorder %s252, %s255
      %p264 = scmp.eq.s32.totalorder %s54, 1
      %p265 = por %p263, %p264
      %p266 = scmp.ne.s32.totalorder %s255, %s256
      %p267 = scmp.eq.s32.totalorder %s54, 0
      %p268 = por %p266, %p267
      %p269 = scmp.ne.s32.totalorder %s255, %s256
      %p270 = scmp.eq.s32.totalorder %s55, 1
      %p271 = por %p269, %p270
      %p273 = scmp.ne.s32.totalorder %s256, %s272
      %p274 = scmp.eq.s32.totalorder %s55, 0
      %p275 = por %p273, %p274
      %s276 = ssub.s32 %s49, %s56
      %p277 = scmp.eq.s32.totalorder %s276, 0
      %s279 = sadd.s32 %s278, 1
      %s280 = scalar_select %p277, %s278, %s279
      %p283 = pneg %p277
      %p284 = scmp.eq.s32.totalorder %s49, 1
      %p285 = por %p283, %p284
      %p286 = scmp.ne.s32.totalorder %s278, %s281
      %p287 = scmp.eq.s32.totalorder %s49, 0
      %p288 = por %p286, %p287
      %p289 = scmp.ne.s32.totalorder %s278, %s281
      %p290 = scmp.eq.s32.totalorder %s54, 1
      %p291 = por %p289, %p290
      %p292 = scmp.ne.s32.totalorder %s281, %s282
      %p293 = scmp.eq.s32.totalorder %s54, 0
      %p294 = por %p292, %p293
      %p295 = scmp.ne.s32.totalorder %s281, %s282
      %p296 = scmp.eq.s32.totalorder %s55, 1
      %p297 = por %p295, %p296
      %p299 = scmp.ne.s32.totalorder %s282, %s298
      %p300 = scmp.eq.s32.totalorder %s55, 0
      %p301 = por %p299, %p300
      %s302 = ssub.s32 %s49, %s56
      %p303 = scmp.eq.s32.totalorder %s302, 0
      %s305 = sadd.s32 %s304, 1
      %s306 = scalar_select %p303, %s304, %s305
      %p309 = pneg %p303
      %p310 = scmp.eq.s32.totalorder %s49, 1
      %p311 = por %p309, %p310
      %p312 = scmp.ne.s32.totalorder %s304, %s307
      %p313 = scmp.eq.s32.totalorder %s49, 0
      %p314 = por %p312, %p313
      %p315 = scmp.ne.s32.totalorder %s304, %s307
      %p316 = scmp.eq.s32.totalorder %s54, 1
      %p317 = por %p315, %p316
      %p318 = scmp.ne.s32.totalorder %s307, %s308
      %p319 = scmp.eq.s32.totalorder %s54, 0
      %p320 = por %p318, %p319
      %p321 = scmp.ne.s32.totalorder %s307, %s308
      %p322 = scmp.eq.s32.totalorder %s55, 1
      %p323 = por %p321, %p322
      %p325 = scmp.ne.s32.totalorder %s308, %s324
      %p326 = scmp.eq.s32.totalorder %s55, 0
      %p327 = por %p325, %p326
      %s328 = ssub.s32 %s49, %s56
      %p329 = scmp.eq.s32.totalorder %s328, 0
      %s331 = sadd.s32 %s330, 1
      %s332 = scalar_select %p329, %s330, %s331
      %p335 = pneg %p329
      %p336 = scmp.eq.s32.totalorder %s49, 1
      %p337 = por %p335, %p336
      %p338 = scmp.ne.s32.totalorder %s330, %s333
      %p339 = scmp.eq.s32.totalorder %s49, 0
      %p340 = por %p338, %p339
      %p341 = scmp.ne.s32.totalorder %s330, %s333
      %p342 = scmp.eq.s32.totalorder %s54, 1
      %p343 = por %p341, %p342
      %p344 = scmp.ne.s32.totalorder %s333, %s334
      %p345 = scmp.eq.s32.totalorder %s54, 0
      %p346 = por %p344, %p345
      %p347 = scmp.ne.s32.totalorder %s333, %s334
      %p348 = scmp.eq.s32.totalorder %s55, 1
      %p349 = por %p347, %p348
      %p351 = scmp.ne.s32.totalorder %s334, %s350
      %p352 = scmp.eq.s32.totalorder %s55, 0
      %p353 = por %p351, %p352
      %s354 = ssub.s32 %s49, %s56
      %p355 = scmp.eq.s32.totalorder %s354, 0
      %s357 = sadd.s32 %s356, 1
      %s358 = scalar_select %p355, %s356, %s357
      %p361 = pneg %p355
      %p362 = scmp.eq.s32.totalorder %s49, 1
      %p363 = por %p361, %p362
      %p364 = scmp.ne.s32.totalorder %s356, %s359
      %p365 = scmp.eq.s32.totalorder %s49, 0
      %p366 = por %p364, %p365
      %p367 = scmp.ne.s32.totalorder %s356, %s359
      %p368 = scmp.eq.s32.totalorder %s54, 1
      %p369 = por %p367, %p368
      %p370 = scmp.ne.s32.totalorder %s359, %s360
      %p371 = scmp.eq.s32.totalorder %s54, 0
      %p372 = por %p370, %p371
      %p373 = scmp.ne.s32.totalorder %s359, %s360
      %p374 = scmp.eq.s32.totalorder %s55, 1
      %p375 = por %p373, %p374
      %p377 = scmp.ne.s32.totalorder %s360, %s376
      %p378 = scmp.eq.s32.totalorder %s55, 0
      %p379 = por %p377, %p378
      %s380 = ssub.s32 %s49, %s56
      %p381 = scmp.eq.s32.totalorder %s380, 0
      %s383 = sadd.s32 %s382, 1
      %s384 = scalar_select %p381, %s382, %s383
      %p387 = pneg %p381
      %p388 = scmp.eq.s32.totalorder %s49, 1
      %p389 = por %p387, %p388
      %p390 = scmp.ne.s32.totalorder %s382, %s385
      %p391 = scmp.eq.s32.totalorder %s49, 0
      %p392 = por %p390, %p391
      %p393 = scmp.ne.s32.totalorder %s382, %s385
      %p394 = scmp.eq.s32.totalorder %s54, 1
      %p395 = por %p393, %p394
      %p396 = scmp.ne.s32.totalorder %s385, %s386
      %p397 = scmp.eq.s32.totalorder %s54, 0
      %p398 = por %p396, %p397
      %p399 = scmp.ne.s32.totalorder %s385, %s386
      %p400 = scmp.eq.s32.totalorder %s55, 1
      %p401 = por %p399, %p400
      %p403 = scmp.ne.s32.totalorder %s386, %s402
      %p404 = scmp.eq.s32.totalorder %s55, 0
      %p405 = por %p403, %p404
      %s406 = ssub.s32 %s49, %s56
      %p407 = scmp.eq.s32.totalorder %s406, 0
      %s409 = sadd.s32 %s408, 1
      %s410 = scalar_select %p407, %s408, %s409
      %p413 = pneg %p407
      %p414 = scmp.eq.s32.totalorder %s49, 1
      %p415 = por %p413, %p414
      %p416 = scmp.ne.s32.totalorder %s408, %s411
      %p417 = scmp.eq.s32.totalorder %s49, 0
      %p418 = por %p416, %p417
      %p419 = scmp.ne.s32.totalorder %s408, %s411
      %p420 = scmp.eq.s32.totalorder %s54, 1
      %p421 = por %p419, %p420
      %p422 = scmp.ne.s32.totalorder %s411, %s412
      %p423 = scmp.eq.s32.totalorder %s54, 0
      %p424 = por %p422, %p423
      %p425 = scmp.ne.s32.totalorder %s411, %s412
      %p426 = scmp.eq.s32.totalorder %s55, 1
      %p427 = por %p425, %p426
      %p429 = scmp.ne.s32.totalorder %s412, %s428
      %p430 = scmp.eq.s32.totalorder %s55, 0
      %p431 = por %p429, %p430
      %s433 = sadd.s32 %s432, 1
      %p436 = scmp.eq.s32.totalorder %s49, 1
      %p437 = scmp.ne.s32.totalorder %s432, %s434
      %p438 = scmp.eq.s32.totalorder %s49, 0
      %p439 = por %p437, %p438
      %p440 = scmp.ne.s32.totalorder %s432, %s434
      %p441 = scmp.eq.s32.totalorder %s54, 1
      %p442 = por %p440, %p441
      %p443 = scmp.ne.s32.totalorder %s434, %s435
      %p444 = scmp.eq.s32.totalorder %s54, 0
      %p445 = por %p443, %p444
      %p446 = scmp.ne.s32.totalorder %s434, %s435
      %p447 = scmp.eq.s32.totalorder %s55, 1
      %p448 = por %p446, %p447
      %p450 = scmp.ne.s32.totalorder %s435, %s449
      %p451 = scmp.eq.s32.totalorder %s55, 0
      %p452 = por %p450, %p451
      %s454 = sadd.s32 %s453, 1
      %p457 = scmp.eq.s32.totalorder %s49, 1
      %p458 = scmp.ne.s32.totalorder %s453, %s455
      %p459 = scmp.eq.s32.totalorder %s49, 0
      %p460 = por %p458, %p459
      %p461 = scmp.ne.s32.totalorder %s453, %s455
      %p462 = scmp.eq.s32.totalorder %s54, 1
      %p463 = por %p461, %p462
      %p464 = scmp.ne.s32.totalorder %s455, %s456
      %p465 = scmp.eq.s32.totalorder %s54, 0
      %p466 = por %p464, %p465
      %p467 = scmp.ne.s32.totalorder %s455, %s456
      %p468 = scmp.eq.s32.totalorder %s55, 1
      %p469 = por %p467, %p468
      %p471 = scmp.ne.s32.totalorder %s456, %s470
      %p472 = scmp.eq.s32.totalorder %s55, 0
      %p473 = por %p471, %p472
      %s475 = sadd.s32 %s474, 1
      %p478 = scmp.eq.s32.totalorder %s49, 1
      %p479 = scmp.ne.s32.totalorder %s474, %s476
      %p480 = scmp.eq.s32.totalorder %s49, 0
      %p481 = por %p479, %p480
      %p482 = scmp.ne.s32.totalorder %s474, %s476
      %p483 = scmp.eq.s32.totalorder %s54, 1
      %p484 = por %p482, %p483
      %p485 = scmp.ne.s32.totalorder %s476, %s477
      %p486 = scmp.eq.s32.totalorder %s54, 0
      %p487 = por %p485, %p486
      %p488 = scmp.ne.s32.totalorder %s476, %s477
      %p489 = scmp.eq.s32.totalorder %s55, 1
      %p490 = por %p488, %p489
      %p492 = scmp.ne.s32.totalorder %s477, %s491
      %p493 = scmp.eq.s32.totalorder %s55, 0
      %p494 = por %p492, %p493
      %s496 = sadd.s32 %s495, 1
      %p499 = scmp.eq.s32.totalorder %s49, 1
      %p500 = scmp.ne.s32.totalorder %s495, %s497
      %p501 = scmp.eq.s32.totalorder %s49, 0
      %p502 = por %p500, %p501
      %p503 = scmp.ne.s32.totalorder %s495, %s497
      %p504 = scmp.eq.s32.totalorder %s54, 1
      %p505 = por %p503, %p504
      %p506 = scmp.ne.s32.totalorder %s497, %s498
      %p507 = scmp.eq.s32.totalorder %s54, 0
      %p508 = por %p506, %p507
      %p509 = scmp.ne.s32.totalorder %s497, %s498
      %p510 = scmp.eq.s32.totalorder %s55, 1
      %p511 = por %p509, %p510
      %p513 = scmp.ne.s32.totalorder %s498, %s512
      %p514 = scmp.eq.s32.totalorder %s55, 0
      %p515 = por %p513, %p514
      %s517 = sadd.s32 %s516, 1
      %p520 = scmp.eq.s32.totalorder %s49, 1
      %p521 = scmp.ne.s32.totalorder %s516, %s518
      %p522 = scmp.eq.s32.totalorder %s49, 0
      %p523 = por %p521, %p522
      %p524 = scmp.ne.s32.totalorder %s516, %s518
      %p525 = scmp.eq.s32.totalorder %s54, 1
      %p526 = por %p524, %p525
      %p527 = scmp.ne.s32.totalorder %s518, %s519
      %p528 = scmp.eq.s32.totalorder %s54, 0
      %p529 = por %p527, %p528
      %p530 = scmp.ne.s32.totalorder %s518, %s519
      %p531 = scmp.eq.s32.totalorder %s55, 1
      %p532 = por %p530, %p531
      %p534 = scmp.ne.s32.totalorder %s519, %s533
      %p535 = scmp.eq.s32.totalorder %s55, 0
      %p536 = por %p534, %p535
      %s538 = sadd.s32 %s537, 1
      %p541 = scmp.eq.s32.totalorder %s49, 1
      %p542 = scmp.ne.s32.totalorder %s537, %s539
      %p543 = scmp.eq.s32.totalorder %s49, 0
      %p544 = por %p542, %p543
      %p545 = scmp.ne.s32.totalorder %s537, %s539
      %p546 = scmp.eq.s32.totalorder %s54, 1
      %p547 = por %p545, %p546
      %p548 = scmp.ne.s32.totalorder %s539, %s540
      %p549 = scmp.eq.s32.totalorder %s54, 0
      %p550 = por %p548, %p549
      %p551 = scmp.ne.s32.totalorder %s539, %s540
      %p552 = scmp.eq.s32.totalorder %s55, 1
      %p553 = por %p551, %p552
      %p555 = scmp.ne.s32.totalorder %s540, %s554
      %p556 = scmp.eq.s32.totalorder %s55, 0
      %p557 = por %p555, %p556
      %s559 = sadd.s32 %s558, 1
      %p562 = scmp.eq.s32.totalorder %s49, 1
      %p563 = scmp.ne.s32.totalorder %s558, %s560
      %p564 = scmp.eq.s32.totalorder %s49, 0
      %p565 = por %p563, %p564
      %p566 = scmp.ne.s32.totalorder %s558, %s560
      %p567 = scmp.eq.s32.totalorder %s54, 1
      %p568 = por %p566, %p567
      %p569 = scmp.ne.s32.totalorder %s560, %s561
      %p570 = scmp.eq.s32.totalorder %s54, 0
      %p571 = por %p569, %p570
      %p572 = scmp.ne.s32.totalorder %s560, %s561
      %p573 = scmp.eq.s32.totalorder %s55, 1
      %p574 = por %p572, %p573
      %p576 = scmp.ne.s32.totalorder %s561, %s575
      %p577 = scmp.eq.s32.totalorder %s55, 0
      %p578 = por %p576, %p577
      %p579 = scmp.le.s32.totalorder 1, %s49
      %p580 = scmp.lt.s32.totalorder %s49, 3
      %p581 = pnand %p579, %p580
      %p582 = pneg %p581
      // Predicated region
      $region9: #{tpu_custom_call.1} parent=5 // pred_check
        _
      $region10: #{tpu_custom_call.1} parent=5 // pred_check_branch
        %584 = sbr.rel (%p581) target = $region12
      $region11: #{tpu_custom_call.1} parent=5 // pred_region
        %s585 = ssub.s32 %s49, 1
        // Predicated region
        $region13: #{tpu_custom_call.1} parent=11 // pred_check
          %p586 = pneg %p70
        $region14: #{tpu_custom_call.1} parent=11 // pred_check_branch
          %588 = sbr.rel (%p586) target = $region16
        $region15: #{tpu_custom_call.1} parent=11 // pred_region
          %s590 = ssub.s32 1536, 1536
          %591 = vsyncadd [#allocation4], %s590
          %s592 = sshll.u32 [#allocation3], 4
          %s593 = int_to_ptr.vmem [resolvable:$true] %s592
          %598 = dma.hbm_to_vmem [thread:$0]  %s0, 1536, %s593, [#allocation4], 768, 768, 48
        $region16: #{tpu_custom_call.1} parent=11 // pred_fallthru
          _
        // Predicated region
        $region17: #{tpu_custom_call.1} parent=11 // pred_check
          %p599 = pneg %p91
        $region18: #{tpu_custom_call.1} parent=11 // pred_check_branch
          %601 = sbr.rel (%p599) target = $region20
        $region19: #{tpu_custom_call.1} parent=11 // pred_region
          %s603 = ssub.s32 6144, 6144
          %604 = vsyncadd [#allocation7], %s603
          %s605 = sshll.u32 [#allocation6], 4
          %s606 = int_to_ptr.vmem [resolvable:$true] %s605
          %611 = dma.hbm_to_vmem [thread:$0]  %s1, 6144, %s606, [#allocation7], 64, 64, 4
        $region20: #{tpu_custom_call.1} parent=11 // pred_fallthru
          _
        // Predicated region
        $region21: #{tpu_custom_call.1} parent=11 // pred_check
          %p612 = pneg %p112
        $region22: #{tpu_custom_call.1} parent=11 // pred_check_branch
          %614 = sbr.rel (%p612) target = $region24
        $region23: #{tpu_custom_call.1} parent=11 // pred_region
          %s616 = ssub.s32 256, 256
          %617 = vsyncadd [#allocation7], %s616
          %s618 = sshll.u32 [#allocation8], 4
          %s619 = int_to_ptr.vmem [resolvable:$true] %s618
          %624 = dma.hbm_to_vmem [thread:$0]  %s2, 256, %s619, [#allocation7], 128, 128, 8
        $region24: #{tpu_custom_call.1} parent=11 // pred_fallthru
          _
        // Predicated region
        $region25: #{tpu_custom_call.1} parent=11 // pred_check
          %p625 = pneg %p445
        $region26: #{tpu_custom_call.1} parent=11 // pred_check_branch
          %627 = sbr.rel (%p625) target = $region28
        $region27: #{tpu_custom_call.1} parent=11 // pred_region
          %s629 = ssub.s32 16, 16
          %630 = vsyncadd [#allocation25], %s629
          %s632 = sshll.u32 [#allocation26], 4
          %s633 = int_to_ptr.vmem [resolvable:$true] %s632
          %635 = dma.hbm_to_vmem [thread:$0]  %s15, 16, %s633, [#allocation25]
        $region28: #{tpu_custom_call.1} parent=11 // pred_fallthru
          _
        // Predicated region
        $region29: #{tpu_custom_call.1} parent=11 // pred_check
          %p636 = pneg %p466
        $region30: #{tpu_custom_call.1} parent=11 // pred_check_branch
          %638 = sbr.rel (%p636) target = $region32
        $region31: #{tpu_custom_call.1} parent=11 // pred_region
          %s640 = ssub.s32 16, 16
          %641 = vsyncadd [#allocation28], %s640
          %s643 = sshll.u32 [#allocation27], 4
          %s644 = int_to_ptr.vmem [resolvable:$true] %s643
          %646 = dma.hbm_to_vmem [thread:$0]  %s16, 16, %s644, [#allocation28]
        $region32: #{tpu_custom_call.1} parent=11 // pred_fallthru
          _
        // Predicated region
        $region33: #{tpu_custom_call.1} parent=11 // pred_check
          %p647 = pneg %p487
        $region34: #{tpu_custom_call.1} parent=11 // pred_check_branch
          %649 = sbr.rel (%p647) target = $region36
        $region35: #{tpu_custom_call.1} parent=11 // pred_region
          _
        $region36: #{tpu_custom_call.1} parent=11 // pred_fallthru
          _
        // Predicated region
        $region37: #{tpu_custom_call.1} parent=11 // pred_check
          %p650 = pneg %p508
        $region38: #{tpu_custom_call.1} parent=11 // pred_check_branch
          %652 = sbr.rel (%p650) target = $region40
        $region39: #{tpu_custom_call.1} parent=11 // pred_region
          _
        $region40: #{tpu_custom_call.1} parent=11 // pred_fallthru
          _
        // Predicated region
        $region41: #{tpu_custom_call.1} parent=11 // pred_check
          %p653 = pneg %p529
        $region42: #{tpu_custom_call.1} parent=11 // pred_check_branch
          %655 = sbr.rel (%p653) target = $region44
        $region43: #{tpu_custom_call.1} parent=11 // pred_region
          _
        $region44: #{tpu_custom_call.1} parent=11 // pred_fallthru
          _
        // Predicated region
        $region45: #{tpu_custom_call.1} parent=11 // pred_check
          %p656 = pneg %p550
        $region46: #{tpu_custom_call.1} parent=11 // pred_check_branch
          %658 = sbr.rel (%p656) target = $region48
        $region47: #{tpu_custom_call.1} parent=11 // pred_region
          _
        $region48: #{tpu_custom_call.1} parent=11 // pred_fallthru
          _
      $region12: #{tpu_custom_call.1} parent=5 // pred_fallthru
        _
      %p659 = scmp.lt.s32.totalorder %s49, 2
      // Predicated region
      $region49: #{tpu_custom_call.1} parent=5 // pred_check
        %p660 = pneg %p659
      $region50: #{tpu_custom_call.1} parent=5 // pred_check_branch
        %662 = sbr.rel (%p660) target = $region52
      $region51: #{tpu_custom_call.1} parent=5 // pred_region
        // Predicated region
        $region53: #{tpu_custom_call.1} parent=51 // pred_check
          %p663 = pneg %p132
        $region54: #{tpu_custom_call.1} parent=51 // pred_check_branch
          %665 = sbr.rel (%p663) target = $region56
        $region55: #{tpu_custom_call.1} parent=51 // pred_region
          %s666 = sand.u32 %s49, 1
          %s667 = scalar_lea.sflag [#allocation10], %s666
          %s668 = sand.u32 %s122, 1
          %s669 = scalar_lea.vmem [#allocation9], %s668
          %s671 = ssub.s32 16, 16
          %672 = vsyncadd %s667, %s671
          %s673 = smul.addr %s49, 16
          %s674 = scalar_lea.hbm %s3, %s673
          %s676 = sshll.u32 %s669, 4
          %s677 = int_to_ptr.vmem [resolvable:$true] %s676
          %679 = dma.hbm_to_vmem [thread:$0]  %s674, 16, %s677, %s667
        $region56: #{tpu_custom_call.1} parent=51 // pred_fallthru
          _
        // Predicated region
        $region57: #{tpu_custom_call.1} parent=51 // pred_check
          %p680 = pneg %p158
        $region58: #{tpu_custom_call.1} parent=51 // pred_check_branch
          %682 = sbr.rel (%p680) target = $region60
        $region59: #{tpu_custom_call.1} parent=51 // pred_region
          %s683 = sand.u32 %s49, 1
          %s684 = scalar_lea.sflag [#allocation10], %s683
          %s685 = sand.u32 %s148, 1
          %s686 = scalar_lea.vmem [#allocation11], %s685
          %s688 = ssub.s32 16, 16
          %689 = vsyncadd %s684, %s688
          %s690 = smul.addr %s49, 16
          %s691 = scalar_lea.hbm %s4, %s690
          %s693 = sshll.u32 %s686, 4
          %s694 = int_to_ptr.vmem [resolvable:$true] %s693
          %696 = dma.hbm_to_vmem [thread:$0]  %s691, 16, %s694, %s684
        $region60: #{tpu_custom_call.1} parent=51 // pred_fallthru
          _
        // Predicated region
        $region61: #{tpu_custom_call.1} parent=51 // pred_check
          %p697 = pneg %p184
        $region62: #{tpu_custom_call.1} parent=51 // pred_check_branch
          %699 = sbr.rel (%p697) target = $region64
        $region63: #{tpu_custom_call.1} parent=51 // pred_region
          %s700 = sand.u32 %s49, 1
          %s701 = scalar_lea.sflag [#allocation13], %s700
          %s702 = sand.u32 %s174, 1
          %s703 = smul.addr %s702, 192
          %s704 = scalar_lea.vmem [#allocation12], %s703
          %s706 = ssub.s32 3072, 3072
          %707 = vsyncadd %s701, %s706
          %s708 = smul.addr %s49, 48
          %s709 = smul.addr %s708, 64
          %s710 = scalar_lea.hbm %s5, %s709
          %s711 = sshll.u32 %s704, 4
          %s712 = int_to_ptr.vmem [resolvable:$true] %s711
          %717 = dma.hbm_to_vmem [thread:$0]  %s710, 3072, %s712, %s701, 192, 192, 12
        $region64: #{tpu_custom_call.1} parent=51 // pred_fallthru
          _
        // Predicated region
        $region65: #{tpu_custom_call.1} parent=51 // pred_check
          %p718 = pneg %p210
        $region66: #{tpu_custom_call.1} parent=51 // pred_check_branch
          %720 = sbr.rel (%p718) target = $region68
        $region67: #{tpu_custom_call.1} parent=51 // pred_region
          %s721 = sand.u32 %s49, 1
          %s722 = scalar_lea.sflag [#allocation13], %s721
          %s723 = sand.u32 %s200, 1
          %s724 = smul.addr %s723, 3
          %s725 = scalar_lea.vmem [#allocation14], %s724
          %s727 = ssub.s32 48, 48
          %728 = vsyncadd %s722, %s727
          %s729 = smul.addr %s49, 3
          %s730 = smul.addr %s729, 16
          %s731 = scalar_lea.hbm %s6, %s730
          %s733 = sshll.u32 %s725, 4
          %s734 = int_to_ptr.vmem [resolvable:$true] %s733
          %736 = dma.hbm_to_vmem [thread:$0]  %s731, 48, %s734, %s722
        $region68: #{tpu_custom_call.1} parent=51 // pred_fallthru
          _
        // Predicated region
        $region69: #{tpu_custom_call.1} parent=51 // pred_check
          %p737 = pneg %p236
        $region70: #{tpu_custom_call.1} parent=51 // pred_check_branch
          %739 = sbr.rel (%p737) target = $region72
        $region71: #{tpu_custom_call.1} parent=51 // pred_region
          %s740 = sand.u32 %s49, 1
          %s741 = scalar_lea.sflag [#allocation16], %s740
          %s742 = sand.u32 %s226, 1
          %s743 = smul.addr %s742, 64
          %s744 = scalar_lea.vmem [#allocation15], %s743
          %s746 = ssub.s32 1024, 1024
          %747 = vsyncadd %s741, %s746
          %s748 = smul.addr %s49, 16
          %s749 = smul.addr %s748, 64
          %s750 = scalar_lea.hbm %s7, %s749
          %s751 = sshll.u32 %s744, 4
          %s752 = int_to_ptr.vmem [resolvable:$true] %s751
          %757 = dma.hbm_to_vmem [thread:$0]  %s750, 1024, %s752, %s741, 64, 64, 4
        $region72: #{tpu_custom_call.1} parent=51 // pred_fallthru
          _
        // Predicated region
        $region73: #{tpu_custom_call.1} parent=51 // pred_check
          %p758 = pneg %p262
        $region74: #{tpu_custom_call.1} parent=51 // pred_check_branch
          %760 = sbr.rel (%p758) target = $region76
        $region75: #{tpu_custom_call.1} parent=51 // pred_region
          %s761 = sand.u32 %s49, 1
          %s762 = scalar_lea.sflag [#allocation16], %s761
          %s763 = sand.u32 %s252, 1
          %s764 = scalar_lea.vmem [#allocation17], %s763
          %s766 = ssub.s32 16, 16
          %767 = vsyncadd %s762, %s766
          %s768 = smul.addr %s49, 16
          %s769 = scalar_lea.hbm %s8, %s768
          %s771 = sshll.u32 %s764, 4
          %s772 = int_to_ptr.vmem [resolvable:$true] %s771
          %774 = dma.hbm_to_vmem [thread:$0]  %s769, 16, %s772, %s762
        $region76: #{tpu_custom_call.1} parent=51 // pred_fallthru
          _
        // Predicated region
        $region77: #{tpu_custom_call.1} parent=51 // pred_check
          %p775 = pneg %p288
        $region78: #{tpu_custom_call.1} parent=51 // pred_check_branch
          %777 = sbr.rel (%p775) target = $region80
        $region79: #{tpu_custom_call.1} parent=51 // pred_region
          %s778 = sand.u32 %s49, 1
          %s779 = scalar_lea.sflag [#allocation19], %s778
          %s780 = sand.u32 %s278, 1
          %s781 = scalar_lea.vmem [#allocation18], %s780
          %s783 = ssub.s32 16, 16
          %784 = vsyncadd %s779, %s783
          %s785 = smul.addr %s49, 16
          %s786 = scalar_lea.hbm %s9, %s785
          %s788 = sshll.u32 %s781, 4
          %s789 = int_to_ptr.vmem [resolvable:$true] %s788
          %791 = dma.hbm_to_vmem [thread:$0]  %s786, 16, %s789, %s779
        $region80: #{tpu_custom_call.1} parent=51 // pred_fallthru
          _
        // Predicated region
        $region81: #{tpu_custom_call.1} parent=51 // pred_check
          %p792 = pneg %p314
        $region82: #{tpu_custom_call.1} parent=51 // pred_check_branch
          %794 = sbr.rel (%p792) target = $region84
        $region83: #{tpu_custom_call.1} parent=51 // pred_region
          %s795 = sand.u32 %s49, 1
          %s796 = scalar_lea.sflag [#allocation19], %s795
          %s797 = sand.u32 %s304, 1
          %s798 = scalar_lea.vmem [#allocation20], %s797
          %s800 = ssub.s32 16, 16
          %801 = vsyncadd %s796, %s800
          %s802 = smul.addr %s49, 16
          %s803 = scalar_lea.hbm %s10, %s802
          %s805 = sshll.u32 %s798, 4
          %s806 = int_to_ptr.vmem [resolvable:$true] %s805
          %808 = dma.hbm_to_vmem [thread:$0]  %s803, 16, %s806, %s796
        $region84: #{tpu_custom_call.1} parent=51 // pred_fallthru
          _
        // Predicated region
        $region85: #{tpu_custom_call.1} parent=51 // pred_check
          %p809 = pneg %p340
        $region86: #{tpu_custom_call.1} parent=51 // pred_check_branch
          %811 = sbr.rel (%p809) target = $region88
        $region87: #{tpu_custom_call.1} parent=51 // pred_region
          %p812 = scmp.lt.s32.totalorder %s49, 1
          %s813 = scalar_select %p812, %s49, 1
          %s814 = smul.addr %s813, 32
          %s815 = smul.addr %s814, 4
          %s816 = scalar_lea.vmem %s11, %s815
        $region88: #{tpu_custom_call.1} parent=51 // pred_fallthru
          _
        // Predicated region
        $region89: #{tpu_custom_call.1} parent=51 // pred_check
          %p817 = pneg %p366
        $region90: #{tpu_custom_call.1} parent=51 // pred_check_branch
          %819 = sbr.rel (%p817) target = $region92
        $region91: #{tpu_custom_call.1} parent=51 // pred_region
          %s820 = sand.u32 %s49, 1
          %s821 = scalar_lea.sflag [#allocation22], %s820
          %s822 = sand.u32 %s356, 1
          %s823 = smul.addr %s822, 2
          %s824 = scalar_lea.vmem [#allocation21], %s823
          %s826 = ssub.s32 32, 32
          %827 = vsyncadd %s821, %s826
          %s828 = smul.addr %s49, 2
          %s829 = smul.addr %s828, 16
          %s830 = scalar_lea.hbm %s12, %s829
          %s832 = sshll.u32 %s824, 4
          %s833 = int_to_ptr.vmem [resolvable:$true] %s832
          %835 = dma.hbm_to_vmem [thread:$0]  %s830, 32, %s833, %s821
        $region92: #{tpu_custom_call.1} parent=51 // pred_fallthru
          _
        // Predicated region
        $region93: #{tpu_custom_call.1} parent=51 // pred_check
          %p836 = pneg %p392
        $region94: #{tpu_custom_call.1} parent=51 // pred_check_branch
          %838 = sbr.rel (%p836) target = $region96
        $region95: #{tpu_custom_call.1} parent=51 // pred_region
          %s839 = sand.u32 %s49, 1
          %s840 = scalar_lea.sflag [#allocation22], %s839
          %s841 = sand.u32 %s382, 1
          %s842 = smul.addr %s841, 128
          %s843 = scalar_lea.vmem [#allocation23], %s842
          %s845 = ssub.s32 2048, 2048
          %846 = vsyncadd %s840, %s845
          %s847 = smul.addr %s49, 32
          %s848 = smul.addr %s847, 64
          %s849 = scalar_lea.hbm %s13, %s848
          %s850 = sshll.u32 %s843, 4
          %s851 = int_to_ptr.vmem [resolvable:$true] %s850
          %856 = dma.hbm_to_vmem [thread:$0]  %s849, 2048, %s851, %s840, 64, 64, 4
        $region96: #{tpu_custom_call.1} parent=51 // pred_fallthru
          _
        // Predicated region
        $region97: #{tpu_custom_call.1} parent=51 // pred_check
          %p857 = pneg %p418
        $region98: #{tpu_custom_call.1} parent=51 // pred_check_branch
          %859 = sbr.rel (%p857) target = $region100
        $region99: #{tpu_custom_call.1} parent=51 // pred_region
          %s860 = sand.u32 %s49, 1
          %s861 = scalar_lea.sflag [#allocation25], %s860
          %s862 = sand.u32 %s408, 1
          %s863 = scalar_lea.vmem [#allocation24], %s862
          %s865 = ssub.s32 16, 16
          %866 = vsyncadd %s861, %s865
          %s867 = smul.addr %s49, 16
          %s868 = scalar_lea.hbm %s14, %s867
          %s870 = sshll.u32 %s863, 4
          %s871 = int_to_ptr.vmem [resolvable:$true] %s870
          %873 = dma.hbm_to_vmem [thread:$0]  %s868, 16, %s871, %s861
        $region100: #{tpu_custom_call.1} parent=51 // pred_fallthru
          _
      $region52: #{tpu_custom_call.1} parent=5 // pred_fallthru
        _
      %p874 = scmp.le.s32.totalorder 1, %s49
      %p875 = scmp.lt.s32.totalorder %s49, 3
      %p876 = pnand %p874, %p875
      %p877 = pneg %p876
      // Predicated region
      $region101: #{tpu_custom_call.1} parent=5 // pred_check
        _
      $region102: #{tpu_custom_call.1} parent=5 // pred_check_branch
        %879 = sbr.rel (%p876) target = $region104
      $region103: #{tpu_custom_call.1} parent=5 // pred_region
        %s880 = ssub.s32 %s49, 1
        // Predicated region
        $region105: #{tpu_custom_call.1} parent=103 // pred_check
          %p881 = pneg %p70
        $region106: #{tpu_custom_call.1} parent=103 // pred_check_branch
          %883 = sbr.rel (%p881) target = $region108
        $region107: #{tpu_custom_call.1} parent=103 // pred_region
          %884 = dma.done [#allocation4], 1536
        $region108: #{tpu_custom_call.1} parent=103 // pred_fallthru
          _
        // Predicated region
        $region109: #{tpu_custom_call.1} parent=103 // pred_check
          %p885 = pneg %p91
        $region110: #{tpu_custom_call.1} parent=103 // pred_check_branch
          %887 = sbr.rel (%p885) target = $region112
        $region111: #{tpu_custom_call.1} parent=103 // pred_region
          %888 = dma.done [#allocation7], 6144
        $region112: #{tpu_custom_call.1} parent=103 // pred_fallthru
          _
        // Predicated region
        $region113: #{tpu_custom_call.1} parent=103 // pred_check
          %p889 = pneg %p112
        $region114: #{tpu_custom_call.1} parent=103 // pred_check_branch
          %891 = sbr.rel (%p889) target = $region116
        $region115: #{tpu_custom_call.1} parent=103 // pred_region
          %892 = dma.done [#allocation7], 256
        $region116: #{tpu_custom_call.1} parent=103 // pred_fallthru
          _
        %s893 = sand.u32 %s54, 1
        %s894 = scalar_lea.sflag [#allocation10], %s893
        %s895 = sand.u32 %s125, 1
        %s896 = scalar_lea.vmem [#allocation9], %s895
        // Predicated region
        $region117: #{tpu_custom_call.1} parent=103 // pred_check
          %p897 = pneg %p138
        $region118: #{tpu_custom_call.1} parent=103 // pred_check_branch
          %899 = sbr.rel (%p897) target = $region120
        $region119: #{tpu_custom_call.1} parent=103 // pred_region
          %900 = dma.done %s894, 16
        $region120: #{tpu_custom_call.1} parent=103 // pred_fallthru
          _
        %s901 = sand.u32 %s54, 1
        %s902 = scalar_lea.sflag [#allocation10], %s901
        %s903 = sand.u32 %s151, 1
        %s904 = scalar_lea.vmem [#allocation11], %s903
        // Predicated region
        $region121: #{tpu_custom_call.1} parent=103 // pred_check
          %p905 = pneg %p164
        $region122: #{tpu_custom_call.1} parent=103 // pred_check_branch
          %907 = sbr.rel (%p905) target = $region124
        $region123: #{tpu_custom_call.1} parent=103 // pred_region
          %908 = dma.done %s902, 16
        $region124: #{tpu_custom_call.1} parent=103 // pred_fallthru
          _
        %s909 = sand.u32 %s54, 1
        %s910 = scalar_lea.sflag [#allocation13], %s909
        %s911 = sand.u32 %s177, 1
        %s912 = smul.addr %s911, 192
        %s913 = scalar_lea.vmem [#allocation12], %s912
        // Predicated region
        $region125: #{tpu_custom_call.1} parent=103 // pred_check
          %p914 = pneg %p190
        $region126: #{tpu_custom_call.1} parent=103 // pred_check_branch
          %916 = sbr.rel (%p914) target = $region128
        $region127: #{tpu_custom_call.1} parent=103 // pred_region
          %917 = dma.done %s910, 3072
        $region128: #{tpu_custom_call.1} parent=103 // pred_fallthru
          _
        %s918 = sand.u32 %s54, 1
        %s919 = scalar_lea.sflag [#allocation13], %s918
        %s920 = sand.u32 %s203, 1
        %s921 = smul.addr %s920, 3
        %s922 = scalar_lea.vmem [#allocation14], %s921
        // Predicated region
        $region129: #{tpu_custom_call.1} parent=103 // pred_check
          %p923 = pneg %p216
        $region130: #{tpu_custom_call.1} parent=103 // pred_check_branch
          %925 = sbr.rel (%p923) target = $region132
        $region131: #{tpu_custom_call.1} parent=103 // pred_region
          %926 = dma.done %s919, 48
        $region132: #{tpu_custom_call.1} parent=103 // pred_fallthru
          _
        %s927 = sand.u32 %s54, 1
        %s928 = scalar_lea.sflag [#allocation16], %s927
        %s929 = sand.u32 %s229, 1
        %s930 = smul.addr %s929, 64
        %s931 = scalar_lea.vmem [#allocation15], %s930
        // Predicated region
        $region133: #{tpu_custom_call.1} parent=103 // pred_check
          %p932 = pneg %p242
        $region134: #{tpu_custom_call.1} parent=103 // pred_check_branch
          %934 = sbr.rel (%p932) target = $region136
        $region135: #{tpu_custom_call.1} parent=103 // pred_region
          %935 = dma.done %s928, 1024
        $region136: #{tpu_custom_call.1} parent=103 // pred_fallthru
          _
        %s936 = sand.u32 %s54, 1
        %s937 = scalar_lea.sflag [#allocation16], %s936
        %s938 = sand.u32 %s255, 1
        %s939 = scalar_lea.vmem [#allocation17], %s938
        // Predicated region
        $region137: #{tpu_custom_call.1} parent=103 // pred_check
          %p940 = pneg %p268
        $region138: #{tpu_custom_call.1} parent=103 // pred_check_branch
          %942 = sbr.rel (%p940) target = $region140
        $region139: #{tpu_custom_call.1} parent=103 // pred_region
          %943 = dma.done %s937, 16
        $region140: #{tpu_custom_call.1} parent=103 // pred_fallthru
          _
        %s944 = sand.u32 %s54, 1
        %s945 = scalar_lea.sflag [#allocation19], %s944
        %s946 = sand.u32 %s281, 1
        %s947 = scalar_lea.vmem [#allocation18], %s946
        // Predicated region
        $region141: #{tpu_custom_call.1} parent=103 // pred_check
          %p948 = pneg %p294
        $region142: #{tpu_custom_call.1} parent=103 // pred_check_branch
          %950 = sbr.rel (%p948) target = $region144
        $region143: #{tpu_custom_call.1} parent=103 // pred_region
          %951 = dma.done %s945, 16
        $region144: #{tpu_custom_call.1} parent=103 // pred_fallthru
          _
        %s952 = sand.u32 %s54, 1
        %s953 = scalar_lea.sflag [#allocation19], %s952
        %s954 = sand.u32 %s307, 1
        %s955 = scalar_lea.vmem [#allocation20], %s954
        // Predicated region
        $region145: #{tpu_custom_call.1} parent=103 // pred_check
          %p956 = pneg %p320
        $region146: #{tpu_custom_call.1} parent=103 // pred_check_branch
          %958 = sbr.rel (%p956) target = $region148
        $region147: #{tpu_custom_call.1} parent=103 // pred_region
          %959 = dma.done %s953, 16
        $region148: #{tpu_custom_call.1} parent=103 // pred_fallthru
          _
        %s960 = sand.u32 %s54, 1
        %s961 = scalar_lea.sflag [#allocation22], %s960
        %s962 = sand.u32 %s359, 1
        %s963 = smul.addr %s962, 2
        %s964 = scalar_lea.vmem [#allocation21], %s963
        // Predicated region
        $region149: #{tpu_custom_call.1} parent=103 // pred_check
          %p965 = pneg %p372
        $region150: #{tpu_custom_call.1} parent=103 // pred_check_branch
          %967 = sbr.rel (%p965) target = $region152
        $region151: #{tpu_custom_call.1} parent=103 // pred_region
          %968 = dma.done %s961, 32
        $region152: #{tpu_custom_call.1} parent=103 // pred_fallthru
          _
        %s969 = sand.u32 %s54, 1
        %s970 = scalar_lea.sflag [#allocation22], %s969
        %s971 = sand.u32 %s385, 1
        %s972 = smul.addr %s971, 128
        %s973 = scalar_lea.vmem [#allocation23], %s972
        // Predicated region
        $region153: #{tpu_custom_call.1} parent=103 // pred_check
          %p974 = pneg %p398
        $region154: #{tpu_custom_call.1} parent=103 // pred_check_branch
          %976 = sbr.rel (%p974) target = $region156
        $region155: #{tpu_custom_call.1} parent=103 // pred_region
          %977 = dma.done %s970, 2048
        $region156: #{tpu_custom_call.1} parent=103 // pred_fallthru
          _
        %s978 = sand.u32 %s54, 1
        %s979 = scalar_lea.sflag [#allocation25], %s978
        %s980 = sand.u32 %s411, 1
        %s981 = scalar_lea.vmem [#allocation24], %s980
        // Predicated region
        $region157: #{tpu_custom_call.1} parent=103 // pred_check
          %p982 = pneg %p424
        $region158: #{tpu_custom_call.1} parent=103 // pred_check_branch
          %984 = sbr.rel (%p982) target = $region160
        $region159: #{tpu_custom_call.1} parent=103 // pred_region
          %985 = dma.done %s979, 16
        $region160: #{tpu_custom_call.1} parent=103 // pred_fallthru
          _
        // Predicated region
        $region161: #{tpu_custom_call.1} parent=103 // pred_check
          %p986 = pneg %p445
        $region162: #{tpu_custom_call.1} parent=103 // pred_check_branch
          %988 = sbr.rel (%p986) target = $region164
        $region163: #{tpu_custom_call.1} parent=103 // pred_region
          %989 = dma.done [#allocation25], 16
        $region164: #{tpu_custom_call.1} parent=103 // pred_fallthru
          _
        // Predicated region
        $region165: #{tpu_custom_call.1} parent=103 // pred_check
          %p990 = pneg %p466
        $region166: #{tpu_custom_call.1} parent=103 // pred_check_branch
          %992 = sbr.rel (%p990) target = $region168
        $region167: #{tpu_custom_call.1} parent=103 // pred_region
          %993 = dma.done [#allocation28], 16
        $region168: #{tpu_custom_call.1} parent=103 // pred_fallthru
          _
        %p994 = pneg %p70
        %p995 = pneg %p67
        %p996 = pneg %p91
        %p997 = pneg %p88
        %p998 = pneg %p112
        %p999 = pneg %p109
        %s1000 = sand.u32 %s54, 1
        %s1001 = scalar_lea.sflag [#allocation10], %s1000
        %s1002 = sand.u32 %s125, 1
        %s1003 = scalar_lea.vmem [#allocation9], %s1002
        %p1004 = pneg %p138
        %p1005 = pneg %p135
        %s1006 = sand.u32 %s54, 1
        %s1007 = scalar_lea.sflag [#allocation10], %s1006
        %s1008 = sand.u32 %s151, 1
        %s1009 = scalar_lea.vmem [#allocation11], %s1008
        %p1010 = pneg %p164
        %p1011 = pneg %p161
        %s1012 = sand.u32 %s54, 1
        %s1013 = scalar_lea.sflag [#allocation13], %s1012
        %s1014 = sand.u32 %s177, 1
        %s1015 = smul.addr %s1014, 192
        %s1016 = scalar_lea.vmem [#allocation12], %s1015
        %p1017 = pneg %p190
        %p1018 = pneg %p187
        %s1019 = sand.u32 %s54, 1
        %s1020 = scalar_lea.sflag [#allocation13], %s1019
        %s1021 = sand.u32 %s203, 1
        %s1022 = smul.addr %s1021, 3
        %s1023 = scalar_lea.vmem [#allocation14], %s1022
        %p1024 = pneg %p216
        %p1025 = pneg %p213
        %s1026 = sand.u32 %s54, 1
        %s1027 = scalar_lea.sflag [#allocation16], %s1026
        %s1028 = sand.u32 %s229, 1
        %s1029 = smul.addr %s1028, 64
        %s1030 = scalar_lea.vmem [#allocation15], %s1029
        %p1031 = pneg %p242
        %p1032 = pneg %p239
        %s1033 = sand.u32 %s54, 1
        %s1034 = scalar_lea.sflag [#allocation16], %s1033
        %s1035 = sand.u32 %s255, 1
        %s1036 = scalar_lea.vmem [#allocation17], %s1035
        %p1037 = pneg %p268
        %p1038 = pneg %p265
        %s1039 = sand.u32 %s54, 1
        %s1040 = scalar_lea.sflag [#allocation19], %s1039
        %s1041 = sand.u32 %s281, 1
        %s1042 = scalar_lea.vmem [#allocation18], %s1041
        %p1043 = pneg %p294
        %p1044 = pneg %p291
        %s1045 = sand.u32 %s54, 1
        %s1046 = scalar_lea.sflag [#allocation19], %s1045
        %s1047 = sand.u32 %s307, 1
        %s1048 = scalar_lea.vmem [#allocation20], %s1047
        %p1049 = pneg %p320
        %p1050 = pneg %p317
        %p1051 = scmp.lt.s32.totalorder %s54, 1
        %s1052 = scalar_select %p1051, %s54, 1
        %s1053 = smul.addr %s1052, 32
        %s1054 = smul.addr %s1053, 4
        %s1055 = scalar_lea.vmem %s11, %s1054
        %p1056 = pneg %p346
        %p1057 = pneg %p343
        %s1058 = sand.u32 %s54, 1
        %s1059 = scalar_lea.sflag [#allocation22], %s1058
        %s1060 = sand.u32 %s359, 1
        %s1061 = smul.addr %s1060, 2
        %s1062 = scalar_lea.vmem [#allocation21], %s1061
        %p1063 = pneg %p372
        %p1064 = pneg %p369
        %s1065 = sand.u32 %s54, 1
        %s1066 = scalar_lea.sflag [#allocation22], %s1065
        %s1067 = sand.u32 %s385, 1
        %s1068 = smul.addr %s1067, 128
        %s1069 = scalar_lea.vmem [#allocation23], %s1068
        %p1070 = pneg %p398
        %p1071 = pneg %p395
        %s1072 = sand.u32 %s54, 1
        %s1073 = scalar_lea.sflag [#allocation25], %s1072
        %s1074 = sand.u32 %s411, 1
        %s1075 = scalar_lea.vmem [#allocation24], %s1074
        %p1076 = pneg %p424
        %p1077 = pneg %p421
        %p1078 = pneg %p445
        %p1079 = pneg %p442
        %p1080 = pneg %p466
        %p1081 = pneg %p463
        %p1082 = pneg %p487
        %p1083 = pneg %p484
        %p1084 = pneg %p508
        %p1085 = pneg %p505
        %p1086 = pneg %p529
        %p1087 = pneg %p526
        %p1088 = pneg %p550
        %p1089 = pneg %p547
        %p1090 = pneg %p571
        %p1091 = pneg %p568
        %p1092 = scmp.lt.s32.totalorder %s54, 1
        %s1093 = scalar_select %p1092, %s54, 1
        %s1094 = smul.addr %s1093, 32
        %s1095 = smul.addr %s1094, 4
        %s1096 = scalar_lea.vmem %s11, %s1095
        %p1098 = scmp.eq.s32.totalorder %s54, 0
        // Predicated region
        $region169: #{tpu_custom_call.1} parent=103 // pred_check
          %p1099 = pneg %p1098
        $region170: #{tpu_custom_call.1} parent=103 // pred_check_branch
          %1101 = sbr.rel (%p1099) target = $region172
        $region171: #{tpu_custom_call.1} parent=103 // pred_region
          %v1102 = vld [vmem:[#allocation8] sm:$0xff]
          %v1103 = vld [vmem:[#allocation8 + $0x8] sm:$0xff]
          %v1104 = vld [vmem:[#allocation3] sm:$0xff]
          %v1105 = vld [vmem:[#allocation3 + $0x8] sm:$0xff]
          %v1106 = vld [vmem:[#allocation3 + $0x10] sm:$0xff]
          %v1107 = vld [vmem:[#allocation3 + $0x18] sm:$0xff]
          %v1108 = vld [vmem:[#allocation3 + $0x20] sm:$0xff]
          %v1109 = vld [vmem:[#allocation3 + $0x28] sm:$0xff]
          %v1110 = vld [vmem:[#allocation3 + $0x30] sm:$0xff]
          %v1111 = vld [vmem:[#allocation3 + $0x38] sm:$0xff]
          %v1112 = vld [vmem:[#allocation3 + $0x40] sm:$0xff]
          %v1113 = vld [vmem:[#allocation3 + $0x48] sm:$0xff]
          %v1114 = vld [vmem:[#allocation3 + $0x50] sm:$0xff]
          %v1115 = vld [vmem:[#allocation3 + $0x58] sm:$0xff]
          %v1116 = vpack.c.bf16 %v1110, %v1104
          %v1117 = vpack.c.bf16 %v1111, %v1105
          %v1118 = vpack.c.bf16 %v1112, %v1106
          %v1119 = vpack.c.bf16 %v1113, %v1107
          %v1120 = vpack.c.bf16 %v1114, %v1108
          %v1121 = vpack.c.bf16 %v1115, %v1109
          %v1122 = vld [vmem:[#allocation6] sm:$0xf]
          %v1123 = vld [vmem:[#allocation6 + $0x4] sm:$0xf]
          %v1124 = vld [vmem:[#allocation6 + $0x8] sm:$0xf]
          %v1125 = vld [vmem:[#allocation6 + $0xc] sm:$0xf]
          %v1126 = vld [vmem:[#allocation6 + $0x10] sm:$0xf]
          %v1127 = vld [vmem:[#allocation6 + $0x14] sm:$0xf]
          %v1128 = vld [vmem:[#allocation6 + $0x18] sm:$0xf]
          %v1129 = vld [vmem:[#allocation6 + $0x1c] sm:$0xf]
          %v1130 = vld [vmem:[#allocation6 + $0x20] sm:$0xf]
          %v1131 = vld [vmem:[#allocation6 + $0x24] sm:$0xf]
          %v1132 = vld [vmem:[#allocation6 + $0x28] sm:$0xf]
          %v1133 = vld [vmem:[#allocation6 + $0x2c] sm:$0xf]
          %v1134 = vld [vmem:[#allocation6 + $0x30] sm:$0xf]
          %v1135 = vld [vmem:[#allocation6 + $0x34] sm:$0xf]
          %v1136 = vld [vmem:[#allocation6 + $0x38] sm:$0xf]
          %v1137 = vld [vmem:[#allocation6 + $0x3c] sm:$0xf]
          %v1138 = vld [vmem:[#allocation6 + $0x40] sm:$0xf]
          %v1139 = vld [vmem:[#allocation6 + $0x44] sm:$0xf]
          %v1140 = vld [vmem:[#allocation6 + $0x48] sm:$0xf]
          %v1141 = vld [vmem:[#allocation6 + $0x4c] sm:$0xf]
          %v1142 = vld [vmem:[#allocation6 + $0x50] sm:$0xf]
          %v1143 = vld [vmem:[#allocation6 + $0x54] sm:$0xf]
          %v1144 = vld [vmem:[#allocation6 + $0x58] sm:$0xf]
          %v1145 = vld [vmem:[#allocation6 + $0x5c] sm:$0xf]
          %v1146 = vld [vmem:[#allocation6 + $0x60] sm:$0xf]
          %v1147 = vld [vmem:[#allocation6 + $0x64] sm:$0xf]
          %v1148 = vld [vmem:[#allocation6 + $0x68] sm:$0xf]
          %v1149 = vld [vmem:[#allocation6 + $0x6c] sm:$0xf]
          %v1150 = vld [vmem:[#allocation6 + $0x70] sm:$0xf]
          %v1151 = vld [vmem:[#allocation6 + $0x74] sm:$0xf]
          %v1152 = vld [vmem:[#allocation6 + $0x78] sm:$0xf]
          %v1153 = vld [vmem:[#allocation6 + $0x7c] sm:$0xf]
          %v1154 = vld [vmem:[#allocation6 + $0x80] sm:$0xf]
          %v1155 = vld [vmem:[#allocation6 + $0x84] sm:$0xf]
          %v1156 = vld [vmem:[#allocation6 + $0x88] sm:$0xf]
          %v1157 = vld [vmem:[#allocation6 + $0x8c] sm:$0xf]
          %v1158 = vld [vmem:[#allocation6 + $0x90] sm:$0xf]
          %v1159 = vld [vmem:[#allocation6 + $0x94] sm:$0xf]
          %v1160 = vld [vmem:[#allocation6 + $0x98] sm:$0xf]
          %v1161 = vld [vmem:[#allocation6 + $0x9c] sm:$0xf]
          %v1162 = vld [vmem:[#allocation6 + $0xa0] sm:$0xf]
          %v1163 = vld [vmem:[#allocation6 + $0xa4] sm:$0xf]
          %v1164 = vld [vmem:[#allocation6 + $0xa8] sm:$0xf]
          %v1165 = vld [vmem:[#allocation6 + $0xac] sm:$0xf]
          %v1166 = vld [vmem:[#allocation6 + $0xb0] sm:$0xf]
          %v1167 = vld [vmem:[#allocation6 + $0xb4] sm:$0xf]
          %v1168 = vld [vmem:[#allocation6 + $0xb8] sm:$0xf]
          %v1169 = vld [vmem:[#allocation6 + $0xbc] sm:$0xf]
          %v1170 = vld [vmem:[#allocation6 + $0xc0] sm:$0xf]
          %v1171 = vld [vmem:[#allocation6 + $0xc4] sm:$0xf]
          %v1172 = vld [vmem:[#allocation6 + $0xc8] sm:$0xf]
          %v1173 = vld [vmem:[#allocation6 + $0xcc] sm:$0xf]
          %v1174 = vld [vmem:[#allocation6 + $0xd0] sm:$0xf]
          %v1175 = vld [vmem:[#allocation6 + $0xd4] sm:$0xf]
          %v1176 = vld [vmem:[#allocation6 + $0xd8] sm:$0xf]
          %v1177 = vld [vmem:[#allocation6 + $0xdc] sm:$0xf]
          %v1178 = vld [vmem:[#allocation6 + $0xe0] sm:$0xf]
          %v1179 = vld [vmem:[#allocation6 + $0xe4] sm:$0xf]
          %v1180 = vld [vmem:[#allocation6 + $0xe8] sm:$0xf]
          %v1181 = vld [vmem:[#allocation6 + $0xec] sm:$0xf]
          %v1182 = vld [vmem:[#allocation6 + $0xf0] sm:$0xf]
          %v1183 = vld [vmem:[#allocation6 + $0xf4] sm:$0xf]
          %v1184 = vld [vmem:[#allocation6 + $0xf8] sm:$0xf]
          %v1185 = vld [vmem:[#allocation6 + $0xfc] sm:$0xf]
          %v1186 = vld [vmem:[#allocation6 + $0x100] sm:$0xf]
          %v1187 = vld [vmem:[#allocation6 + $0x104] sm:$0xf]
          %v1188 = vld [vmem:[#allocation6 + $0x108] sm:$0xf]
          %v1189 = vld [vmem:[#allocation6 + $0x10c] sm:$0xf]
          %v1190 = vld [vmem:[#allocation6 + $0x110] sm:$0xf]
          %v1191 = vld [vmem:[#allocation6 + $0x114] sm:$0xf]
          %v1192 = vld [vmem:[#allocation6 + $0x118] sm:$0xf]
          %v1193 = vld [vmem:[#allocation6 + $0x11c] sm:$0xf]
          %v1194 = vld [vmem:[#allocation6 + $0x120] sm:$0xf]
          %v1195 = vld [vmem:[#allocation6 + $0x124] sm:$0xf]
          %v1196 = vld [vmem:[#allocation6 + $0x128] sm:$0xf]
          %v1197 = vld [vmem:[#allocation6 + $0x12c] sm:$0xf]
          %v1198 = vld [vmem:[#allocation6 + $0x130] sm:$0xf]
          %v1199 = vld [vmem:[#allocation6 + $0x134] sm:$0xf]
          %v1200 = vld [vmem:[#allocation6 + $0x138] sm:$0xf]
          %v1201 = vld [vmem:[#allocation6 + $0x13c] sm:$0xf]
          %v1202 = vld [vmem:[#allocation6 + $0x140] sm:$0xf]
          %v1203 = vld [vmem:[#allocation6 + $0x144] sm:$0xf]
          %v1204 = vld [vmem:[#allocation6 + $0x148] sm:$0xf]
          %v1205 = vld [vmem:[#allocation6 + $0x14c] sm:$0xf]
          %v1206 = vld [vmem:[#allocation6 + $0x150] sm:$0xf]
          %v1207 = vld [vmem:[#allocation6 + $0x154] sm:$0xf]
          %v1208 = vld [vmem:[#allocation6 + $0x158] sm:$0xf]
          %v1209 = vld [vmem:[#allocation6 + $0x15c] sm:$0xf]
          %v1210 = vld [vmem:[#allocation6 + $0x160] sm:$0xf]
          %v1211 = vld [vmem:[#allocation6 + $0x164] sm:$0xf]
          %v1212 = vld [vmem:[#allocation6 + $0x168] sm:$0xf]
          %v1213 = vld [vmem:[#allocation6 + $0x16c] sm:$0xf]
          %v1214 = vld [vmem:[#allocation6 + $0x170] sm:$0xf]
          %v1215 = vld [vmem:[#allocation6 + $0x174] sm:$0xf]
          %v1216 = vld [vmem:[#allocation6 + $0x178] sm:$0xf]
          %v1217 = vld [vmem:[#allocation6 + $0x17c] sm:$0xf]
          %v1314 = vunpack.c.l.b16 %v1122
          %v1315 = vunpack.c.l.b16 %v1123
          %v1316 = vunpack.c.l.b16 %v1124
          %v1317 = vunpack.c.l.b16 %v1125
          %v1318 = vunpack.c.l.b16 %v1126
          %v1319 = vunpack.c.l.b16 %v1127
          %v1320 = vunpack.c.l.b16 %v1128
          %v1321 = vunpack.c.l.b16 %v1129
          %v1322 = vunpack.c.l.b16 %v1130
          %v1323 = vunpack.c.l.b16 %v1131
          %v1324 = vunpack.c.l.b16 %v1132
          %v1325 = vunpack.c.l.b16 %v1133
          %v1326 = vunpack.c.l.b16 %v1134
          %v1327 = vunpack.c.l.b16 %v1135
          %v1328 = vunpack.c.l.b16 %v1136
          %v1329 = vunpack.c.l.b16 %v1137
          %v1330 = vunpack.c.l.b16 %v1138
          %v1331 = vunpack.c.l.b16 %v1139
          %v1332 = vunpack.c.l.b16 %v1140
          %v1333 = vunpack.c.l.b16 %v1141
          %v1334 = vunpack.c.l.b16 %v1142
          %v1335 = vunpack.c.l.b16 %v1143
          %v1336 = vunpack.c.l.b16 %v1144
          %v1337 = vunpack.c.l.b16 %v1145
          %v1338 = vunpack.c.l.b16 %v1146
          %v1339 = vunpack.c.l.b16 %v1147
          %v1340 = vunpack.c.l.b16 %v1148
          %v1341 = vunpack.c.l.b16 %v1149
          %v1342 = vunpack.c.l.b16 %v1150
          %v1343 = vunpack.c.l.b16 %v1151
          %v1344 = vunpack.c.l.b16 %v1152
          %v1345 = vunpack.c.l.b16 %v1153
          %v1346 = vunpack.c.l.b16 %v1154
          %v1347 = vunpack.c.l.b16 %v1155
          %v1348 = vunpack.c.l.b16 %v1156
          %v1349 = vunpack.c.l.b16 %v1157
          %v1350 = vunpack.c.l.b16 %v1158
          %v1351 = vunpack.c.l.b16 %v1159
          %v1352 = vunpack.c.l.b16 %v1160
          %v1353 = vunpack.c.l.b16 %v1161
          %v1354 = vunpack.c.l.b16 %v1162
          %v1355 = vunpack.c.l.b16 %v1163
          %v1356 = vunpack.c.l.b16 %v1164
          %v1357 = vunpack.c.l.b16 %v1165
          %v1358 = vunpack.c.l.b16 %v1166
          %v1359 = vunpack.c.l.b16 %v1167
          %v1360 = vunpack.c.l.b16 %v1168
          %v1361 = vunpack.c.l.b16 %v1169
          %v1362 = vunpack.c.l.b16 %v1170
          %v1363 = vunpack.c.l.b16 %v1171
          %v1364 = vunpack.c.l.b16 %v1172
          %v1365 = vunpack.c.l.b16 %v1173
          %v1366 = vunpack.c.l.b16 %v1174
          %v1367 = vunpack.c.l.b16 %v1175
          %v1368 = vunpack.c.l.b16 %v1176
          %v1369 = vunpack.c.l.b16 %v1177
          %v1370 = vunpack.c.l.b16 %v1178
          %v1371 = vunpack.c.l.b16 %v1179
          %v1372 = vunpack.c.l.b16 %v1180
          %v1373 = vunpack.c.l.b16 %v1181
          %v1374 = vunpack.c.l.b16 %v1182
          %v1375 = vunpack.c.l.b16 %v1183
          %v1376 = vunpack.c.l.b16 %v1184
          %v1377 = vunpack.c.l.b16 %v1185
          %v1378 = vunpack.c.l.b16 %v1186
          %v1379 = vunpack.c.l.b16 %v1187
          %v1380 = vunpack.c.l.b16 %v1188
          %v1381 = vunpack.c.l.b16 %v1189
          %v1382 = vunpack.c.l.b16 %v1190
          %v1383 = vunpack.c.l.b16 %v1191
          %v1384 = vunpack.c.l.b16 %v1192
          %v1385 = vunpack.c.l.b16 %v1193
          %v1386 = vunpack.c.l.b16 %v1194
          %v1387 = vunpack.c.l.b16 %v1195
          %v1388 = vunpack.c.l.b16 %v1196
          %v1389 = vunpack.c.l.b16 %v1197
          %v1390 = vunpack.c.l.b16 %v1198
          %v1391 = vunpack.c.l.b16 %v1199
          %v1392 = vunpack.c.l.b16 %v1200
          %v1393 = vunpack.c.l.b16 %v1201
          %v1394 = vunpack.c.l.b16 %v1202
          %v1395 = vunpack.c.l.b16 %v1203
          %v1396 = vunpack.c.l.b16 %v1204
          %v1397 = vunpack.c.l.b16 %v1205
          %v1398 = vunpack.c.l.b16 %v1206
          %v1399 = vunpack.c.l.b16 %v1207
          %v1400 = vunpack.c.l.b16 %v1208
          %v1401 = vunpack.c.l.b16 %v1209
          %v1402 = vunpack.c.l.b16 %v1210
          %v1403 = vunpack.c.l.b16 %v1211
          %v1404 = vunpack.c.l.b16 %v1212
          %v1405 = vunpack.c.l.b16 %v1213
          %v1406 = vunpack.c.l.b16 %v1214
          %v1407 = vunpack.c.l.b16 %v1215
          %v1408 = vunpack.c.l.b16 %v1216
          %v1409 = vunpack.c.l.b16 %v1217
          %v1410 = vpack.c.b16 %v1315, %v1314
          %v1411 = vpack.c.b16 %v1317, %v1316
          %v1412 = vpack.c.b16 %v1319, %v1318
          %v1413 = vpack.c.b16 %v1321, %v1320
          %v1414 = vpack.c.b16 %v1323, %v1322
          %v1415 = vpack.c.b16 %v1325, %v1324
          %v1416 = vpack.c.b16 %v1327, %v1326
          %v1417 = vpack.c.b16 %v1329, %v1328
          %v1418 = vpack.c.b16 %v1331, %v1330
          %v1419 = vpack.c.b16 %v1333, %v1332
          %v1420 = vpack.c.b16 %v1335, %v1334
          %v1421 = vpack.c.b16 %v1337, %v1336
          %v1422 = vpack.c.b16 %v1339, %v1338
          %v1423 = vpack.c.b16 %v1341, %v1340
          %v1424 = vpack.c.b16 %v1343, %v1342
          %v1425 = vpack.c.b16 %v1345, %v1344
          %v1426 = vpack.c.b16 %v1347, %v1346
          %v1427 = vpack.c.b16 %v1349, %v1348
          %v1428 = vpack.c.b16 %v1351, %v1350
          %v1429 = vpack.c.b16 %v1353, %v1352
          %v1430 = vpack.c.b16 %v1355, %v1354
          %v1431 = vpack.c.b16 %v1357, %v1356
          %v1432 = vpack.c.b16 %v1359, %v1358
          %v1433 = vpack.c.b16 %v1361, %v1360
          %v1434 = vpack.c.b16 %v1363, %v1362
          %v1435 = vpack.c.b16 %v1365, %v1364
          %v1436 = vpack.c.b16 %v1367, %v1366
          %v1437 = vpack.c.b16 %v1369, %v1368
          %v1438 = vpack.c.b16 %v1371, %v1370
          %v1439 = vpack.c.b16 %v1373, %v1372
          %v1440 = vpack.c.b16 %v1375, %v1374
          %v1441 = vpack.c.b16 %v1377, %v1376
          %v1442 = vpack.c.b16 %v1379, %v1378
          %v1443 = vpack.c.b16 %v1381, %v1380
          %v1444 = vpack.c.b16 %v1383, %v1382
          %v1445 = vpack.c.b16 %v1385, %v1384
          %v1446 = vpack.c.b16 %v1387, %v1386
          %v1447 = vpack.c.b16 %v1389, %v1388
          %v1448 = vpack.c.b16 %v1391, %v1390
          %v1449 = vpack.c.b16 %v1393, %v1392
          %v1450 = vpack.c.b16 %v1395, %v1394
          %v1451 = vpack.c.b16 %v1397, %v1396
          %v1452 = vpack.c.b16 %v1399, %v1398
          %v1453 = vpack.c.b16 %v1401, %v1400
          %v1454 = vpack.c.b16 %v1403, %v1402
          %v1455 = vpack.c.b16 %v1405, %v1404
          %v1456 = vpack.c.b16 %v1407, %v1406
          %v1457 = vpack.c.b16 %v1409, %v1408
          %1506 = vmatprep.subr.bf16.mxu0 0
          %1507 = vmatpush1.bf16.msra.mxu0 %v1410
          %1508 = vmatprep.subr.bf16.mxu0 0
          %1509 = vmatpush1.bf16.msra.mxu0 %v1411
          %1510 = vmatprep.subr.bf16.mxu0 0
          %1511 = vmatpush1.bf16.msra.mxu0 %v1412
          %1512 = vmatprep.subr.bf16.mxu0 0
          %1513 = vmatpush1.bf16.msra.mxu0 %v1413
          %1514 = vmatprep.subr.bf16.mxu0 0
          %1515 = vmatpush1.bf16.msra.mxu0 %v1414
          %1516 = vmatprep.subr.bf16.mxu0 0
          %1517 = vmatpush1.bf16.msra.mxu0 %v1415
          %1518 = vmatprep.subr.bf16.mxu0 0
          %1519 = vmatpush1.bf16.msra.mxu0 %v1416
          %1520 = vmatprep.subr.bf16.mxu0 0
          %1521 = vmatpush1.bf16.msra.mxu0 %v1417
          %1522 = vmatprep.subr.bf16.mxu0 0
          %1523 = vmatpush1.bf16.msra.mxu0 %v1418
          %1524 = vmatprep.subr.bf16.mxu0 0
          %1525 = vmatpush1.bf16.msra.mxu0 %v1419
          %1526 = vmatprep.subr.bf16.mxu0 0
          %1527 = vmatpush1.bf16.msra.mxu0 %v1420
          %1528 = vmatprep.subr.bf16.mxu0 0
          %1529 = vmatpush1.bf16.msra.mxu0 %v1421
          %1530 = vmatprep.subr.bf16.mxu0 0
          %1531 = vmatpush1.bf16.msra.mxu0 %v1422
          %1532 = vmatprep.subr.bf16.mxu0 0
          %1533 = vmatpush1.bf16.msra.mxu0 %v1423
          %1534 = vmatprep.subr.bf16.mxu0 0
          %1535 = vmatpush1.bf16.msra.mxu0 %v1424
          %1536 = vmatprep.subr.bf16.mxu0 0
          %1537 = vmatpush1.bf16.msra.mxu0 %v1425
          %1538 = vmatprep.mubr.bf16.mxu0 %v1117
          %1539 = vmatmul.mubr.bf16.gmra.mrb[0].mxu0 %v1116
          %v1540 = vpop.f32.mrb[0].mxu0
          %v1541 = vadd.f32 0.0, %v1540
          %v1542 = vpop.f32.mrb[0].mxu0
          %v1543 = vpop.f32.mrb[0].mxu0
          %v1544 = vadd.f32 0.0, %v1543
          %v1545 = vpop.f32.mrb[0].mxu0
          %1546 = vdwg.mxu0
          %1547 = vmatprep.subr.bf16.mxu0 0
          %1548 = vmatpush1.bf16.msra.mxu0 %v1426
          %1549 = vmatprep.subr.bf16.mxu0 0
          %1550 = vmatpush1.bf16.msra.mxu0 %v1427
          %1551 = vmatprep.subr.bf16.mxu0 0
          %1552 = vmatpush1.bf16.msra.mxu0 %v1428
          %1553 = vmatprep.subr.bf16.mxu0 0
          %1554 = vmatpush1.bf16.msra.mxu0 %v1429
          %1555 = vmatprep.subr.bf16.mxu0 0
          %1556 = vmatpush1.bf16.msra.mxu0 %v1430
          %1557 = vmatprep.subr.bf16.mxu0 0
          %1558 = vmatpush1.bf16.msra.mxu0 %v1431
          %1559 = vmatprep.subr.bf16.mxu0 0
          %1560 = vmatpush1.bf16.msra.mxu0 %v1432
          %1561 = vmatprep.subr.bf16.mxu0 0
          %1562 = vmatpush1.bf16.msra.mxu0 %v1433
          %1563 = vmatprep.subr.bf16.mxu0 0
          %1564 = vmatpush1.bf16.msra.mxu0 %v1434
          %1565 = vmatprep.subr.bf16.mxu0 0
          %1566 = vmatpush1.bf16.msra.mxu0 %v1435
          %1567 = vmatprep.subr.bf16.mxu0 0
          %1568 = vmatpush1.bf16.msra.mxu0 %v1436
          %1569 = vmatprep.subr.bf16.mxu0 0
          %1570 = vmatpush1.bf16.msra.mxu0 %v1437
          %1571 = vmatprep.subr.bf16.mxu0 0
          %1572 = vmatpush1.bf16.msra.mxu0 %v1438
          %1573 = vmatprep.subr.bf16.mxu0 0
          %1574 = vmatpush1.bf16.msra.mxu0 %v1439
          %1575 = vmatprep.subr.bf16.mxu0 0
          %1576 = vmatpush1.bf16.msra.mxu0 %v1440
          %1577 = vmatprep.subr.bf16.mxu0 0
          %1578 = vmatpush1.bf16.msra.mxu0 %v1441
          %1579 = vmatprep.mubr.bf16.mxu0 %v1119
          %1580 = vmatmul.mubr.bf16.gmra.mrb[0].mxu0 %v1118
          %v1581 = vpop.f32.mrb[0].mxu0
          %v1582 = vadd.f32 %v1541, %v1581
          %v1583 = vpop.f32.mrb[0].mxu0
          %v1584 = vpop.f32.mrb[0].mxu0
          %v1585 = vadd.f32 %v1544, %v1584
          %v1586 = vpop.f32.mrb[0].mxu0
          %1587 = vdwg.mxu0
          %1588 = vmatprep.subr.bf16.mxu0 0
          %1589 = vmatpush1.bf16.msra.mxu0 %v1442
          %1590 = vmatprep.subr.bf16.mxu0 0
          %1591 = vmatpush1.bf16.msra.mxu0 %v1443
          %1592 = vmatprep.subr.bf16.mxu0 0
          %1593 = vmatpush1.bf16.msra.mxu0 %v1444
          %1594 = vmatprep.subr.bf16.mxu0 0
          %1595 = vmatpush1.bf16.msra.mxu0 %v1445
          %1596 = vmatprep.subr.bf16.mxu0 0
          %1597 = vmatpush1.bf16.msra.mxu0 %v1446
          %1598 = vmatprep.subr.bf16.mxu0 0
          %1599 = vmatpush1.bf16.msra.mxu0 %v1447
          %1600 = vmatprep.subr.bf16.mxu0 0
          %1601 = vmatpush1.bf16.msra.mxu0 %v1448
          %1602 = vmatprep.subr.bf16.mxu0 0
          %1603 = vmatpush1.bf16.msra.mxu0 %v1449
          %1604 = vmatprep.subr.bf16.mxu0 0
          %1605 = vmatpush1.bf16.msra.mxu0 %v1450
          %1606 = vmatprep.subr.bf16.mxu0 0
          %1607 = vmatpush1.bf16.msra.mxu0 %v1451
          %1608 = vmatprep.subr.bf16.mxu0 0
          %1609 = vmatpush1.bf16.msra.mxu0 %v1452
          %1610 = vmatprep.subr.bf16.mxu0 0
          %1611 = vmatpush1.bf16.msra.mxu0 %v1453
          %1612 = vmatprep.subr.bf16.mxu0 0
          %1613 = vmatpush1.bf16.msra.mxu0 %v1454
          %1614 = vmatprep.subr.bf16.mxu0 0
          %1615 = vmatpush1.bf16.msra.mxu0 %v1455
          %1616 = vmatprep.subr.bf16.mxu0 0
          %1617 = vmatpush1.bf16.msra.mxu0 %v1456
          %1618 = vmatprep.subr.bf16.mxu0 0
          %1619 = vmatpush1.bf16.msra.mxu0 %v1457
          %1620 = vmatprep.mubr.bf16.mxu0 %v1121
          %1621 = vmatmul.mubr.bf16.gmra.mrb[0].mxu0 %v1120
          %v1622 = vpop.f32.mrb[0].mxu0
          %v1623 = vadd.f32 %v1582, %v1622
          %v1624 = vpop.f32.mrb[0].mxu0
          %v1625 = vpop.f32.mrb[0].mxu0
          %v1626 = vadd.f32 %v1585, %v1625
          %v1627 = vpop.f32.mrb[0].mxu0
          %1628 = vdwg.mxu0
          %v1629 = vadd.f32 %v1102, %v1623
          %v1630 = vadd.f32 %v1103, %v1626
          %1631 = vst [vmem:[#allocation2] sm:$0xff] %v1629
          %1632 = vst [vmem:[#allocation2 + $0x8] sm:$0xff] %v1630
        $region172: #{tpu_custom_call.1} parent=103 // pred_fallthru
          _
        %v1633 = vld [vmem:[#allocation2] sm:$0xff]
        %v1634 = vld [vmem:[#allocation2 + $0x8] sm:$0xff]
        %v1635 = vld [vmem:[%s896] sm:$0x1]
        %v1636 = vld [vmem:[%s904] sm:$0x1]
        %1637 = vadd.xlane.f32.xlu0 %v1633
        %v1638 = vpop.xlane.xlu0 %1637
        %1639 = vadd.xlane.f32.xlu0 %v1634
        %v1640 = vpop.xlane.xlu0 %1639
        %v1641 = vrcp.pop 128.0
        %v1642 = vmul.f32 %v1638, %v1641
        %v1643 = vmul.f32 %v1640, %v1641
        %v1644 = vsub.f32 %v1633, %v1642
        %v1645 = vsub.f32 %v1634, %v1643
        %v1646 = vmul.f32 %v1644, %v1644
        %v1647 = vmul.f32 %v1645, %v1645
        %1648 = vadd.xlane.f32.xlu0 %v1646
        %v1649 = vpop.xlane.xlu0 %1648
        %1650 = vadd.xlane.f32.xlu0 %v1647
        %v1651 = vpop.xlane.xlu0 %1650
        %v1652 = vmul.f32 %v1649, %v1641
        %v1653 = vmul.f32 %v1651, %v1641
        %v1654 = vadd.f32 %v1652, 1e-06
        %v1655 = vadd.f32 %v1653, 1e-06
        %v1656 = vrsqrt.pop %v1654
        %v1657 = vrsqrt.pop %v1655
        %v1658 = vmul.f32 %v1644, %v1656
        %v1659 = vmul.f32 %v1645, %v1657
        %v1661 = vlaneseq
        %v1662 = vshrl.u32 %v1661, 7
        %v1663 = vsub.s32 0, %v1662
        %v1664 = vrot.slane %v1635, %v1663
        %v1666 = vmul.f32 %v1658, %v1664
        %v1667 = vmul.f32 %v1659, %v1664
        %v1669 = vlaneseq
        %v1670 = vshrl.u32 %v1669, 7
        %v1671 = vsub.s32 0, %v1670
        %v1672 = vrot.slane %v1636, %v1671
        %v1674 = vadd.f32 %v1666, %v1672
        %v1675 = vadd.f32 %v1667, %v1672
        %v1676 = vpack.c.bf16 %v1675, %v1674
        %v1677 = vld [vmem:[%s913] sm:$0xff]
        %v1678 = vld [vmem:[%s913 + $0x8] sm:$0xf]
        %v1679 = vld [vmem:[%s913 + $0xc] sm:$0xff]
        %v1680 = vld [vmem:[%s913 + $0x14] sm:$0xf]
        %v1681 = vld [vmem:[%s913 + $0x18] sm:$0xff]
        %v1682 = vld [vmem:[%s913 + $0x20] sm:$0xf]
        %v1683 = vld [vmem:[%s913 + $0x24] sm:$0xff]
        %v1684 = vld [vmem:[%s913 + $0x2c] sm:$0xf]
        %v1685 = vld [vmem:[%s913 + $0x30] sm:$0xff]
        %v1686 = vld [vmem:[%s913 + $0x38] sm:$0xf]
        %v1687 = vld [vmem:[%s913 + $0x3c] sm:$0xff]
        %v1688 = vld [vmem:[%s913 + $0x44] sm:$0xf]
        %v1689 = vld [vmem:[%s913 + $0x48] sm:$0xff]
        %v1690 = vld [vmem:[%s913 + $0x50] sm:$0xf]
        %v1691 = vld [vmem:[%s913 + $0x54] sm:$0xff]
        %v1692 = vld [vmem:[%s913 + $0x5c] sm:$0xf]
        %v1693 = vld [vmem:[%s913 + $0x60] sm:$0xff]
        %v1694 = vld [vmem:[%s913 + $0x68] sm:$0xf]
        %v1695 = vld [vmem:[%s913 + $0x6c] sm:$0xff]
        %v1696 = vld [vmem:[%s913 + $0x74] sm:$0xf]
        %v1697 = vld [vmem:[%s913 + $0x78] sm:$0xff]
        %v1698 = vld [vmem:[%s913 + $0x80] sm:$0xf]
        %v1699 = vld [vmem:[%s913 + $0x84] sm:$0xff]
        %v1700 = vld [vmem:[%s913 + $0x8c] sm:$0xf]
        %v1701 = vld [vmem:[%s913 + $0x90] sm:$0xff]
        %v1702 = vld [vmem:[%s913 + $0x98] sm:$0xf]
        %v1703 = vld [vmem:[%s913 + $0x9c] sm:$0xff]
        %v1704 = vld [vmem:[%s913 + $0xa4] sm:$0xf]
        %v1705 = vld [vmem:[%s913 + $0xa8] sm:$0xff]
        %v1706 = vld [vmem:[%s913 + $0xb0] sm:$0xf]
        %v1707 = vld [vmem:[%s913 + $0xb4] sm:$0xff]
        %v1708 = vld [vmem:[%s913 + $0xbc] sm:$0xf]
        %v1709 = vld [vmem:[%s922] sm:$0x7]
        %v1711 = vlaneseq
        %v1712 = vshrl.u32 %v1711, 7
        %v1713 = vsub.s32 0, %v1712
        %v1714 = vrot.slane %v1709, %v1713
        %v1715 = vlaneseq
        %v1716 = vshrl.u32 %v1715, 7
        %v1717 = vsub.s32 1, %v1716
        %v1718 = vrot.slane %v1709, %v1717
        %v1719 = vlaneseq
        %v1720 = vshrl.u32 %v1719, 7
        %v1721 = vsub.s32 2, %v1720
        %v1722 = vrot.slane %v1709, %v1721
        %v1758 = vunpack.c.l.b16 %v1677
        %v1759 = vunpack.c.h.b16 %v1677
        %v1760 = vunpack.c.l.b16 %v1678
        %v1761 = vunpack.c.l.b16 %v1679
        %v1762 = vunpack.c.h.b16 %v1679
        %v1763 = vunpack.c.l.b16 %v1680
        %v1764 = vunpack.c.l.b16 %v1681
        %v1765 = vunpack.c.h.b16 %v1681
        %v1766 = vunpack.c.l.b16 %v1682
        %v1767 = vunpack.c.l.b16 %v1683
        %v1768 = vunpack.c.h.b16 %v1683
        %v1769 = vunpack.c.l.b16 %v1684
        %v1770 = vunpack.c.l.b16 %v1685
        %v1771 = vunpack.c.h.b16 %v1685
        %v1772 = vunpack.c.l.b16 %v1686
        %v1773 = vunpack.c.l.b16 %v1687
        %v1774 = vunpack.c.h.b16 %v1687
        %v1775 = vunpack.c.l.b16 %v1688
        %v1776 = vunpack.c.l.b16 %v1689
        %v1777 = vunpack.c.h.b16 %v1689
        %v1778 = vunpack.c.l.b16 %v1690
        %v1779 = vunpack.c.l.b16 %v1691
        %v1780 = vunpack.c.h.b16 %v1691
        %v1781 = vunpack.c.l.b16 %v1692
        %v1782 = vunpack.c.l.b16 %v1693
        %v1783 = vunpack.c.h.b16 %v1693
        %v1784 = vunpack.c.l.b16 %v1694
        %v1785 = vunpack.c.l.b16 %v1695
        %v1786 = vunpack.c.h.b16 %v1695
        %v1787 = vunpack.c.l.b16 %v1696
        %v1788 = vunpack.c.l.b16 %v1697
        %v1789 = vunpack.c.h.b16 %v1697
        %v1790 = vunpack.c.l.b16 %v1698
        %v1791 = vunpack.c.l.b16 %v1699
        %v1792 = vunpack.c.h.b16 %v1699
        %v1793 = vunpack.c.l.b16 %v1700
        %v1794 = vunpack.c.l.b16 %v1701
        %v1795 = vunpack.c.h.b16 %v1701
        %v1796 = vunpack.c.l.b16 %v1702
        %v1797 = vunpack.c.l.b16 %v1703
        %v1798 = vunpack.c.h.b16 %v1703
        %v1799 = vunpack.c.l.b16 %v1704
        %v1800 = vunpack.c.l.b16 %v1705
        %v1801 = vunpack.c.h.b16 %v1705
        %v1802 = vunpack.c.l.b16 %v1706
        %v1803 = vunpack.c.l.b16 %v1707
        %v1804 = vunpack.c.h.b16 %v1707
        %v1805 = vunpack.c.l.b16 %v1708
        %v1806 = vpack.c.b16 %v1761, %v1758
        %v1807 = vpack.c.b16 %v1762, %v1759
        %v1808 = vpack.c.b16 %v1763, %v1760
        %v1809 = vpack.c.b16 %v1767, %v1764
        %v1810 = vpack.c.b16 %v1768, %v1765
        %v1811 = vpack.c.b16 %v1769, %v1766
        %v1812 = vpack.c.b16 %v1773, %v1770
        %v1813 = vpack.c.b16 %v1774, %v1771
        %v1814 = vpack.c.b16 %v1775, %v1772
        %v1815 = vpack.c.b16 %v1779, %v1776
        %v1816 = vpack.c.b16 %v1780, %v1777
        %v1817 = vpack.c.b16 %v1781, %v1778
        %v1818 = vpack.c.b16 %v1785, %v1782
        %v1819 = vpack.c.b16 %v1786, %v1783
        %v1820 = vpack.c.b16 %v1787, %v1784
        %v1821 = vpack.c.b16 %v1791, %v1788
        %v1822 = vpack.c.b16 %v1792, %v1789
        %v1823 = vpack.c.b16 %v1793, %v1790
        %v1824 = vpack.c.b16 %v1797, %v1794
        %v1825 = vpack.c.b16 %v1798, %v1795
        %v1826 = vpack.c.b16 %v1799, %v1796
        %v1827 = vpack.c.b16 %v1803, %v1800
        %v1828 = vpack.c.b16 %v1804, %v1801
        %v1829 = vpack.c.b16 %v1805, %v1802
        %1854 = vmatprep.subr.bf16.mxu0 %v1807
        %1855 = vmatpush1.bf16.msra.mxu0 %v1806
        %1856 = vmatprep.subr.bf16.mxu0 %v1810
        %1857 = vmatpush1.bf16.msra.mxu0 %v1809
        %1858 = vmatprep.subr.bf16.mxu0 %v1813
        %1859 = vmatpush1.bf16.msra.mxu0 %v1812
        %1860 = vmatprep.subr.bf16.mxu0 %v1816
        %1861 = vmatpush1.bf16.msra.mxu0 %v1815
        %1862 = vmatprep.subr.bf16.mxu0 %v1819
        %1863 = vmatpush1.bf16.msra.mxu0 %v1818
        %1864 = vmatprep.subr.bf16.mxu0 %v1822
        %1865 = vmatpush1.bf16.msra.mxu0 %v1821
        %1866 = vmatprep.subr.bf16.mxu0 %v1825
        %1867 = vmatpush1.bf16.msra.mxu0 %v1824
        %1868 = vmatprep.subr.bf16.mxu0 %v1828
        %1869 = vmatpush1.bf16.msra.mxu0 %v1827
        %1870 = vmatprep.subr.bf16.mxu0 0
        %1871 = vmatpush1.bf16.msra.mxu0 0
        %1872 = vmatprep.subr.bf16.mxu0 0
        %1873 = vmatpush1.bf16.msra.mxu0 0
        %1874 = vmatprep.subr.bf16.mxu0 0
        %1875 = vmatpush1.bf16.msra.mxu0 0
        %1876 = vmatprep.subr.bf16.mxu0 0
        %1877 = vmatpush1.bf16.msra.mxu0 0
        %1878 = vmatprep.subr.bf16.mxu0 0
        %1879 = vmatpush1.bf16.msra.mxu0 0
        %1880 = vmatprep.subr.bf16.mxu0 0
        %1881 = vmatpush1.bf16.msra.mxu0 0
        %1882 = vmatprep.subr.bf16.mxu0 0
        %1883 = vmatpush1.bf16.msra.mxu0 0
        %1884 = vmatprep.subr.bf16.mxu0 0
        %1885 = vmatpush1.bf16.msra.mxu0 0
        %1886 = vmatprep.mubr.bf16.mxu0 0
        %1887 = vmatmul.mubr.bf16.gmra.mrb[0].mxu0 %v1676
        %v1888 = vpop.f32.mrb[0].mxu0
        %v1889 = vadd.f32 %v1714, %v1888
        %v1890 = vpop.f32.mrb[0].mxu0
        %v1891 = vadd.f32 %v1718, %v1890
        %v1892 = vpop.f32.mrb[0].mxu0
        %v1893 = vadd.f32 %v1714, %v1892
        %v1894 = vpop.f32.mrb[0].mxu0
        %v1895 = vadd.f32 %v1718, %v1894
        %1896 = vdwg.mxu0
        %1897 = vmatprep.subr.bf16.mxu0 0
        %1898 = vmatpush1.bf16.msra.mxu0 %v1808
        %1899 = vmatprep.subr.bf16.mxu0 0
        %1900 = vmatpush1.bf16.msra.mxu0 %v1811
        %1901 = vmatprep.subr.bf16.mxu0 0
        %1902 = vmatpush1.bf16.msra.mxu0 %v1814
        %1903 = vmatprep.subr.bf16.mxu0 0
        %1904 = vmatpush1.bf16.msra.mxu0 %v1817
        %1905 = vmatprep.subr.bf16.mxu0 0
        %1906 = vmatpush1.bf16.msra.mxu0 %v1820
        %1907 = vmatprep.subr.bf16.mxu0 0
        %1908 = vmatpush1.bf16.msra.mxu0 %v1823
        %1909 = vmatprep.subr.bf16.mxu0 0
        %1910 = vmatpush1.bf16.msra.mxu0 %v1826
        %1911 = vmatprep.subr.bf16.mxu0 0
        %1912 = vmatpush1.bf16.msra.mxu0 %v1829
        %1913 = vmatprep.subr.bf16.mxu0 0
        %1914 = vmatpush1.bf16.msra.mxu0 0
        %1915 = vmatprep.subr.bf16.mxu0 0
        %1916 = vmatpush1.bf16.msra.mxu0 0
        %1917 = vmatprep.subr.bf16.mxu0 0
        %1918 = vmatpush1.bf16.msra.mxu0 0
        %1919 = vmatprep.subr.bf16.mxu0 0
        %1920 = vmatpush1.bf16.msra.mxu0 0
        %1921 = vmatprep.subr.bf16.mxu0 0
        %1922 = vmatpush1.bf16.msra.mxu0 0
        %1923 = vmatprep.subr.bf16.mxu0 0
        %1924 = vmatpush1.bf16.msra.mxu0 0
        %1925 = vmatprep.subr.bf16.mxu0 0
        %1926 = vmatpush1.bf16.msra.mxu0 0
        %1927 = vmatprep.subr.bf16.mxu0 0
        %1928 = vmatpush1.bf16.msra.mxu0 0
        %1929 = vmatprep.mubr.bf16.mxu0 0
        %1930 = vmatmul.mubr.bf16.gmra.mrb[0].mxu0 %v1676
        %v1931 = vpop.f32.mrb[0].mxu0
        %v1932 = vadd.f32 %v1722, %v1931
        %v1933 = vpop.f32.mrb[0].mxu0
        %v1934 = vpop.f32.mrb[0].mxu0
        %v1935 = vadd.f32 %v1722, %v1934
        %v1936 = vpop.f32.mrb[0].mxu0
        %1937 = vdwg.mxu0
        %v1938 = vlaneseq
        %v1939 = vand.u32 %v1938, 127
        %vm1940 = vcmp.lt.s32.totalorder %v1939, 5
        %vm1941 = vcmask 261120
        %v1943 = vsel %vm1941, %v1889, 0
        %v1946 = vsel %vm1941, %v1891, 0
        %1948 = vmatprep.subr.mxu0 0.0
        %1949 = vmatpush1.xpose.msra.mxu0 %v1946
        %1950 = vmatprep.subr.mxu0 0.0
        %1951 = vmatpush1.xpose.msra.mxu0 0.0
        %1952 = vmatprep.subr.mxu0 0.0
        %1953 = vmatpush1.xpose.msra.mxu0 0.0
        %1954 = vmatprep.subr.mxu0 0.0
        %1955 = vmatpush1.xpose.msra.mxu0 0.0
        %1956 = vmatprep.subr.mxu0 0.0
        %1957 = vmatpush1.xpose.msra.mxu0 0.0
        %1958 = vmatprep.subr.mxu0 0.0
        %1959 = vmatpush1.xpose.msra.mxu0 0.0
        %1960 = vmatprep.subr.mxu0 0.0
        %1961 = vmatpush1.xpose.msra.mxu0 0.0
        %1962 = vmatprep.subr.mxu0 0.0
        %1963 = vmatpush1.xpose.msra.mxu0 0.0
        %1964 = vmatprep.subr.mxu0 0.0
        %1965 = vmatpush1.xpose.msra.mxu0 0.0
        %1966 = vmatprep.subr.mxu0 0.0
        %1967 = vmatpush1.xpose.msra.mxu0 0.0
        %1968 = vmatprep.subr.mxu0 0.0
        %1969 = vmatpush1.xpose.msra.mxu0 0.0
        %1970 = vmatprep.subr.mxu0 0.0
        %1971 = vmatpush1.xpose.msra.mxu0 0.0
        %1972 = vmatprep.subr.mxu0 0.0
        %1973 = vmatpush1.xpose.msra.mxu0 0.0
        %1974 = vmatprep.subr.mxu0 0.0
        %1975 = vmatpush1.xpose.msra.mxu0 0.0
        %1976 = vmatprep.subr.mxu0 0.0
        %1977 = vmatpush1.xpose.msra.mxu0 0.0
        %1978 = vmatprep.subr.mxu0 0.0
        %1979 = vmatpush1.xpose.msra.mxu0 0.0
        %1980 = vmatprep.subr.mxu0 0.0
        %1981 = vmatpush1.xpose.msra.mxu0 0.0
        %1982 = vmatprep.subr.mxu0 0.0
        %1983 = vmatpush1.xpose.msra.mxu0 0.0
        %1984 = vmatprep.subr.mxu0 0.0
        %1985 = vmatpush1.xpose.msra.mxu0 0.0
        %1986 = vmatprep.subr.mxu0 0.0
        %1987 = vmatpush1.xpose.msra.mxu0 0.0
        %1988 = vmatprep.subr.mxu0 0.0
        %1989 = vmatpush1.xpose.msra.mxu0 0.0
        %1990 = vmatprep.subr.mxu0 0.0
        %1991 = vmatpush1.xpose.msra.mxu0 0.0
        %1992 = vmatprep.subr.mxu0 0.0
        %1993 = vmatpush1.xpose.msra.mxu0 0.0
        %1994 = vmatprep.subr.mxu0 0.0
        %1995 = vmatpush1.xpose.msra.mxu0 0.0
        %1996 = vmatprep.subr.mxu0 0.0
        %1997 = vmatpush1.xpose.msra.mxu0 0.0
        %1998 = vmatprep.subr.mxu0 0.0
        %1999 = vmatpush1.xpose.msra.mxu0 0.0
        %2000 = vmatprep.subr.mxu0 0.0
        %2001 = vmatpush1.xpose.msra.mxu0 0.0
        %2002 = vmatprep.subr.mxu0 0.0
        %2003 = vmatpush1.xpose.msra.mxu0 0.0
        %2004 = vmatprep.subr.mxu0 0.0
        %2005 = vmatpush1.xpose.msra.mxu0 0.0
        %2006 = vmatprep.subr.mxu0 0.0
        %2007 = vmatpush1.xpose.msra.mxu0 0.0
        %2008 = vmatprep.subr.mxu0 0.0
        %2009 = vmatpush1.xpose.msra.mxu0 0.0
        %2010 = vmatprep.subr.mxu0 0.0
        %2011 = vmatpush1.xpose.msra.mxu0 0.0
        %2012 = vmatprep.mubr.f32.mxu0 0.0
        %2013 = vmatmul.mubr.f32.gmra.mrb[0].mxu0 %v1943
        %v2014 = vpop.f32.mrb[0].mxu0
        %v2015 = vadd.f32 0.0, %v2014
        %v2016 = vpop.f32.mrb[0].mxu0
        %2017 = vdwg.mxu0
        %v2018 = vsel %vm1940, %v2015, -1e+30
        %vm2019 = vcmask 64512
        %v2020 = vsel %vm2019, %v2018, -inf
        %2021 = vmax.xlane.f32.xlu0 %v2020
        %v2022 = vpop.xlane.xlu0 %2021
        %v2023 = vsub.f32 %v2018, %v2022
        %v2024 = vmul.f32 %v2023, 1.442695
        %v2025 = vpow.pop %v2024
        %v2026 = vsel %vm2019, %v2025, 0.0
        %2027 = vadd.xlane.f32.xlu0 %v2026
        %v2028 = vpop.xlane.xlu0 %2027
        %v2029 = vrcp.pop %v2028
        %v2030 = vmul.f32 %v2025, %v2029
        %v2032 = vsel %vm2019, %v2030, 0
        %2034 = vmatprep.subr.mxu0 0.0
        %2035 = vmatpush1.msra.mxu0 %v1932
        %2036 = vmatprep.subr.mxu0 0.0
        %2037 = vmatpush1.msra.mxu0 0.0
        %2038 = vmatprep.subr.mxu0 0.0
        %2039 = vmatpush1.msra.mxu0 0.0
        %2040 = vmatprep.subr.mxu0 0.0
        %2041 = vmatpush1.msra.mxu0 0.0
        %2042 = vmatprep.subr.mxu0 0.0
        %2043 = vmatpush1.msra.mxu0 0.0
        %2044 = vmatprep.subr.mxu0 0.0
        %2045 = vmatpush1.msra.mxu0 0.0
        %2046 = vmatprep.subr.mxu0 0.0
        %2047 = vmatpush1.msra.mxu0 0.0
        %2048 = vmatprep.subr.mxu0 0.0
        %2049 = vmatpush1.msra.mxu0 0.0
        %2050 = vmatprep.subr.mxu0 0.0
        %2051 = vmatpush1.msra.mxu0 0.0
        %2052 = vmatprep.subr.mxu0 0.0
        %2053 = vmatpush1.msra.mxu0 0.0
        %2054 = vmatprep.subr.mxu0 0.0
        %2055 = vmatpush1.msra.mxu0 0.0
        %2056 = vmatprep.subr.mxu0 0.0
        %2057 = vmatpush1.msra.mxu0 0.0
        %2058 = vmatprep.subr.mxu0 0.0
        %2059 = vmatpush1.msra.mxu0 0.0
        %2060 = vmatprep.subr.mxu0 0.0
        %2061 = vmatpush1.msra.mxu0 0.0
        %2062 = vmatprep.subr.mxu0 0.0
        %2063 = vmatpush1.msra.mxu0 0.0
        %2064 = vmatprep.subr.mxu0 0.0
        %2065 = vmatpush1.msra.mxu0 0.0
        %2066 = vmatprep.subr.mxu0 0.0
        %2067 = vmatpush1.msra.mxu0 0.0
        %2068 = vmatprep.subr.mxu0 0.0
        %2069 = vmatpush1.msra.mxu0 0.0
        %2070 = vmatprep.subr.mxu0 0.0
        %2071 = vmatpush1.msra.mxu0 0.0
        %2072 = vmatprep.subr.mxu0 0.0
        %2073 = vmatpush1.msra.mxu0 0.0
        %2074 = vmatprep.subr.mxu0 0.0
        %2075 = vmatpush1.msra.mxu0 0.0
        %2076 = vmatprep.subr.mxu0 0.0
        %2077 = vmatpush1.msra.mxu0 0.0
        %2078 = vmatprep.subr.mxu0 0.0
        %2079 = vmatpush1.msra.mxu0 0.0
        %2080 = vmatprep.subr.mxu0 0.0
        %2081 = vmatpush1.msra.mxu0 0.0
        %2082 = vmatprep.subr.mxu0 0.0
        %2083 = vmatpush1.msra.mxu0 0.0
        %2084 = vmatprep.subr.mxu0 0.0
        %2085 = vmatpush1.msra.mxu0 0.0
        %2086 = vmatprep.subr.mxu0 0.0
        %2087 = vmatpush1.msra.mxu0 0.0
        %2088 = vmatprep.subr.mxu0 0.0
        %2089 = vmatpush1.msra.mxu0 0.0
        %2090 = vmatprep.subr.mxu0 0.0
        %2091 = vmatpush1.msra.mxu0 0.0
        %2092 = vmatprep.subr.mxu0 0.0
        %2093 = vmatpush1.msra.mxu0 0.0
        %2094 = vmatprep.subr.mxu0 0.0
        %2095 = vmatpush1.msra.mxu0 0.0
        %2096 = vmatprep.subr.mxu0 0.0
        %2097 = vmatpush1.msra.mxu0 0.0
        %2098 = vmatprep.mubr.f32.mxu0 0.0
        %2099 = vmatmul.mubr.f32.gmra.mrb[0].mxu0 %v2032
        %v2100 = vpop.f32.mrb[0].mxu0
        %v2101 = vadd.f32 0.0, %v2100
        %v2102 = vpop.f32.mrb[0].mxu0
        %2103 = vdwg.mxu0
        %2104 = vrot.lane.b32.xlu0 %v1889, 96
        %v2105 = vpop.permute.xlu0 %2104
        %2106 = vrot.lane.b32.xlu0 %v1891, 96
        %v2107 = vpop.permute.xlu0 %2106
        %v2108 = vsel %vm1941, %v2105, 0
        %v2110 = vsel %vm1941, %v2107, 0
        %2112 = vmatprep.subr.mxu0 0.0
        %2113 = vmatpush1.xpose.msra.mxu0 %v2110
        %2114 = vmatprep.subr.mxu0 0.0
        %2115 = vmatpush1.xpose.msra.mxu0 0.0
        %2116 = vmatprep.subr.mxu0 0.0
        %2117 = vmatpush1.xpose.msra.mxu0 0.0
        %2118 = vmatprep.subr.mxu0 0.0
        %2119 = vmatpush1.xpose.msra.mxu0 0.0
        %2120 = vmatprep.subr.mxu0 0.0
        %2121 = vmatpush1.xpose.msra.mxu0 0.0
        %2122 = vmatprep.subr.mxu0 0.0
        %2123 = vmatpush1.xpose.msra.mxu0 0.0
        %2124 = vmatprep.subr.mxu0 0.0
        %2125 = vmatpush1.xpose.msra.mxu0 0.0
        %2126 = vmatprep.subr.mxu0 0.0
        %2127 = vmatpush1.xpose.msra.mxu0 0.0
        %2128 = vmatprep.subr.mxu0 0.0
        %2129 = vmatpush1.xpose.msra.mxu0 0.0
        %2130 = vmatprep.subr.mxu0 0.0
        %2131 = vmatpush1.xpose.msra.mxu0 0.0
        %2132 = vmatprep.subr.mxu0 0.0
        %2133 = vmatpush1.xpose.msra.mxu0 0.0
        %2134 = vmatprep.subr.mxu0 0.0
        %2135 = vmatpush1.xpose.msra.mxu0 0.0
        %2136 = vmatprep.subr.mxu0 0.0
        %2137 = vmatpush1.xpose.msra.mxu0 0.0
        %2138 = vmatprep.subr.mxu0 0.0
        %2139 = vmatpush1.xpose.msra.mxu0 0.0
        %2140 = vmatprep.subr.mxu0 0.0
        %2141 = vmatpush1.xpose.msra.mxu0 0.0
        %2142 = vmatprep.subr.mxu0 0.0
        %2143 = vmatpush1.xpose.msra.mxu0 0.0
        %2144 = vmatprep.subr.mxu0 0.0
        %2145 = vmatpush1.xpose.msra.mxu0 0.0
        %2146 = vmatprep.subr.mxu0 0.0
        %2147 = vmatpush1.xpose.msra.mxu0 0.0
        %2148 = vmatprep.subr.mxu0 0.0
        %2149 = vmatpush1.xpose.msra.mxu0 0.0
        %2150 = vmatprep.subr.mxu0 0.0
        %2151 = vmatpush1.xpose.msra.mxu0 0.0
        %2152 = vmatprep.subr.mxu0 0.0
        %2153 = vmatpush1.xpose.msra.mxu0 0.0
        %2154 = vmatprep.subr.mxu0 0.0
        %2155 = vmatpush1.xpose.msra.mxu0 0.0
        %2156 = vmatprep.subr.mxu0 0.0
        %2157 = vmatpush1.xpose.msra.mxu0 0.0
        %2158 = vmatprep.subr.mxu0 0.0
        %2159 = vmatpush1.xpose.msra.mxu0 0.0
        %2160 = vmatprep.subr.mxu0 0.0
        %2161 = vmatpush1.xpose.msra.mxu0 0.0
        %2162 = vmatprep.subr.mxu0 0.0
        %2163 = vmatpush1.xpose.msra.mxu0 0.0
        %2164 = vmatprep.subr.mxu0 0.0
        %2165 = vmatpush1.xpose.msra.mxu0 0.0
        %2166 = vmatprep.subr.mxu0 0.0
        %2167 = vmatpush1.xpose.msra.mxu0 0.0
        %2168 = vmatprep.subr.mxu0 0.0
        %2169 = vmatpush1.xpose.msra.mxu0 0.0
        %2170 = vmatprep.subr.mxu0 0.0
        %2171 = vmatpush1.xpose.msra.mxu0 0.0
        %2172 = vmatprep.subr.mxu0 0.0
        %2173 = vmatpush1.xpose.msra.mxu0 0.0
        %2174 = vmatprep.subr.mxu0 0.0
        %2175 = vmatpush1.xpose.msra.mxu0 0.0
        %2176 = vmatprep.mubr.f32.mxu0 0.0
        %2177 = vmatmul.mubr.f32.gmra.mrb[0].mxu0 %v2108
        %v2178 = vpop.f32.mrb[0].mxu0
        %v2179 = vadd.f32 0.0, %v2178
        %v2180 = vpop.f32.mrb[0].mxu0
        %2181 = vdwg.mxu0
        %v2182 = vsel %vm1940, %v2179, -1e+30
        %v2183 = vsel %vm2019, %v2182, -inf
        %2184 = vmax.xlane.f32.xlu0 %v2183
        %v2185 = vpop.xlane.xlu0 %2184
        %v2186 = vsub.f32 %v2182, %v2185
        %v2187 = vmul.f32 %v2186, 1.442695
        %v2188 = vpow.pop %v2187
        %v2189 = vsel %vm2019, %v2188, 0.0
        %2190 = vadd.xlane.f32.xlu0 %v2189
        %v2191 = vpop.xlane.xlu0 %2190
        %v2192 = vrcp.pop %v2191
        %v2193 = vmul.f32 %v2188, %v2192
        %2195 = vrot.lane.b32.xlu0 %v1932, 96
        %v2196 = vpop.permute.xlu0 %2195
        %v2199 = vsel %vm2019, %v2193, 0
        %2201 = vmatprep.subr.mxu0 0.0
        %2202 = vmatpush1.msra.mxu0 %v2196
        %2203 = vmatprep.subr.mxu0 0.0
        %2204 = vmatpush1.msra.mxu0 0.0
        %2205 = vmatprep.subr.mxu0 0.0
        %2206 = vmatpush1.msra.mxu0 0.0
        %2207 = vmatprep.subr.mxu0 0.0
        %2208 = vmatpush1.msra.mxu0 0.0
        %2209 = vmatprep.subr.mxu0 0.0
        %2210 = vmatpush1.msra.mxu0 0.0
        %2211 = vmatprep.subr.mxu0 0.0
        %2212 = vmatpush1.msra.mxu0 0.0
        %2213 = vmatprep.subr.mxu0 0.0
        %2214 = vmatpush1.msra.mxu0 0.0
        %2215 = vmatprep.subr.mxu0 0.0
        %2216 = vmatpush1.msra.mxu0 0.0
        %2217 = vmatprep.subr.mxu0 0.0
        %2218 = vmatpush1.msra.mxu0 0.0
        %2219 = vmatprep.subr.mxu0 0.0
        %2220 = vmatpush1.msra.mxu0 0.0
        %2221 = vmatprep.subr.mxu0 0.0
        %2222 = vmatpush1.msra.mxu0 0.0
        %2223 = vmatprep.subr.mxu0 0.0
        %2224 = vmatpush1.msra.mxu0 0.0
        %2225 = vmatprep.subr.mxu0 0.0
        %2226 = vmatpush1.msra.mxu0 0.0
        %2227 = vmatprep.subr.mxu0 0.0
        %2228 = vmatpush1.msra.mxu0 0.0
        %2229 = vmatprep.subr.mxu0 0.0
        %2230 = vmatpush1.msra.mxu0 0.0
        %2231 = vmatprep.subr.mxu0 0.0
        %2232 = vmatpush1.msra.mxu0 0.0
        %2233 = vmatprep.subr.mxu0 0.0
        %2234 = vmatpush1.msra.mxu0 0.0
        %2235 = vmatprep.subr.mxu0 0.0
        %2236 = vmatpush1.msra.mxu0 0.0
        %2237 = vmatprep.subr.mxu0 0.0
        %2238 = vmatpush1.msra.mxu0 0.0
        %2239 = vmatprep.subr.mxu0 0.0
        %2240 = vmatpush1.msra.mxu0 0.0
        %2241 = vmatprep.subr.mxu0 0.0
        %2242 = vmatpush1.msra.mxu0 0.0
        %2243 = vmatprep.subr.mxu0 0.0
        %2244 = vmatpush1.msra.mxu0 0.0
        %2245 = vmatprep.subr.mxu0 0.0
        %2246 = vmatpush1.msra.mxu0 0.0
        %2247 = vmatprep.subr.mxu0 0.0
        %2248 = vmatpush1.msra.mxu0 0.0
        %2249 = vmatprep.subr.mxu0 0.0
        %2250 = vmatpush1.msra.mxu0 0.0
        %2251 = vmatprep.subr.mxu0 0.0
        %2252 = vmatpush1.msra.mxu0 0.0
        %2253 = vmatprep.subr.mxu0 0.0
        %2254 = vmatpush1.msra.mxu0 0.0
        %2255 = vmatprep.subr.mxu0 0.0
        %2256 = vmatpush1.msra.mxu0 0.0
        %2257 = vmatprep.subr.mxu0 0.0
        %2258 = vmatpush1.msra.mxu0 0.0
        %2259 = vmatprep.subr.mxu0 0.0
        %2260 = vmatpush1.msra.mxu0 0.0
        %2261 = vmatprep.subr.mxu0 0.0
        %2262 = vmatpush1.msra.mxu0 0.0
        %2263 = vmatprep.subr.mxu0 0.0
        %2264 = vmatpush1.msra.mxu0 0.0
        %2265 = vmatprep.mubr.f32.mxu0 0.0
        %2266 = vmatmul.mubr.f32.gmra.mrb[0].mxu0 %v2199
        %v2267 = vpop.f32.mrb[0].mxu0
        %v2268 = vadd.f32 0.0, %v2267
        %v2269 = vpop.f32.mrb[0].mxu0
        %2270 = vdwg.mxu0
        %2271 = vrot.lane.b32.xlu0 %v1889, 64
        %v2272 = vpop.permute.xlu0 %2271
        %2273 = vrot.lane.b32.xlu0 %v1891, 64
        %v2274 = vpop.permute.xlu0 %2273
        %v2275 = vsel %vm1941, %v2272, 0
        %v2277 = vsel %vm1941, %v2274, 0
        %2279 = vmatprep.subr.mxu0 0.0
        %2280 = vmatpush1.xpose.msra.mxu0 %v2277
        %2281 = vmatprep.subr.mxu0 0.0
        %2282 = vmatpush1.xpose.msra.mxu0 0.0
        %2283 = vmatprep.subr.mxu0 0.0
        %2284 = vmatpush1.xpose.msra.mxu0 0.0
        %2285 = vmatprep.subr.mxu0 0.0
        %2286 = vmatpush1.xpose.msra.mxu0 0.0
        %2287 = vmatprep.subr.mxu0 0.0
        %2288 = vmatpush1.xpose.msra.mxu0 0.0
        %2289 = vmatprep.subr.mxu0 0.0
        %2290 = vmatpush1.xpose.msra.mxu0 0.0
        %2291 = vmatprep.subr.mxu0 0.0
        %2292 = vmatpush1.xpose.msra.mxu0 0.0
        %2293 = vmatprep.subr.mxu0 0.0
        %2294 = vmatpush1.xpose.msra.mxu0 0.0
        %2295 = vmatprep.subr.mxu0 0.0
        %2296 = vmatpush1.xpose.msra.mxu0 0.0
        %2297 = vmatprep.subr.mxu0 0.0
        %2298 = vmatpush1.xpose.msra.mxu0 0.0
        %2299 = vmatprep.subr.mxu0 0.0
        %2300 = vmatpush1.xpose.msra.mxu0 0.0
        %2301 = vmatprep.subr.mxu0 0.0
        %2302 = vmatpush1.xpose.msra.mxu0 0.0
        %2303 = vmatprep.subr.mxu0 0.0
        %2304 = vmatpush1.xpose.msra.mxu0 0.0
        %2305 = vmatprep.subr.mxu0 0.0
        %2306 = vmatpush1.xpose.msra.mxu0 0.0
        %2307 = vmatprep.subr.mxu0 0.0
        %2308 = vmatpush1.xpose.msra.mxu0 0.0
        %2309 = vmatprep.subr.mxu0 0.0
        %2310 = vmatpush1.xpose.msra.mxu0 0.0
        %2311 = vmatprep.subr.mxu0 0.0
        %2312 = vmatpush1.xpose.msra.mxu0 0.0
        %2313 = vmatprep.subr.mxu0 0.0
        %2314 = vmatpush1.xpose.msra.mxu0 0.0
        %2315 = vmatprep.subr.mxu0 0.0
        %2316 = vmatpush1.xpose.msra.mxu0 0.0
        %2317 = vmatprep.subr.mxu0 0.0
        %2318 = vmatpush1.xpose.msra.mxu0 0.0
        %2319 = vmatprep.subr.mxu0 0.0
        %2320 = vmatpush1.xpose.msra.mxu0 0.0
        %2321 = vmatprep.subr.mxu0 0.0
        %2322 = vmatpush1.xpose.msra.mxu0 0.0
        %2323 = vmatprep.subr.mxu0 0.0
        %2324 = vmatpush1.xpose.msra.mxu0 0.0
        %2325 = vmatprep.subr.mxu0 0.0
        %2326 = vmatpush1.xpose.msra.mxu0 0.0
        %2327 = vmatprep.subr.mxu0 0.0
        %2328 = vmatpush1.xpose.msra.mxu0 0.0
        %2329 = vmatprep.subr.mxu0 0.0
        %2330 = vmatpush1.xpose.msra.mxu0 0.0
        %2331 = vmatprep.subr.mxu0 0.0
        %2332 = vmatpush1.xpose.msra.mxu0 0.0
        %2333 = vmatprep.subr.mxu0 0.0
        %2334 = vmatpush1.xpose.msra.mxu0 0.0
        %2335 = vmatprep.subr.mxu0 0.0
        %2336 = vmatpush1.xpose.msra.mxu0 0.0
        %2337 = vmatprep.subr.mxu0 0.0
        %2338 = vmatpush1.xpose.msra.mxu0 0.0
        %2339 = vmatprep.subr.mxu0 0.0
        %2340 = vmatpush1.xpose.msra.mxu0 0.0
        %2341 = vmatprep.subr.mxu0 0.0
        %2342 = vmatpush1.xpose.msra.mxu0 0.0
        %2343 = vmatprep.mubr.f32.mxu0 0.0
        %2344 = vmatmul.mubr.f32.gmra.mrb[0].mxu0 %v2275
        %v2345 = vpop.f32.mrb[0].mxu0
        %v2346 = vadd.f32 0.0, %v2345
        %v2347 = vpop.f32.mrb[0].mxu0
        %2348 = vdwg.mxu0
        %v2349 = vsel %vm1940, %v2346, -1e+30
        %v2350 = vsel %vm2019, %v2349, -inf
        %2351 = vmax.xlane.f32.xlu0 %v2350
        %v2352 = vpop.xlane.xlu0 %2351
        %v2353 = vsub.f32 %v2349, %v2352
        %v2354 = vmul.f32 %v2353, 1.442695
        %v2355 = vpow.pop %v2354
        %v2356 = vsel %vm2019, %v2355, 0.0
        %2357 = vadd.xlane.f32.xlu0 %v2356
        %v2358 = vpop.xlane.xlu0 %2357
        %v2359 = vrcp.pop %v2358
        %v2360 = vmul.f32 %v2355, %v2359
        %2361 = vrot.lane.b32.xlu0 %v1932, 64
        %v2362 = vpop.permute.xlu0 %2361
        %v2365 = vsel %vm2019, %v2360, 0
        %2367 = vmatprep.subr.mxu0 0.0
        %2368 = vmatpush1.msra.mxu0 %v2362
        %2369 = vmatprep.subr.mxu0 0.0
        %2370 = vmatpush1.msra.mxu0 0.0
        %2371 = vmatprep.subr.mxu0 0.0
        %2372 = vmatpush1.msra.mxu0 0.0
        %2373 = vmatprep.subr.mxu0 0.0
        %2374 = vmatpush1.msra.mxu0 0.0
        %2375 = vmatprep.subr.mxu0 0.0
        %2376 = vmatpush1.msra.mxu0 0.0
        %2377 = vmatprep.subr.mxu0 0.0
        %2378 = vmatpush1.msra.mxu0 0.0
        %2379 = vmatprep.subr.mxu0 0.0
        %2380 = vmatpush1.msra.mxu0 0.0
        %2381 = vmatprep.subr.mxu0 0.0
        %2382 = vmatpush1.msra.mxu0 0.0
        %2383 = vmatprep.subr.mxu0 0.0
        %2384 = vmatpush1.msra.mxu0 0.0
        %2385 = vmatprep.subr.mxu0 0.0
        %2386 = vmatpush1.msra.mxu0 0.0
        %2387 = vmatprep.subr.mxu0 0.0
        %2388 = vmatpush1.msra.mxu0 0.0
        %2389 = vmatprep.subr.mxu0 0.0
        %2390 = vmatpush1.msra.mxu0 0.0
        %2391 = vmatprep.subr.mxu0 0.0
        %2392 = vmatpush1.msra.mxu0 0.0
        %2393 = vmatprep.subr.mxu0 0.0
        %2394 = vmatpush1.msra.mxu0 0.0
        %2395 = vmatprep.subr.mxu0 0.0
        %2396 = vmatpush1.msra.mxu0 0.0
        %2397 = vmatprep.subr.mxu0 0.0
        %2398 = vmatpush1.msra.mxu0 0.0
        %2399 = vmatprep.subr.mxu0 0.0
        %2400 = vmatpush1.msra.mxu0 0.0
        %2401 = vmatprep.subr.mxu0 0.0
        %2402 = vmatpush1.msra.mxu0 0.0
        %2403 = vmatprep.subr.mxu0 0.0
        %2404 = vmatpush1.msra.mxu0 0.0
        %2405 = vmatprep.subr.mxu0 0.0
        %2406 = vmatpush1.msra.mxu0 0.0
        %2407 = vmatprep.subr.mxu0 0.0
        %2408 = vmatpush1.msra.mxu0 0.0
        %2409 = vmatprep.subr.mxu0 0.0
        %2410 = vmatpush1.msra.mxu0 0.0
        %2411 = vmatprep.subr.mxu0 0.0
        %2412 = vmatpush1.msra.mxu0 0.0
        %2413 = vmatprep.subr.mxu0 0.0
        %2414 = vmatpush1.msra.mxu0 0.0
        %2415 = vmatprep.subr.mxu0 0.0
        %2416 = vmatpush1.msra.mxu0 0.0
        %2417 = vmatprep.subr.mxu0 0.0
        %2418 = vmatpush1.msra.mxu0 0.0
        %2419 = vmatprep.subr.mxu0 0.0
        %2420 = vmatpush1.msra.mxu0 0.0
        %2421 = vmatprep.subr.mxu0 0.0
        %2422 = vmatpush1.msra.mxu0 0.0
        %2423 = vmatprep.subr.mxu0 0.0
        %2424 = vmatpush1.msra.mxu0 0.0
        %2425 = vmatprep.subr.mxu0 0.0
        %2426 = vmatpush1.msra.mxu0 0.0
        %2427 = vmatprep.subr.mxu0 0.0
        %2428 = vmatpush1.msra.mxu0 0.0
        %2429 = vmatprep.subr.mxu0 0.0
        %2430 = vmatpush1.msra.mxu0 0.0
        %2431 = vmatprep.mubr.f32.mxu0 0.0
        %2432 = vmatmul.mubr.f32.gmra.mrb[0].mxu0 %v2365
        %v2433 = vpop.f32.mrb[0].mxu0
        %v2434 = vadd.f32 0.0, %v2433
        %v2435 = vpop.f32.mrb[0].mxu0
        %2436 = vdwg.mxu0
        %2437 = vrot.lane.b32.xlu0 %v1889, 32
        %v2438 = vpop.permute.xlu0 %2437
        %2439 = vrot.lane.b32.xlu0 %v1891, 32
        %v2440 = vpop.permute.xlu0 %2439
        %v2441 = vsel %vm1941, %v2438, 0
        %v2443 = vsel %vm1941, %v2440, 0
        %2445 = vmatprep.subr.mxu0 0.0
        %2446 = vmatpush1.xpose.msra.mxu0 %v2443
        %2447 = vmatprep.subr.mxu0 0.0
        %2448 = vmatpush1.xpose.msra.mxu0 0.0
        %2449 = vmatprep.subr.mxu0 0.0
        %2450 = vmatpush1.xpose.msra.mxu0 0.0
        %2451 = vmatprep.subr.mxu0 0.0
        %2452 = vmatpush1.xpose.msra.mxu0 0.0
        %2453 = vmatprep.subr.mxu0 0.0
        %2454 = vmatpush1.xpose.msra.mxu0 0.0
        %2455 = vmatprep.subr.mxu0 0.0
        %2456 = vmatpush1.xpose.msra.mxu0 0.0
        %2457 = vmatprep.subr.mxu0 0.0
        %2458 = vmatpush1.xpose.msra.mxu0 0.0
        %2459 = vmatprep.subr.mxu0 0.0
        %2460 = vmatpush1.xpose.msra.mxu0 0.0
        %2461 = vmatprep.subr.mxu0 0.0
        %2462 = vmatpush1.xpose.msra.mxu0 0.0
        %2463 = vmatprep.subr.mxu0 0.0
        %2464 = vmatpush1.xpose.msra.mxu0 0.0
        %2465 = vmatprep.subr.mxu0 0.0
        %2466 = vmatpush1.xpose.msra.mxu0 0.0
        %2467 = vmatprep.subr.mxu0 0.0
        %2468 = vmatpush1.xpose.msra.mxu0 0.0
        %2469 = vmatprep.subr.mxu0 0.0
        %2470 = vmatpush1.xpose.msra.mxu0 0.0
        %2471 = vmatprep.subr.mxu0 0.0
        %2472 = vmatpush1.xpose.msra.mxu0 0.0
        %2473 = vmatprep.subr.mxu0 0.0
        %2474 = vmatpush1.xpose.msra.mxu0 0.0
        %2475 = vmatprep.subr.mxu0 0.0
        %2476 = vmatpush1.xpose.msra.mxu0 0.0
        %2477 = vmatprep.subr.mxu0 0.0
        %2478 = vmatpush1.xpose.msra.mxu0 0.0
        %2479 = vmatprep.subr.mxu0 0.0
        %2480 = vmatpush1.xpose.msra.mxu0 0.0
        %2481 = vmatprep.subr.mxu0 0.0
        %2482 = vmatpush1.xpose.msra.mxu0 0.0
        %2483 = vmatprep.subr.mxu0 0.0
        %2484 = vmatpush1.xpose.msra.mxu0 0.0
        %2485 = vmatprep.subr.mxu0 0.0
        %2486 = vmatpush1.xpose.msra.mxu0 0.0
        %2487 = vmatprep.subr.mxu0 0.0
        %2488 = vmatpush1.xpose.msra.mxu0 0.0
        %2489 = vmatprep.subr.mxu0 0.0
        %2490 = vmatpush1.xpose.msra.mxu0 0.0
        %2491 = vmatprep.subr.mxu0 0.0
        %2492 = vmatpush1.xpose.msra.mxu0 0.0
        %2493 = vmatprep.subr.mxu0 0.0
        %2494 = vmatpush1.xpose.msra.mxu0 0.0
        %2495 = vmatprep.subr.mxu0 0.0
        %2496 = vmatpush1.xpose.msra.mxu0 0.0
        %2497 = vmatprep.subr.mxu0 0.0
        %2498 = vmatpush1.xpose.msra.mxu0 0.0
        %2499 = vmatprep.subr.mxu0 0.0
        %2500 = vmatpush1.xpose.msra.mxu0 0.0
        %2501 = vmatprep.subr.mxu0 0.0
        %2502 = vmatpush1.xpose.msra.mxu0 0.0
        %2503 = vmatprep.subr.mxu0 0.0
        %2504 = vmatpush1.xpose.msra.mxu0 0.0
        %2505 = vmatprep.subr.mxu0 0.0
        %2506 = vmatpush1.xpose.msra.mxu0 0.0
        %2507 = vmatprep.subr.mxu0 0.0
        %2508 = vmatpush1.xpose.msra.mxu0 0.0
        %2509 = vmatprep.mubr.f32.mxu0 0.0
        %2510 = vmatmul.mubr.f32.gmra.mrb[0].mxu0 %v2441
        %v2511 = vpop.f32.mrb[0].mxu0
        %v2512 = vadd.f32 0.0, %v2511
        %v2513 = vpop.f32.mrb[0].mxu0
        %2514 = vdwg.mxu0
        %v2515 = vsel %vm1940, %v2512, -1e+30
        %v2516 = vsel %vm2019, %v2515, -inf
        %2517 = vmax.xlane.f32.xlu0 %v2516
        %v2518 = vpop.xlane.xlu0 %2517
        %v2519 = vsub.f32 %v2515, %v2518
        %v2520 = vmul.f32 %v2519, 1.442695
        %v2521 = vpow.pop %v2520
        %v2522 = vsel %vm2019, %v2521, 0.0
        %2523 = vadd.xlane.f32.xlu0 %v2522
        %v2524 = vpop.xlane.xlu0 %2523
        %v2525 = vrcp.pop %v2524
        %v2526 = vmul.f32 %v2521, %v2525
        %2527 = vrot.lane.b32.xlu0 %v1932, 32
        %v2528 = vpop.permute.xlu0 %2527
        %v2531 = vsel %vm2019, %v2526, 0
        %2533 = vmatprep.subr.mxu0 0.0
        %2534 = vmatpush1.msra.mxu0 %v2528
        %2535 = vmatprep.subr.mxu0 0.0
        %2536 = vmatpush1.msra.mxu0 0.0
        %2537 = vmatprep.subr.mxu0 0.0
        %2538 = vmatpush1.msra.mxu0 0.0
        %2539 = vmatprep.subr.mxu0 0.0
        %2540 = vmatpush1.msra.mxu0 0.0
        %2541 = vmatprep.subr.mxu0 0.0
        %2542 = vmatpush1.msra.mxu0 0.0
        %2543 = vmatprep.subr.mxu0 0.0
        %2544 = vmatpush1.msra.mxu0 0.0
        %2545 = vmatprep.subr.mxu0 0.0
        %2546 = vmatpush1.msra.mxu0 0.0
        %2547 = vmatprep.subr.mxu0 0.0
        %2548 = vmatpush1.msra.mxu0 0.0
        %2549 = vmatprep.subr.mxu0 0.0
        %2550 = vmatpush1.msra.mxu0 0.0
        %2551 = vmatprep.subr.mxu0 0.0
        %2552 = vmatpush1.msra.mxu0 0.0
        %2553 = vmatprep.subr.mxu0 0.0
        %2554 = vmatpush1.msra.mxu0 0.0
        %2555 = vmatprep.subr.mxu0 0.0
        %2556 = vmatpush1.msra.mxu0 0.0
        %2557 = vmatprep.subr.mxu0 0.0
        %2558 = vmatpush1.msra.mxu0 0.0
        %2559 = vmatprep.subr.mxu0 0.0
        %2560 = vmatpush1.msra.mxu0 0.0
        %2561 = vmatprep.subr.mxu0 0.0
        %2562 = vmatpush1.msra.mxu0 0.0
        %2563 = vmatprep.subr.mxu0 0.0
        %2564 = vmatpush1.msra.mxu0 0.0
        %2565 = vmatprep.subr.mxu0 0.0
        %2566 = vmatpush1.msra.mxu0 0.0
        %2567 = vmatprep.subr.mxu0 0.0
        %2568 = vmatpush1.msra.mxu0 0.0
        %2569 = vmatprep.subr.mxu0 0.0
        %2570 = vmatpush1.msra.mxu0 0.0
        %2571 = vmatprep.subr.mxu0 0.0
        %2572 = vmatpush1.msra.mxu0 0.0
        %2573 = vmatprep.subr.mxu0 0.0
        %2574 = vmatpush1.msra.mxu0 0.0
        %2575 = vmatprep.subr.mxu0 0.0
        %2576 = vmatpush1.msra.mxu0 0.0
        %2577 = vmatprep.subr.mxu0 0.0
        %2578 = vmatpush1.msra.mxu0 0.0
        %2579 = vmatprep.subr.mxu0 0.0
        %2580 = vmatpush1.msra.mxu0 0.0
        %2581 = vmatprep.subr.mxu0 0.0
        %2582 = vmatpush1.msra.mxu0 0.0
        %2583 = vmatprep.subr.mxu0 0.0
        %2584 = vmatpush1.msra.mxu0 0.0
        %2585 = vmatprep.subr.mxu0 0.0
        %2586 = vmatpush1.msra.mxu0 0.0
        %2587 = vmatprep.subr.mxu0 0.0
        %2588 = vmatpush1.msra.mxu0 0.0
        %2589 = vmatprep.subr.mxu0 0.0
        %2590 = vmatpush1.msra.mxu0 0.0
        %2591 = vmatprep.subr.mxu0 0.0
        %2592 = vmatpush1.msra.mxu0 0.0
        %2593 = vmatprep.subr.mxu0 0.0
        %2594 = vmatpush1.msra.mxu0 0.0
        %2595 = vmatprep.subr.mxu0 0.0
        %2596 = vmatpush1.msra.mxu0 0.0
        %2597 = vmatprep.mubr.f32.mxu0 0.0
        %2598 = vmatmul.mubr.f32.gmra.mrb[0].mxu0 %v2531
        %v2599 = vpop.f32.mrb[0].mxu0
        %v2600 = vadd.f32 0.0, %v2599
        %v2601 = vpop.f32.mrb[0].mxu0
        %2602 = vdwg.mxu0
        %2604 = vrot.lane.b32.xlu0 %v2268, 32
        %v2605 = vpop.permute.xlu0 %2604
        %2608 = vrot.lane.b32.xlu0 %v2434, 64
        %v2609 = vpop.permute.xlu0 %2608
        %2612 = vrot.lane.b32.xlu0 %v2600, 96
        %v2613 = vpop.permute.xlu0 %2612
        %v2615 = vsel %vm1941, %v2101, %v2605
        %vm2616 = vcmask 523264
        %v2617 = vsel %vm2616, %v2615, %v2609
        %vm2618 = vcmask 785408
        %v2619 = vsel %vm2618, %v2617, %v2613
        %v2621 = vsel %vm1941, %v1893, 0
        %v2624 = vsel %vm1941, %v1895, 0
        %2626 = vmatprep.subr.mxu0 0.0
        %2627 = vmatpush1.xpose.msra.mxu0 %v2624
        %2628 = vmatprep.subr.mxu0 0.0
        %2629 = vmatpush1.xpose.msra.mxu0 0.0
        %2630 = vmatprep.subr.mxu0 0.0
        %2631 = vmatpush1.xpose.msra.mxu0 0.0
        %2632 = vmatprep.subr.mxu0 0.0
        %2633 = vmatpush1.xpose.msra.mxu0 0.0
        %2634 = vmatprep.subr.mxu0 0.0
        %2635 = vmatpush1.xpose.msra.mxu0 0.0
        %2636 = vmatprep.subr.mxu0 0.0
        %2637 = vmatpush1.xpose.msra.mxu0 0.0
        %2638 = vmatprep.subr.mxu0 0.0
        %2639 = vmatpush1.xpose.msra.mxu0 0.0
        %2640 = vmatprep.subr.mxu0 0.0
        %2641 = vmatpush1.xpose.msra.mxu0 0.0
        %2642 = vmatprep.subr.mxu0 0.0
        %2643 = vmatpush1.xpose.msra.mxu0 0.0
        %2644 = vmatprep.subr.mxu0 0.0
        %2645 = vmatpush1.xpose.msra.mxu0 0.0
        %2646 = vmatprep.subr.mxu0 0.0
        %2647 = vmatpush1.xpose.msra.mxu0 0.0
        %2648 = vmatprep.subr.mxu0 0.0
        %2649 = vmatpush1.xpose.msra.mxu0 0.0
        %2650 = vmatprep.subr.mxu0 0.0
        %2651 = vmatpush1.xpose.msra.mxu0 0.0
        %2652 = vmatprep.subr.mxu0 0.0
        %2653 = vmatpush1.xpose.msra.mxu0 0.0
        %2654 = vmatprep.subr.mxu0 0.0
        %2655 = vmatpush1.xpose.msra.mxu0 0.0
        %2656 = vmatprep.subr.mxu0 0.0
        %2657 = vmatpush1.xpose.msra.mxu0 0.0
        %2658 = vmatprep.subr.mxu0 0.0
        %2659 = vmatpush1.xpose.msra.mxu0 0.0
        %2660 = vmatprep.subr.mxu0 0.0
        %2661 = vmatpush1.xpose.msra.mxu0 0.0
        %2662 = vmatprep.subr.mxu0 0.0
        %2663 = vmatpush1.xpose.msra.mxu0 0.0
        %2664 = vmatprep.subr.mxu0 0.0
        %2665 = vmatpush1.xpose.msra.mxu0 0.0
        %2666 = vmatprep.subr.mxu0 0.0
        %2667 = vmatpush1.xpose.msra.mxu0 0.0
        %2668 = vmatprep.subr.mxu0 0.0
        %2669 = vmatpush1.xpose.msra.mxu0 0.0
        %2670 = vmatprep.subr.mxu0 0.0
        %2671 = vmatpush1.xpose.msra.mxu0 0.0
        %2672 = vmatprep.subr.mxu0 0.0
        %2673 = vmatpush1.xpose.msra.mxu0 0.0
        %2674 = vmatprep.subr.mxu0 0.0
        %2675 = vmatpush1.xpose.msra.mxu0 0.0
        %2676 = vmatprep.subr.mxu0 0.0
        %2677 = vmatpush1.xpose.msra.mxu0 0.0
        %2678 = vmatprep.subr.mxu0 0.0
        %2679 = vmatpush1.xpose.msra.mxu0 0.0
        %2680 = vmatprep.subr.mxu0 0.0
        %2681 = vmatpush1.xpose.msra.mxu0 0.0
        %2682 = vmatprep.subr.mxu0 0.0
        %2683 = vmatpush1.xpose.msra.mxu0 0.0
        %2684 = vmatprep.subr.mxu0 0.0
        %2685 = vmatpush1.xpose.msra.mxu0 0.0
        %2686 = vmatprep.subr.mxu0 0.0
        %2687 = vmatpush1.xpose.msra.mxu0 0.0
        %2688 = vmatprep.subr.mxu0 0.0
        %2689 = vmatpush1.xpose.msra.mxu0 0.0
        %2690 = vmatprep.mubr.f32.mxu0 0.0
        %2691 = vmatmul.mubr.f32.gmra.mrb[0].mxu0 %v2621
        %v2692 = vpop.f32.mrb[0].mxu0
        %v2693 = vadd.f32 0.0, %v2692
        %v2694 = vpop.f32.mrb[0].mxu0
        %2695 = vdwg.mxu0
        %v2696 = vsel %vm1940, %v2693, -1e+30
        %v2697 = vsel %vm2019, %v2696, -inf
        %2698 = vmax.xlane.f32.xlu0 %v2697
        %v2699 = vpop.xlane.xlu0 %2698
        %v2700 = vsub.f32 %v2696, %v2699
        %v2701 = vmul.f32 %v2700, 1.442695
        %v2702 = vpow.pop %v2701
        %v2703 = vsel %vm2019, %v2702, 0.0
        %2704 = vadd.xlane.f32.xlu0 %v2703
        %v2705 = vpop.xlane.xlu0 %2704
        %v2706 = vrcp.pop %v2705
        %v2707 = vmul.f32 %v2702, %v2706
        %v2709 = vsel %vm2019, %v2707, 0
        %2711 = vmatprep.subr.mxu0 0.0
        %2712 = vmatpush1.msra.mxu0 %v1935
        %2713 = vmatprep.subr.mxu0 0.0
        %2714 = vmatpush1.msra.mxu0 0.0
        %2715 = vmatprep.subr.mxu0 0.0
        %2716 = vmatpush1.msra.mxu0 0.0
        %2717 = vmatprep.subr.mxu0 0.0
        %2718 = vmatpush1.msra.mxu0 0.0
        %2719 = vmatprep.subr.mxu0 0.0
        %2720 = vmatpush1.msra.mxu0 0.0
        %2721 = vmatprep.subr.mxu0 0.0
        %2722 = vmatpush1.msra.mxu0 0.0
        %2723 = vmatprep.subr.mxu0 0.0
        %2724 = vmatpush1.msra.mxu0 0.0
        %2725 = vmatprep.subr.mxu0 0.0
        %2726 = vmatpush1.msra.mxu0 0.0
        %2727 = vmatprep.subr.mxu0 0.0
        %2728 = vmatpush1.msra.mxu0 0.0
        %2729 = vmatprep.subr.mxu0 0.0
        %2730 = vmatpush1.msra.mxu0 0.0
        %2731 = vmatprep.subr.mxu0 0.0
        %2732 = vmatpush1.msra.mxu0 0.0
        %2733 = vmatprep.subr.mxu0 0.0
        %2734 = vmatpush1.msra.mxu0 0.0
        %2735 = vmatprep.subr.mxu0 0.0
        %2736 = vmatpush1.msra.mxu0 0.0
        %2737 = vmatprep.subr.mxu0 0.0
        %2738 = vmatpush1.msra.mxu0 0.0
        %2739 = vmatprep.subr.mxu0 0.0
        %2740 = vmatpush1.msra.mxu0 0.0
        %2741 = vmatprep.subr.mxu0 0.0
        %2742 = vmatpush1.msra.mxu0 0.0
        %2743 = vmatprep.subr.mxu0 0.0
        %2744 = vmatpush1.msra.mxu0 0.0
        %2745 = vmatprep.subr.mxu0 0.0
        %2746 = vmatpush1.msra.mxu0 0.0
        %2747 = vmatprep.subr.mxu0 0.0
        %2748 = vmatpush1.msra.mxu0 0.0
        %2749 = vmatprep.subr.mxu0 0.0
        %2750 = vmatpush1.msra.mxu0 0.0
        %2751 = vmatprep.subr.mxu0 0.0
        %2752 = vmatpush1.msra.mxu0 0.0
        %2753 = vmatprep.subr.mxu0 0.0
        %2754 = vmatpush1.msra.mxu0 0.0
        %2755 = vmatprep.subr.mxu0 0.0
        %2756 = vmatpush1.msra.mxu0 0.0
        %2757 = vmatprep.subr.mxu0 0.0
        %2758 = vmatpush1.msra.mxu0 0.0
        %2759 = vmatprep.subr.mxu0 0.0
        %2760 = vmatpush1.msra.mxu0 0.0
        %2761 = vmatprep.subr.mxu0 0.0
        %2762 = vmatpush1.msra.mxu0 0.0
        %2763 = vmatprep.subr.mxu0 0.0
        %2764 = vmatpush1.msra.mxu0 0.0
        %2765 = vmatprep.subr.mxu0 0.0
        %2766 = vmatpush1.msra.mxu0 0.0
        %2767 = vmatprep.subr.mxu0 0.0
        %2768 = vmatpush1.msra.mxu0 0.0
        %2769 = vmatprep.subr.mxu0 0.0
        %2770 = vmatpush1.msra.mxu0 0.0
        %2771 = vmatprep.subr.mxu0 0.0
        %2772 = vmatpush1.msra.mxu0 0.0
        %2773 = vmatprep.subr.mxu0 0.0
        %2774 = vmatpush1.msra.mxu0 0.0
        %2775 = vmatprep.mubr.f32.mxu0 0.0
        %2776 = vmatmul.mubr.f32.gmra.mrb[0].mxu0 %v2709
        %v2777 = vpop.f32.mrb[0].mxu0
        %v2778 = vadd.f32 0.0, %v2777
        %v2779 = vpop.f32.mrb[0].mxu0
        %2780 = vdwg.mxu0
        %2781 = vrot.lane.b32.xlu0 %v1893, 96
        %v2782 = vpop.permute.xlu0 %2781
        %2783 = vrot.lane.b32.xlu0 %v1895, 96
        %v2784 = vpop.permute.xlu0 %2783
        %v2785 = vsel %vm1941, %v2782, 0
        %v2787 = vsel %vm1941, %v2784, 0
        %2789 = vmatprep.subr.mxu0 0.0
        %2790 = vmatpush1.xpose.msra.mxu0 %v2787
        %2791 = vmatprep.subr.mxu0 0.0
        %2792 = vmatpush1.xpose.msra.mxu0 0.0
        %2793 = vmatprep.subr.mxu0 0.0
        %2794 = vmatpush1.xpose.msra.mxu0 0.0
        %2795 = vmatprep.subr.mxu0 0.0
        %2796 = vmatpush1.xpose.msra.mxu0 0.0
        %2797 = vmatprep.subr.mxu0 0.0
        %2798 = vmatpush1.xpose.msra.mxu0 0.0
        %2799 = vmatprep.subr.mxu0 0.0
        %2800 = vmatpush1.xpose.msra.mxu0 0.0
        %2801 = vmatprep.subr.mxu0 0.0
        %2802 = vmatpush1.xpose.msra.mxu0 0.0
        %2803 = vmatprep.subr.mxu0 0.0
        %2804 = vmatpush1.xpose.msra.mxu0 0.0
        %2805 = vmatprep.subr.mxu0 0.0
        %2806 = vmatpush1.xpose.msra.mxu0 0.0
        %2807 = vmatprep.subr.mxu0 0.0
        %2808 = vmatpush1.xpose.msra.mxu0 0.0
        %2809 = vmatprep.subr.mxu0 0.0
        %2810 = vmatpush1.xpose.msra.mxu0 0.0
        %2811 = vmatprep.subr.mxu0 0.0
        %2812 = vmatpush1.xpose.msra.mxu0 0.0
        %2813 = vmatprep.subr.mxu0 0.0
        %2814 = vmatpush1.xpose.msra.mxu0 0.0
        %2815 = vmatprep.subr.mxu0 0.0
        %2816 = vmatpush1.xpose.msra.mxu0 0.0
        %2817 = vmatprep.subr.mxu0 0.0
        %2818 = vmatpush1.xpose.msra.mxu0 0.0
        %2819 = vmatprep.subr.mxu0 0.0
        %2820 = vmatpush1.xpose.msra.mxu0 0.0
        %2821 = vmatprep.subr.mxu0 0.0
        %2822 = vmatpush1.xpose.msra.mxu0 0.0
        %2823 = vmatprep.subr.mxu0 0.0
        %2824 = vmatpush1.xpose.msra.mxu0 0.0
        %2825 = vmatprep.subr.mxu0 0.0
        %2826 = vmatpush1.xpose.msra.mxu0 0.0
        %2827 = vmatprep.subr.mxu0 0.0
        %2828 = vmatpush1.xpose.msra.mxu0 0.0
        %2829 = vmatprep.subr.mxu0 0.0
        %2830 = vmatpush1.xpose.msra.mxu0 0.0
        %2831 = vmatprep.subr.mxu0 0.0
        %2832 = vmatpush1.xpose.msra.mxu0 0.0
        %2833 = vmatprep.subr.mxu0 0.0
        %2834 = vmatpush1.xpose.msra.mxu0 0.0
        %2835 = vmatprep.subr.mxu0 0.0
        %2836 = vmatpush1.xpose.msra.mxu0 0.0
        %2837 = vmatprep.subr.mxu0 0.0
        %2838 = vmatpush1.xpose.msra.mxu0 0.0
        %2839 = vmatprep.subr.mxu0 0.0
        %2840 = vmatpush1.xpose.msra.mxu0 0.0
        %2841 = vmatprep.subr.mxu0 0.0
        %2842 = vmatpush1.xpose.msra.mxu0 0.0
        %2843 = vmatprep.subr.mxu0 0.0
        %2844 = vmatpush1.xpose.msra.mxu0 0.0
        %2845 = vmatprep.subr.mxu0 0.0
        %2846 = vmatpush1.xpose.msra.mxu0 0.0
        %2847 = vmatprep.subr.mxu0 0.0
        %2848 = vmatpush1.xpose.msra.mxu0 0.0
        %2849 = vmatprep.subr.mxu0 0.0
        %2850 = vmatpush1.xpose.msra.mxu0 0.0
        %2851 = vmatprep.subr.mxu0 0.0
        %2852 = vmatpush1.xpose.msra.mxu0 0.0
        %2853 = vmatprep.mubr.f32.mxu0 0.0
        %2854 = vmatmul.mubr.f32.gmra.mrb[0].mxu0 %v2785
        %v2855 = vpop.f32.mrb[0].mxu0
        %v2856 = vadd.f32 0.0, %v2855
        %v2857 = vpop.f32.mrb[0].mxu0
        %2858 = vdwg.mxu0
        %v2859 = vsel %vm1940, %v2856, -1e+30
        %v2860 = vsel %vm2019, %v2859, -inf
        %2861 = vmax.xlane.f32.xlu0 %v2860
        %v2862 = vpop.xlane.xlu0 %2861
        %v2863 = vsub.f32 %v2859, %v2862
        %v2864 = vmul.f32 %v2863, 1.442695
        %v2865 = vpow.pop %v2864
        %v2866 = vsel %vm2019, %v2865, 0.0
        %2867 = vadd.xlane.f32.xlu0 %v2866
        %v2868 = vpop.xlane.xlu0 %2867
        %v2869 = vrcp.pop %v2868
        %v2870 = vmul.f32 %v2865, %v2869
        %2872 = vrot.lane.b32.xlu0 %v1935, 96
        %v2873 = vpop.permute.xlu0 %2872
        %v2876 = vsel %vm2019, %v2870, 0
        %2878 = vmatprep.subr.mxu0 0.0
        %2879 = vmatpush1.msra.mxu0 %v2873
        %2880 = vmatprep.subr.mxu0 0.0
        %2881 = vmatpush1.msra.mxu0 0.0
        %2882 = vmatprep.subr.mxu0 0.0
        %2883 = vmatpush1.msra.mxu0 0.0
        %2884 = vmatprep.subr.mxu0 0.0
        %2885 = vmatpush1.msra.mxu0 0.0
        %2886 = vmatprep.subr.mxu0 0.0
        %2887 = vmatpush1.msra.mxu0 0.0
        %2888 = vmatprep.subr.mxu0 0.0
        %2889 = vmatpush1.msra.mxu0 0.0
        %2890 = vmatprep.subr.mxu0 0.0
        %2891 = vmatpush1.msra.mxu0 0.0
        %2892 = vmatprep.subr.mxu0 0.0
        %2893 = vmatpush1.msra.mxu0 0.0
        %2894 = vmatprep.subr.mxu0 0.0
        %2895 = vmatpush1.msra.mxu0 0.0
        %2896 = vmatprep.subr.mxu0 0.0
        %2897 = vmatpush1.msra.mxu0 0.0
        %2898 = vmatprep.subr.mxu0 0.0
        %2899 = vmatpush1.msra.mxu0 0.0
        %2900 = vmatprep.subr.mxu0 0.0
        %2901 = vmatpush1.msra.mxu0 0.0
        %2902 = vmatprep.subr.mxu0 0.0
        %2903 = vmatpush1.msra.mxu0 0.0
        %2904 = vmatprep.subr.mxu0 0.0
        %2905 = vmatpush1.msra.mxu0 0.0
        %2906 = vmatprep.subr.mxu0 0.0
        %2907 = vmatpush1.msra.mxu0 0.0
        %2908 = vmatprep.subr.mxu0 0.0
        %2909 = vmatpush1.msra.mxu0 0.0
        %2910 = vmatprep.subr.mxu0 0.0
        %2911 = vmatpush1.msra.mxu0 0.0
        %2912 = vmatprep.subr.mxu0 0.0
        %2913 = vmatpush1.msra.mxu0 0.0
        %2914 = vmatprep.subr.mxu0 0.0
        %2915 = vmatpush1.msra.mxu0 0.0
        %2916 = vmatprep.subr.mxu0 0.0
        %2917 = vmatpush1.msra.mxu0 0.0
        %2918 = vmatprep.subr.mxu0 0.0
        %2919 = vmatpush1.msra.mxu0 0.0
        %2920 = vmatprep.subr.mxu0 0.0
        %2921 = vmatpush1.msra.mxu0 0.0
        %2922 = vmatprep.subr.mxu0 0.0
        %2923 = vmatpush1.msra.mxu0 0.0
        %2924 = vmatprep.subr.mxu0 0.0
        %2925 = vmatpush1.msra.mxu0 0.0
        %2926 = vmatprep.subr.mxu0 0.0
        %2927 = vmatpush1.msra.mxu0 0.0
        %2928 = vmatprep.subr.mxu0 0.0
        %2929 = vmatpush1.msra.mxu0 0.0
        %2930 = vmatprep.subr.mxu0 0.0
        %2931 = vmatpush1.msra.mxu0 0.0
        %2932 = vmatprep.subr.mxu0 0.0
        %2933 = vmatpush1.msra.mxu0 0.0
        %2934 = vmatprep.subr.mxu0 0.0
        %2935 = vmatpush1.msra.mxu0 0.0
        %2936 = vmatprep.subr.mxu0 0.0
        %2937 = vmatpush1.msra.mxu0 0.0
        %2938 = vmatprep.subr.mxu0 0.0
        %2939 = vmatpush1.msra.mxu0 0.0
        %2940 = vmatprep.subr.mxu0 0.0
        %2941 = vmatpush1.msra.mxu0 0.0
        %2942 = vmatprep.mubr.f32.mxu0 0.0
        %2943 = vmatmul.mubr.f32.gmra.mrb[0].mxu0 %v2876
        %v2944 = vpop.f32.mrb[0].mxu0
        %v2945 = vadd.f32 0.0, %v2944
        %v2946 = vpop.f32.mrb[0].mxu0
        %2947 = vdwg.mxu0
        %2948 = vrot.lane.b32.xlu0 %v1893, 64
        %v2949 = vpop.permute.xlu0 %2948
        %2950 = vrot.lane.b32.xlu0 %v1895, 64
        %v2951 = vpop.permute.xlu0 %2950
        %v2952 = vsel %vm1941, %v2949, 0
        %v2954 = vsel %vm1941, %v2951, 0
        %2956 = vmatprep.subr.mxu0 0.0
        %2957 = vmatpush1.xpose.msra.mxu0 %v2954
        %2958 = vmatprep.subr.mxu0 0.0
        %2959 = vmatpush1.xpose.msra.mxu0 0.0
        %2960 = vmatprep.subr.mxu0 0.0
        %2961 = vmatpush1.xpose.msra.mxu0 0.0
        %2962 = vmatprep.subr.mxu0 0.0
        %2963 = vmatpush1.xpose.msra.mxu0 0.0
        %2964 = vmatprep.subr.mxu0 0.0
        %2965 = vmatpush1.xpose.msra.mxu0 0.0
        %2966 = vmatprep.subr.mxu0 0.0
        %2967 = vmatpush1.xpose.msra.mxu0 0.0
        %2968 = vmatprep.subr.mxu0 0.0
        %2969 = vmatpush1.xpose.msra.mxu0 0.0
        %2970 = vmatprep.subr.mxu0 0.0
        %2971 = vmatpush1.xpose.msra.mxu0 0.0
        %2972 = vmatprep.subr.mxu0 0.0
        %2973 = vmatpush1.xpose.msra.mxu0 0.0
        %2974 = vmatprep.subr.mxu0 0.0
        %2975 = vmatpush1.xpose.msra.mxu0 0.0
        %2976 = vmatprep.subr.mxu0 0.0
        %2977 = vmatpush1.xpose.msra.mxu0 0.0
        %2978 = vmatprep.subr.mxu0 0.0
        %2979 = vmatpush1.xpose.msra.mxu0 0.0
        %2980 = vmatprep.subr.mxu0 0.0
        %2981 = vmatpush1.xpose.msra.mxu0 0.0
        %2982 = vmatprep.subr.mxu0 0.0
        %2983 = vmatpush1.xpose.msra.mxu0 0.0
        %2984 = vmatprep.subr.mxu0 0.0
        %2985 = vmatpush1.xpose.msra.mxu0 0.0
        %2986 = vmatprep.subr.mxu0 0.0
        %2987 = vmatpush1.xpose.msra.mxu0 0.0
        %2988 = vmatprep.subr.mxu0 0.0
        %2989 = vmatpush1.xpose.msra.mxu0 0.0
        %2990 = vmatprep.subr.mxu0 0.0
        %2991 = vmatpush1.xpose.msra.mxu0 0.0
        %2992 = vmatprep.subr.mxu0 0.0
        %2993 = vmatpush1.xpose.msra.mxu0 0.0
        %2994 = vmatprep.subr.mxu0 0.0
        %2995 = vmatpush1.xpose.msra.mxu0 0.0
        %2996 = vmatprep.subr.mxu0 0.0
        %2997 = vmatpush1.xpose.msra.mxu0 0.0
        %2998 = vmatprep.subr.mxu0 0.0
        %2999 = vmatpush1.xpose.msra.mxu0 0.0
        %3000 = vmatprep.subr.mxu0 0.0
        %3001 = vmatpush1.xpose.msra.mxu0 0.0
        %3002 = vmatprep.subr.mxu0 0.0
        %3003 = vmatpush1.xpose.msra.mxu0 0.0
        %3004 = vmatprep.subr.mxu0 0.0
        %3005 = vmatpush1.xpose.msra.mxu0 0.0
        %3006 = vmatprep.subr.mxu0 0.0
        %3007 = vmatpush1.xpose.msra.mxu0 0.0
        %3008 = vmatprep.subr.mxu0 0.0
        %3009 = vmatpush1.xpose.msra.mxu0 0.0
        %3010 = vmatprep.subr.mxu0 0.0
        %3011 = vmatpush1.xpose.msra.mxu0 0.0
        %3012 = vmatprep.subr.mxu0 0.0
        %3013 = vmatpush1.xpose.msra.mxu0 0.0
        %3014 = vmatprep.subr.mxu0 0.0
        %3015 = vmatpush1.xpose.msra.mxu0 0.0
        %3016 = vmatprep.subr.mxu0 0.0
        %3017 = vmatpush1.xpose.msra.mxu0 0.0
        %3018 = vmatprep.subr.mxu0 0.0
        %3019 = vmatpush1.xpose.msra.mxu0 0.0
        %3020 = vmatprep.mubr.f32.mxu0 0.0
        %3021 = vmatmul.mubr.f32.gmra.mrb[0].mxu0 %v2952
        %v3022 = vpop.f32.mrb[0].mxu0
        %v3023 = vadd.f32 0.0, %v3022
        %v3024 = vpop.f32.mrb[0].mxu0
        %3025 = vdwg.mxu0
        %v3026 = vsel %vm1940, %v3023, -1e+30
        %v3027 = vsel %vm2019, %v3026, -inf
        %3028 = vmax.xlane.f32.xlu0 %v3027
        %v3029 = vpop.xlane.xlu0 %3028
        %v3030 = vsub.f32 %v3026, %v3029
        %v3031 = vmul.f32 %v3030, 1.442695
        %v3032 = vpow.pop %v3031
        %v3033 = vsel %vm2019, %v3032, 0.0
        %3034 = vadd.xlane.f32.xlu0 %v3033
        %v3035 = vpop.xlane.xlu0 %3034
        %v3036 = vrcp.pop %v3035
        %v3037 = vmul.f32 %v3032, %v3036
        %3038 = vrot.lane.b32.xlu0 %v1935, 64
        %v3039 = vpop.permute.xlu0 %3038
        %v3042 = vsel %vm2019, %v3037, 0
        %3044 = vmatprep.subr.mxu0 0.0
        %3045 = vmatpush1.msra.mxu0 %v3039
        %3046 = vmatprep.subr.mxu0 0.0
        %3047 = vmatpush1.msra.mxu0 0.0
        %3048 = vmatprep.subr.mxu0 0.0
        %3049 = vmatpush1.msra.mxu0 0.0
        %3050 = vmatprep.subr.mxu0 0.0
        %3051 = vmatpush1.msra.mxu0 0.0
        %3052 = vmatprep.subr.mxu0 0.0
        %3053 = vmatpush1.msra.mxu0 0.0
        %3054 = vmatprep.subr.mxu0 0.0
        %3055 = vmatpush1.msra.mxu0 0.0
        %3056 = vmatprep.subr.mxu0 0.0
        %3057 = vmatpush1.msra.mxu0 0.0
        %3058 = vmatprep.subr.mxu0 0.0
        %3059 = vmatpush1.msra.mxu0 0.0
        %3060 = vmatprep.subr.mxu0 0.0
        %3061 = vmatpush1.msra.mxu0 0.0
        %3062 = vmatprep.subr.mxu0 0.0
        %3063 = vmatpush1.msra.mxu0 0.0
        %3064 = vmatprep.subr.mxu0 0.0
        %3065 = vmatpush1.msra.mxu0 0.0
        %3066 = vmatprep.subr.mxu0 0.0
        %3067 = vmatpush1.msra.mxu0 0.0
        %3068 = vmatprep.subr.mxu0 0.0
        %3069 = vmatpush1.msra.mxu0 0.0
        %3070 = vmatprep.subr.mxu0 0.0
        %3071 = vmatpush1.msra.mxu0 0.0
        %3072 = vmatprep.subr.mxu0 0.0
        %3073 = vmatpush1.msra.mxu0 0.0
        %3074 = vmatprep.subr.mxu0 0.0
        %3075 = vmatpush1.msra.mxu0 0.0
        %3076 = vmatprep.subr.mxu0 0.0
        %3077 = vmatpush1.msra.mxu0 0.0
        %3078 = vmatprep.subr.mxu0 0.0
        %3079 = vmatpush1.msra.mxu0 0.0
        %3080 = vmatprep.subr.mxu0 0.0
        %3081 = vmatpush1.msra.mxu0 0.0
        %3082 = vmatprep.subr.mxu0 0.0
        %3083 = vmatpush1.msra.mxu0 0.0
        %3084 = vmatprep.subr.mxu0 0.0
        %3085 = vmatpush1.msra.mxu0 0.0
        %3086 = vmatprep.subr.mxu0 0.0
        %3087 = vmatpush1.msra.mxu0 0.0
        %3088 = vmatprep.subr.mxu0 0.0
        %3089 = vmatpush1.msra.mxu0 0.0
        %3090 = vmatprep.subr.mxu0 0.0
        %3091 = vmatpush1.msra.mxu0 0.0
        %3092 = vmatprep.subr.mxu0 0.0
        %3093 = vmatpush1.msra.mxu0 0.0
        %3094 = vmatprep.subr.mxu0 0.0
        %3095 = vmatpush1.msra.mxu0 0.0
        %3096 = vmatprep.subr.mxu0 0.0
        %3097 = vmatpush1.msra.mxu0 0.0
        %3098 = vmatprep.subr.mxu0 0.0
        %3099 = vmatpush1.msra.mxu0 0.0
        %3100 = vmatprep.subr.mxu0 0.0
        %3101 = vmatpush1.msra.mxu0 0.0
        %3102 = vmatprep.subr.mxu0 0.0
        %3103 = vmatpush1.msra.mxu0 0.0
        %3104 = vmatprep.subr.mxu0 0.0
        %3105 = vmatpush1.msra.mxu0 0.0
        %3106 = vmatprep.subr.mxu0 0.0
        %3107 = vmatpush1.msra.mxu0 0.0
        %3108 = vmatprep.mubr.f32.mxu0 0.0
        %3109 = vmatmul.mubr.f32.gmra.mrb[0].mxu0 %v3042
        %v3110 = vpop.f32.mrb[0].mxu0
        %v3111 = vadd.f32 0.0, %v3110
        %v3112 = vpop.f32.mrb[0].mxu0
        %3113 = vdwg.mxu0
        %3114 = vrot.lane.b32.xlu0 %v1893, 32
        %v3115 = vpop.permute.xlu0 %3114
        %3116 = vrot.lane.b32.xlu0 %v1895, 32
        %v3117 = vpop.permute.xlu0 %3116
        %v3118 = vsel %vm1941, %v3115, 0
        %v3120 = vsel %vm1941, %v3117, 0
        %3122 = vmatprep.subr.mxu0 0.0
        %3123 = vmatpush1.xpose.msra.mxu0 %v3120
        %3124 = vmatprep.subr.mxu0 0.0
        %3125 = vmatpush1.xpose.msra.mxu0 0.0
        %3126 = vmatprep.subr.mxu0 0.0
        %3127 = vmatpush1.xpose.msra.mxu0 0.0
        %3128 = vmatprep.subr.mxu0 0.0
        %3129 = vmatpush1.xpose.msra.mxu0 0.0
        %3130 = vmatprep.subr.mxu0 0.0
        %3131 = vmatpush1.xpose.msra.mxu0 0.0
        %3132 = vmatprep.subr.mxu0 0.0
        %3133 = vmatpush1.xpose.msra.mxu0 0.0
        %3134 = vmatprep.subr.mxu0 0.0
        %3135 = vmatpush1.xpose.msra.mxu0 0.0
        %3136 = vmatprep.subr.mxu0 0.0
        %3137 = vmatpush1.xpose.msra.mxu0 0.0
        %3138 = vmatprep.subr.mxu0 0.0
        %3139 = vmatpush1.xpose.msra.mxu0 0.0
        %3140 = vmatprep.subr.mxu0 0.0
        %3141 = vmatpush1.xpose.msra.mxu0 0.0
        %3142 = vmatprep.subr.mxu0 0.0
        %3143 = vmatpush1.xpose.msra.mxu0 0.0
        %3144 = vmatprep.subr.mxu0 0.0
        %3145 = vmatpush1.xpose.msra.mxu0 0.0
        %3146 = vmatprep.subr.mxu0 0.0
        %3147 = vmatpush1.xpose.msra.mxu0 0.0
        %3148 = vmatprep.subr.mxu0 0.0
        %3149 = vmatpush1.xpose.msra.mxu0 0.0
        %3150 = vmatprep.subr.mxu0 0.0
        %3151 = vmatpush1.xpose.msra.mxu0 0.0
        %3152 = vmatprep.subr.mxu0 0.0
        %3153 = vmatpush1.xpose.msra.mxu0 0.0
        %3154 = vmatprep.subr.mxu0 0.0
        %3155 = vmatpush1.xpose.msra.mxu0 0.0
        %3156 = vmatprep.subr.mxu0 0.0
        %3157 = vmatpush1.xpose.msra.mxu0 0.0
        %3158 = vmatprep.subr.mxu0 0.0
        %3159 = vmatpush1.xpose.msra.mxu0 0.0
        %3160 = vmatprep.subr.mxu0 0.0
        %3161 = vmatpush1.xpose.msra.mxu0 0.0
        %3162 = vmatprep.subr.mxu0 0.0
        %3163 = vmatpush1.xpose.msra.mxu0 0.0
        %3164 = vmatprep.subr.mxu0 0.0
        %3165 = vmatpush1.xpose.msra.mxu0 0.0
        %3166 = vmatprep.subr.mxu0 0.0
        %3167 = vmatpush1.xpose.msra.mxu0 0.0
        %3168 = vmatprep.subr.mxu0 0.0
        %3169 = vmatpush1.xpose.msra.mxu0 0.0
        %3170 = vmatprep.subr.mxu0 0.0
        %3171 = vmatpush1.xpose.msra.mxu0 0.0
        %3172 = vmatprep.subr.mxu0 0.0
        %3173 = vmatpush1.xpose.msra.mxu0 0.0
        %3174 = vmatprep.subr.mxu0 0.0
        %3175 = vmatpush1.xpose.msra.mxu0 0.0
        %3176 = vmatprep.subr.mxu0 0.0
        %3177 = vmatpush1.xpose.msra.mxu0 0.0
        %3178 = vmatprep.subr.mxu0 0.0
        %3179 = vmatpush1.xpose.msra.mxu0 0.0
        %3180 = vmatprep.subr.mxu0 0.0
        %3181 = vmatpush1.xpose.msra.mxu0 0.0
        %3182 = vmatprep.subr.mxu0 0.0
        %3183 = vmatpush1.xpose.msra.mxu0 0.0
        %3184 = vmatprep.subr.mxu0 0.0
        %3185 = vmatpush1.xpose.msra.mxu0 0.0
        %3186 = vmatprep.mubr.f32.mxu0 0.0
        %3187 = vmatmul.mubr.f32.gmra.mrb[0].mxu0 %v3118
        %v3188 = vpop.f32.mrb[0].mxu0
        %v3189 = vadd.f32 0.0, %v3188
        %v3190 = vpop.f32.mrb[0].mxu0
        %3191 = vdwg.mxu0
        %v3192 = vsel %vm1940, %v3189, -1e+30
        %v3193 = vsel %vm2019, %v3192, -inf
        %3194 = vmax.xlane.f32.xlu0 %v3193
        %v3195 = vpop.xlane.xlu0 %3194
        %v3196 = vsub.f32 %v3192, %v3195
        %v3197 = vmul.f32 %v3196, 1.442695
        %v3198 = vpow.pop %v3197
        %v3199 = vsel %vm2019, %v3198, 0.0
        %3200 = vadd.xlane.f32.xlu0 %v3199
        %v3201 = vpop.xlane.xlu0 %3200
        %v3202 = vrcp.pop %v3201
        %v3203 = vmul.f32 %v3198, %v3202
        %3204 = vrot.lane.b32.xlu0 %v1935, 32
        %v3205 = vpop.permute.xlu0 %3204
        %v3208 = vsel %vm2019, %v3203, 0
        %3210 = vmatprep.subr.mxu0 0.0
        %3211 = vmatpush1.msra.mxu0 %v3205
        %3212 = vmatprep.subr.mxu0 0.0
        %3213 = vmatpush1.msra.mxu0 0.0
        %3214 = vmatprep.subr.mxu0 0.0
        %3215 = vmatpush1.msra.mxu0 0.0
        %3216 = vmatprep.subr.mxu0 0.0
        %3217 = vmatpush1.msra.mxu0 0.0
        %3218 = vmatprep.subr.mxu0 0.0
        %3219 = vmatpush1.msra.mxu0 0.0
        %3220 = vmatprep.subr.mxu0 0.0
        %3221 = vmatpush1.msra.mxu0 0.0
        %3222 = vmatprep.subr.mxu0 0.0
        %3223 = vmatpush1.msra.mxu0 0.0
        %3224 = vmatprep.subr.mxu0 0.0
        %3225 = vmatpush1.msra.mxu0 0.0
        %3226 = vmatprep.subr.mxu0 0.0
        %3227 = vmatpush1.msra.mxu0 0.0
        %3228 = vmatprep.subr.mxu0 0.0
        %3229 = vmatpush1.msra.mxu0 0.0
        %3230 = vmatprep.subr.mxu0 0.0
        %3231 = vmatpush1.msra.mxu0 0.0
        %3232 = vmatprep.subr.mxu0 0.0
        %3233 = vmatpush1.msra.mxu0 0.0
        %3234 = vmatprep.subr.mxu0 0.0
        %3235 = vmatpush1.msra.mxu0 0.0
        %3236 = vmatprep.subr.mxu0 0.0
        %3237 = vmatpush1.msra.mxu0 0.0
        %3238 = vmatprep.subr.mxu0 0.0
        %3239 = vmatpush1.msra.mxu0 0.0
        %3240 = vmatprep.subr.mxu0 0.0
        %3241 = vmatpush1.msra.mxu0 0.0
        %3242 = vmatprep.subr.mxu0 0.0
        %3243 = vmatpush1.msra.mxu0 0.0
        %3244 = vmatprep.subr.mxu0 0.0
        %3245 = vmatpush1.msra.mxu0 0.0
        %3246 = vmatprep.subr.mxu0 0.0
        %3247 = vmatpush1.msra.mxu0 0.0
        %3248 = vmatprep.subr.mxu0 0.0
        %3249 = vmatpush1.msra.mxu0 0.0
        %3250 = vmatprep.subr.mxu0 0.0
        %3251 = vmatpush1.msra.mxu0 0.0
        %3252 = vmatprep.subr.mxu0 0.0
        %3253 = vmatpush1.msra.mxu0 0.0
        %3254 = vmatprep.subr.mxu0 0.0
        %3255 = vmatpush1.msra.mxu0 0.0
        %3256 = vmatprep.subr.mxu0 0.0
        %3257 = vmatpush1.msra.mxu0 0.0
        %3258 = vmatprep.subr.mxu0 0.0
        %3259 = vmatpush1.msra.mxu0 0.0
        %3260 = vmatprep.subr.mxu0 0.0
        %3261 = vmatpush1.msra.mxu0 0.0
        %3262 = vmatprep.subr.mxu0 0.0
        %3263 = vmatpush1.msra.mxu0 0.0
        %3264 = vmatprep.subr.mxu0 0.0
        %3265 = vmatpush1.msra.mxu0 0.0
        %3266 = vmatprep.subr.mxu0 0.0
        %3267 = vmatpush1.msra.mxu0 0.0
        %3268 = vmatprep.subr.mxu0 0.0
        %3269 = vmatpush1.msra.mxu0 0.0
        %3270 = vmatprep.subr.mxu0 0.0
        %3271 = vmatpush1.msra.mxu0 0.0
        %3272 = vmatprep.subr.mxu0 0.0
        %3273 = vmatpush1.msra.mxu0 0.0
        %3274 = vmatprep.mubr.f32.mxu0 0.0
        %3275 = vmatmul.mubr.f32.gmra.mrb[0].mxu0 %v3208
        %v3276 = vpop.f32.mrb[0].mxu0
        %v3277 = vadd.f32 0.0, %v3276
        %v3278 = vpop.f32.mrb[0].mxu0
        %3279 = vdwg.mxu0
        %3281 = vrot.lane.b32.xlu0 %v2945, 32
        %v3282 = vpop.permute.xlu0 %3281
        %3285 = vrot.lane.b32.xlu0 %v3111, 64
        %v3286 = vpop.permute.xlu0 %3285
        %3289 = vrot.lane.b32.xlu0 %v3277, 96
        %v3290 = vpop.permute.xlu0 %3289
        %v3292 = vsel %vm1941, %v2778, %v3282
        %v3293 = vsel %vm2616, %v3292, %v3286
        %v3294 = vsel %vm2618, %v3293, %v3290
        %v3295 = vpack.c.bf16 %v3294, %v2619
        %v3296 = vld [vmem:[%s931] sm:$0xf]
        %v3297 = vld [vmem:[%s931 + $0x4] sm:$0xf]
        %v3298 = vld [vmem:[%s931 + $0x8] sm:$0xf]
        %v3299 = vld [vmem:[%s931 + $0xc] sm:$0xf]
        %v3300 = vld [vmem:[%s931 + $0x10] sm:$0xf]
        %v3301 = vld [vmem:[%s931 + $0x14] sm:$0xf]
        %v3302 = vld [vmem:[%s931 + $0x18] sm:$0xf]
        %v3303 = vld [vmem:[%s931 + $0x1c] sm:$0xf]
        %v3304 = vld [vmem:[%s931 + $0x20] sm:$0xf]
        %v3305 = vld [vmem:[%s931 + $0x24] sm:$0xf]
        %v3306 = vld [vmem:[%s931 + $0x28] sm:$0xf]
        %v3307 = vld [vmem:[%s931 + $0x2c] sm:$0xf]
        %v3308 = vld [vmem:[%s931 + $0x30] sm:$0xf]
        %v3309 = vld [vmem:[%s931 + $0x34] sm:$0xf]
        %v3310 = vld [vmem:[%s931 + $0x38] sm:$0xf]
        %v3311 = vld [vmem:[%s931 + $0x3c] sm:$0xf]
        %v3328 = vunpack.c.l.b16 %v3296
        %v3329 = vunpack.c.l.b16 %v3297
        %v3330 = vunpack.c.l.b16 %v3298
        %v3331 = vunpack.c.l.b16 %v3299
        %v3332 = vunpack.c.l.b16 %v3300
        %v3333 = vunpack.c.l.b16 %v3301
        %v3334 = vunpack.c.l.b16 %v3302
        %v3335 = vunpack.c.l.b16 %v3303
        %v3336 = vunpack.c.l.b16 %v3304
        %v3337 = vunpack.c.l.b16 %v3305
        %v3338 = vunpack.c.l.b16 %v3306
        %v3339 = vunpack.c.l.b16 %v3307
        %v3340 = vunpack.c.l.b16 %v3308
        %v3341 = vunpack.c.l.b16 %v3309
        %v3342 = vunpack.c.l.b16 %v3310
        %v3343 = vunpack.c.l.b16 %v3311
        %v3344 = vpack.c.b16 %v3329, %v3328
        %v3345 = vpack.c.b16 %v3331, %v3330
        %v3346 = vpack.c.b16 %v3333, %v3332
        %v3347 = vpack.c.b16 %v3335, %v3334
        %v3348 = vpack.c.b16 %v3337, %v3336
        %v3349 = vpack.c.b16 %v3339, %v3338
        %v3350 = vpack.c.b16 %v3341, %v3340
        %v3351 = vpack.c.b16 %v3343, %v3342
        %3360 = vmatprep.subr.bf16.mxu0 0
        %3361 = vmatpush1.bf16.msra.mxu0 %v3344
        %3362 = vmatprep.subr.bf16.mxu0 0
        %3363 = vmatpush1.bf16.msra.mxu0 %v3345
        %3364 = vmatprep.subr.bf16.mxu0 0
        %3365 = vmatpush1.bf16.msra.mxu0 %v3346
        %3366 = vmatprep.subr.bf16.mxu0 0
        %3367 = vmatpush1.bf16.msra.mxu0 %v3347
        %3368 = vmatprep.subr.bf16.mxu0 0
        %3369 = vmatpush1.bf16.msra.mxu0 %v3348
        %3370 = vmatprep.subr.bf16.mxu0 0
        %3371 = vmatpush1.bf16.msra.mxu0 %v3349
        %3372 = vmatprep.subr.bf16.mxu0 0
        %3373 = vmatpush1.bf16.msra.mxu0 %v3350
        %3374 = vmatprep.subr.bf16.mxu0 0
        %3375 = vmatpush1.bf16.msra.mxu0 %v3351
        %3376 = vmatprep.subr.bf16.mxu0 0
        %3377 = vmatpush1.bf16.msra.mxu0 0
        %3378 = vmatprep.subr.bf16.mxu0 0
        %3379 = vmatpush1.bf16.msra.mxu0 0
        %3380 = vmatprep.subr.bf16.mxu0 0
        %3381 = vmatpush1.bf16.msra.mxu0 0
        %3382 = vmatprep.subr.bf16.mxu0 0
        %3383 = vmatpush1.bf16.msra.mxu0 0
        %3384 = vmatprep.subr.bf16.mxu0 0
        %3385 = vmatpush1.bf16.msra.mxu0 0
        %3386 = vmatprep.subr.bf16.mxu0 0
        %3387 = vmatpush1.bf16.msra.mxu0 0
        %3388 = vmatprep.subr.bf16.mxu0 0
        %3389 = vmatpush1.bf16.msra.mxu0 0
        %3390 = vmatprep.subr.bf16.mxu0 0
        %3391 = vmatpush1.bf16.msra.mxu0 0
        %3392 = vmatprep.mubr.bf16.mxu0 0
        %3393 = vmatmul.mubr.bf16.gmra.mrb[0].mxu0 %v3295
        %v3394 = vpop.f32.mrb[0].mxu0
        %v3395 = vadd.f32 0.0, %v3394
        %v3396 = vpop.f32.mrb[0].mxu0
        %v3397 = vpop.f32.mrb[0].mxu0
        %v3398 = vadd.f32 0.0, %v3397
        %v3399 = vpop.f32.mrb[0].mxu0
        %3400 = vdwg.mxu0
        %v3401 = vadd.f32 %v1633, %v3395
        %v3402 = vadd.f32 %v1634, %v3398
        %v3403 = vld [vmem:[%s939] sm:$0x1]
        %v3405 = vlaneseq
        %v3406 = vshrl.u32 %v3405, 7
        %v3407 = vsub.s32 0, %v3406
        %v3408 = vrot.slane %v3403, %v3407
        %v3410 = vadd.f32 %v3401, %v3408
        %v3411 = vadd.f32 %v3402, %v3408
        %v3412 = vld [vmem:[%s947] sm:$0x1]
        %v3413 = vld [vmem:[%s955] sm:$0x1]
        %3414 = vadd.xlane.f32.xlu0 %v3410
        %v3415 = vpop.xlane.xlu0 %3414
        %3416 = vadd.xlane.f32.xlu0 %v3411
        %v3417 = vpop.xlane.xlu0 %3416
        %v3418 = vmul.f32 %v3415, %v1641
        %v3419 = vmul.f32 %v3417, %v1641
        %v3420 = vsub.f32 %v3410, %v3418
        %v3421 = vsub.f32 %v3411, %v3419
        %v3422 = vmul.f32 %v3420, %v3420
        %v3423 = vmul.f32 %v3421, %v3421
        %3424 = vadd.xlane.f32.xlu0 %v3422
        %v3425 = vpop.xlane.xlu0 %3424
        %3426 = vadd.xlane.f32.xlu0 %v3423
        %v3427 = vpop.xlane.xlu0 %3426
        %v3428 = vmul.f32 %v3425, %v1641
        %v3429 = vmul.f32 %v3427, %v1641
        %v3430 = vadd.f32 %v3428, 1e-06
        %v3431 = vadd.f32 %v3429, 1e-06
        %v3432 = vrsqrt.pop %v3430
        %v3433 = vrsqrt.pop %v3431
        %v3434 = vmul.f32 %v3420, %v3432
        %v3435 = vmul.f32 %v3421, %v3433
        %v3437 = vlaneseq
        %v3438 = vshrl.u32 %v3437, 7
        %v3439 = vsub.s32 0, %v3438
        %v3440 = vrot.slane %v3412, %v3439
        %v3442 = vmul.f32 %v3434, %v3440
        %v3443 = vmul.f32 %v3435, %v3440
        %v3445 = vlaneseq
        %v3446 = vshrl.u32 %v3445, 7
        %v3447 = vsub.s32 0, %v3446
        %v3448 = vrot.slane %v3413, %v3447
        %v3450 = vadd.f32 %v3442, %v3448
        %v3451 = vadd.f32 %v3443, %v3448
        %v3452 = vpack.c.bf16 %v3451, %v3450
        %v3453 = vld [vmem:[%s1096] sm:$0xff]
        %v3454 = vld [vmem:[%s1096 + $0x8] sm:$0xff]
        %v3455 = vld [vmem:[%s1096 + $0x10] sm:$0xff]
        %v3456 = vld [vmem:[%s1096 + $0x18] sm:$0xff]
        %v3457 = vld [vmem:[%s1096 + $0x20] sm:$0xff]
        %v3458 = vld [vmem:[%s1096 + $0x28] sm:$0xff]
        %v3459 = vld [vmem:[%s1096 + $0x30] sm:$0xff]
        %v3460 = vld [vmem:[%s1096 + $0x38] sm:$0xff]
        %v3461 = vld [vmem:[%s1096 + $0x40] sm:$0xff]
        %v3462 = vld [vmem:[%s1096 + $0x48] sm:$0xff]
        %v3463 = vld [vmem:[%s1096 + $0x50] sm:$0xff]
        %v3464 = vld [vmem:[%s1096 + $0x58] sm:$0xff]
        %v3465 = vld [vmem:[%s1096 + $0x60] sm:$0xff]
        %v3466 = vld [vmem:[%s1096 + $0x68] sm:$0xff]
        %v3467 = vld [vmem:[%s1096 + $0x70] sm:$0xff]
        %v3468 = vld [vmem:[%s1096 + $0x78] sm:$0xff]
        %v3469 = vld [vmem:[%s964] sm:$0x3]
        %v3471 = vlaneseq
        %v3472 = vshrl.u32 %v3471, 7
        %v3473 = vsub.s32 0, %v3472
        %v3474 = vrot.slane %v3469, %v3473
        %v3475 = vlaneseq
        %v3476 = vshrl.u32 %v3475, 7
        %v3477 = vsub.s32 1, %v3476
        %v3478 = vrot.slane %v3469, %v3477
        %v3497 = vunpack.c.l.b16 %v3453
        %v3498 = vunpack.c.h.b16 %v3453
        %v3499 = vunpack.c.l.b16 %v3454
        %v3500 = vunpack.c.h.b16 %v3454
        %v3501 = vunpack.c.l.b16 %v3455
        %v3502 = vunpack.c.h.b16 %v3455
        %v3503 = vunpack.c.l.b16 %v3456
        %v3504 = vunpack.c.h.b16 %v3456
        %v3505 = vunpack.c.l.b16 %v3457
        %v3506 = vunpack.c.h.b16 %v3457
        %v3507 = vunpack.c.l.b16 %v3458
        %v3508 = vunpack.c.h.b16 %v3458
        %v3509 = vunpack.c.l.b16 %v3459
        %v3510 = vunpack.c.h.b16 %v3459
        %v3511 = vunpack.c.l.b16 %v3460
        %v3512 = vunpack.c.h.b16 %v3460
        %v3513 = vunpack.c.l.b16 %v3461
        %v3514 = vunpack.c.h.b16 %v3461
        %v3515 = vunpack.c.l.b16 %v3462
        %v3516 = vunpack.c.h.b16 %v3462
        %v3517 = vunpack.c.l.b16 %v3463
        %v3518 = vunpack.c.h.b16 %v3463
        %v3519 = vunpack.c.l.b16 %v3464
        %v3520 = vunpack.c.h.b16 %v3464
        %v3521 = vunpack.c.l.b16 %v3465
        %v3522 = vunpack.c.h.b16 %v3465
        %v3523 = vunpack.c.l.b16 %v3466
        %v3524 = vunpack.c.h.b16 %v3466
        %v3525 = vunpack.c.l.b16 %v3467
        %v3526 = vunpack.c.h.b16 %v3467
        %v3527 = vunpack.c.l.b16 %v3468
        %v3528 = vunpack.c.h.b16 %v3468
        %v3529 = vpack.c.b16 %v3499, %v3497
        %v3530 = vpack.c.b16 %v3500, %v3498
        %v3531 = vpack.c.b16 %v3503, %v3501
        %v3532 = vpack.c.b16 %v3504, %v3502
        %v3533 = vpack.c.b16 %v3507, %v3505
        %v3534 = vpack.c.b16 %v3508, %v3506
        %v3535 = vpack.c.b16 %v3511, %v3509
        %v3536 = vpack.c.b16 %v3512, %v3510
        %v3537 = vpack.c.b16 %v3515, %v3513
        %v3538 = vpack.c.b16 %v3516, %v3514
        %v3539 = vpack.c.b16 %v3519, %v3517
        %v3540 = vpack.c.b16 %v3520, %v3518
        %v3541 = vpack.c.b16 %v3523, %v3521
        %v3542 = vpack.c.b16 %v3524, %v3522
        %v3543 = vpack.c.b16 %v3527, %v3525
        %v3544 = vpack.c.b16 %v3528, %v3526
        %3561 = vmatprep.subr.bf16.mxu0 %v3530
        %3562 = vmatpush1.bf16.msra.mxu0 %v3529
        %3563 = vmatprep.subr.bf16.mxu0 %v3532
        %3564 = vmatpush1.bf16.msra.mxu0 %v3531
        %3565 = vmatprep.subr.bf16.mxu0 %v3534
        %3566 = vmatpush1.bf16.msra.mxu0 %v3533
        %3567 = vmatprep.subr.bf16.mxu0 %v3536
        %3568 = vmatpush1.bf16.msra.mxu0 %v3535
        %3569 = vmatprep.subr.bf16.mxu0 %v3538
        %3570 = vmatpush1.bf16.msra.mxu0 %v3537
        %3571 = vmatprep.subr.bf16.mxu0 %v3540
        %3572 = vmatpush1.bf16.msra.mxu0 %v3539
        %3573 = vmatprep.subr.bf16.mxu0 %v3542
        %3574 = vmatpush1.bf16.msra.mxu0 %v3541
        %3575 = vmatprep.subr.bf16.mxu0 %v3544
        %3576 = vmatpush1.bf16.msra.mxu0 %v3543
        %3577 = vmatprep.subr.bf16.mxu0 0
        %3578 = vmatpush1.bf16.msra.mxu0 0
        %3579 = vmatprep.subr.bf16.mxu0 0
        %3580 = vmatpush1.bf16.msra.mxu0 0
        %3581 = vmatprep.subr.bf16.mxu0 0
        %3582 = vmatpush1.bf16.msra.mxu0 0
        %3583 = vmatprep.subr.bf16.mxu0 0
        %3584 = vmatpush1.bf16.msra.mxu0 0
        %3585 = vmatprep.subr.bf16.mxu0 0
        %3586 = vmatpush1.bf16.msra.mxu0 0
        %3587 = vmatprep.subr.bf16.mxu0 0
        %3588 = vmatpush1.bf16.msra.mxu0 0
        %3589 = vmatprep.subr.bf16.mxu0 0
        %3590 = vmatpush1.bf16.msra.mxu0 0
        %3591 = vmatprep.subr.bf16.mxu0 0
        %3592 = vmatpush1.bf16.msra.mxu0 0
        %3593 = vmatprep.mubr.bf16.mxu0 0
        %3594 = vmatmul.mubr.bf16.gmra.mrb[0].mxu0 %v3452
        %v3595 = vpop.f32.mrb[0].mxu0
        %v3596 = vadd.f32 %v3474, %v3595
        %v3597 = vpop.f32.mrb[0].mxu0
        %v3598 = vadd.f32 %v3478, %v3597
        %v3599 = vpop.f32.mrb[0].mxu0
        %v3600 = vadd.f32 %v3474, %v3599
        %v3601 = vpop.f32.mrb[0].mxu0
        %v3602 = vadd.f32 %v3478, %v3601
        %3603 = vdwg.mxu0
        %v3604 = vmul.f32 %v3596, 0.5
        %v3605 = vmul.f32 %v3598, 0.5
        %v3606 = vmul.f32 %v3600, 0.5
        %v3607 = vmul.f32 %v3602, 0.5
        %v3608 = vmul.f32 %v3596, 0.044715
        %v3609 = vmul.f32 %v3598, 0.044715
        %v3610 = vmul.f32 %v3600, 0.044715
        %v3611 = vmul.f32 %v3602, 0.044715
        %v3612 = vmul.f32 %v3608, %v3596
        %v3613 = vmul.f32 %v3609, %v3598
        %v3614 = vmul.f32 %v3610, %v3600
        %v3615 = vmul.f32 %v3611, %v3602
        %v3616 = vmul.f32 %v3612, %v3596
        %v3617 = vmul.f32 %v3613, %v3598
        %v3618 = vmul.f32 %v3614, %v3600
        %v3619 = vmul.f32 %v3615, %v3602
        %v3620 = vadd.f32 %v3596, %v3616
        %v3621 = vadd.f32 %v3598, %v3617
        %v3622 = vadd.f32 %v3600, %v3618
        %v3623 = vadd.f32 %v3602, %v3619
        %v3624 = vmul.f32 %v3620, 0.7978846
        %v3625 = vmul.f32 %v3621, 0.7978846
        %v3626 = vmul.f32 %v3622, 0.7978846
        %v3627 = vmul.f32 %v3623, 0.7978846
        %v3628 = vtanh.pop %v3624
        %v3629 = vtanh.pop %v3625
        %v3630 = vtanh.pop %v3626
        %v3631 = vtanh.pop %v3627
        %v3632 = vadd.f32 %v3628, 1.0
        %v3633 = vadd.f32 %v3629, 1.0
        %v3634 = vadd.f32 %v3630, 1.0
        %v3635 = vadd.f32 %v3631, 1.0
        %v3636 = vmul.f32 %v3604, %v3632
        %v3637 = vmul.f32 %v3605, %v3633
        %v3638 = vmul.f32 %v3606, %v3634
        %v3639 = vmul.f32 %v3607, %v3635
        %v3640 = vpack.c.bf16 %v3638, %v3636
        %v3641 = vpack.c.bf16 %v3639, %v3637
        %v3642 = vld [vmem:[%s973] sm:$0xf]
        %v3643 = vld [vmem:[%s973 + $0x4] sm:$0xf]
        %v3644 = vld [vmem:[%s973 + $0x8] sm:$0xf]
        %v3645 = vld [vmem:[%s973 + $0xc] sm:$0xf]
        %v3646 = vld [vmem:[%s973 + $0x10] sm:$0xf]
        %v3647 = vld [vmem:[%s973 + $0x14] sm:$0xf]
        %v3648 = vld [vmem:[%s973 + $0x18] sm:$0xf]
        %v3649 = vld [vmem:[%s973 + $0x1c] sm:$0xf]
        %v3650 = vld [vmem:[%s973 + $0x20] sm:$0xf]
        %v3651 = vld [vmem:[%s973 + $0x24] sm:$0xf]
        %v3652 = vld [vmem:[%s973 + $0x28] sm:$0xf]
        %v3653 = vld [vmem:[%s973 + $0x2c] sm:$0xf]
        %v3654 = vld [vmem:[%s973 + $0x30] sm:$0xf]
        %v3655 = vld [vmem:[%s973 + $0x34] sm:$0xf]
        %v3656 = vld [vmem:[%s973 + $0x38] sm:$0xf]
        %v3657 = vld [vmem:[%s973 + $0x3c] sm:$0xf]
        %v3658 = vld [vmem:[%s973 + $0x40] sm:$0xf]
        %v3659 = vld [vmem:[%s973 + $0x44] sm:$0xf]
        %v3660 = vld [vmem:[%s973 + $0x48] sm:$0xf]
        %v3661 = vld [vmem:[%s973 + $0x4c] sm:$0xf]
        %v3662 = vld [vmem:[%s973 + $0x50] sm:$0xf]
        %v3663 = vld [vmem:[%s973 + $0x54] sm:$0xf]
        %v3664 = vld [vmem:[%s973 + $0x58] sm:$0xf]
        %v3665 = vld [vmem:[%s973 + $0x5c] sm:$0xf]
        %v3666 = vld [vmem:[%s973 + $0x60] sm:$0xf]
        %v3667 = vld [vmem:[%s973 + $0x64] sm:$0xf]
        %v3668 = vld [vmem:[%s973 + $0x68] sm:$0xf]
        %v3669 = vld [vmem:[%s973 + $0x6c] sm:$0xf]
        %v3670 = vld [vmem:[%s973 + $0x70] sm:$0xf]
        %v3671 = vld [vmem:[%s973 + $0x74] sm:$0xf]
        %v3672 = vld [vmem:[%s973 + $0x78] sm:$0xf]
        %v3673 = vld [vmem:[%s973 + $0x7c] sm:$0xf]
        %v3674 = vld [vmem:[%s981] sm:$0x1]
        %v3676 = vlaneseq
        %v3677 = vshrl.u32 %v3676, 7
        %v3678 = vsub.s32 0, %v3677
        %v3679 = vrot.slane %v3674, %v3678
        %v3713 = vunpack.c.l.b16 %v3642
        %v3714 = vunpack.c.l.b16 %v3643
        %v3715 = vunpack.c.l.b16 %v3644
        %v3716 = vunpack.c.l.b16 %v3645
        %v3717 = vunpack.c.l.b16 %v3646
        %v3718 = vunpack.c.l.b16 %v3647
        %v3719 = vunpack.c.l.b16 %v3648
        %v3720 = vunpack.c.l.b16 %v3649
        %v3721 = vunpack.c.l.b16 %v3650
        %v3722 = vunpack.c.l.b16 %v3651
        %v3723 = vunpack.c.l.b16 %v3652
        %v3724 = vunpack.c.l.b16 %v3653
        %v3725 = vunpack.c.l.b16 %v3654
        %v3726 = vunpack.c.l.b16 %v3655
        %v3727 = vunpack.c.l.b16 %v3656
        %v3728 = vunpack.c.l.b16 %v3657
        %v3729 = vunpack.c.l.b16 %v3658
        %v3730 = vunpack.c.l.b16 %v3659
        %v3731 = vunpack.c.l.b16 %v3660
        %v3732 = vunpack.c.l.b16 %v3661
        %v3733 = vunpack.c.l.b16 %v3662
        %v3734 = vunpack.c.l.b16 %v3663
        %v3735 = vunpack.c.l.b16 %v3664
        %v3736 = vunpack.c.l.b16 %v3665
        %v3737 = vunpack.c.l.b16 %v3666
        %v3738 = vunpack.c.l.b16 %v3667
        %v3739 = vunpack.c.l.b16 %v3668
        %v3740 = vunpack.c.l.b16 %v3669
        %v3741 = vunpack.c.l.b16 %v3670
        %v3742 = vunpack.c.l.b16 %v3671
        %v3743 = vunpack.c.l.b16 %v3672
        %v3744 = vunpack.c.l.b16 %v3673
        %v3745 = vpack.c.b16 %v3714, %v3713
        %v3746 = vpack.c.b16 %v3716, %v3715
        %v3747 = vpack.c.b16 %v3718, %v3717
        %v3748 = vpack.c.b16 %v3720, %v3719
        %v3749 = vpack.c.b16 %v3722, %v3721
        %v3750 = vpack.c.b16 %v3724, %v3723
        %v3751 = vpack.c.b16 %v3726, %v3725
        %v3752 = vpack.c.b16 %v3728, %v3727
        %v3753 = vpack.c.b16 %v3730, %v3729
        %v3754 = vpack.c.b16 %v3732, %v3731
        %v3755 = vpack.c.b16 %v3734, %v3733
        %v3756 = vpack.c.b16 %v3736, %v3735
        %v3757 = vpack.c.b16 %v3738, %v3737
        %v3758 = vpack.c.b16 %v3740, %v3739
        %v3759 = vpack.c.b16 %v3742, %v3741
        %v3760 = vpack.c.b16 %v3744, %v3743
        %3777 = vmatprep.subr.bf16.mxu0 0
        %3778 = vmatpush1.bf16.msra.mxu0 %v3745
        %3779 = vmatprep.subr.bf16.mxu0 0
        %3780 = vmatpush1.bf16.msra.mxu0 %v3746
        %3781 = vmatprep.subr.bf16.mxu0 0
        %3782 = vmatpush1.bf16.msra.mxu0 %v3747
        %3783 = vmatprep.subr.bf16.mxu0 0
        %3784 = vmatpush1.bf16.msra.mxu0 %v3748
        %3785 = vmatprep.subr.bf16.mxu0 0
        %3786 = vmatpush1.bf16.msra.mxu0 %v3749
        %3787 = vmatprep.subr.bf16.mxu0 0
        %3788 = vmatpush1.bf16.msra.mxu0 %v3750
        %3789 = vmatprep.subr.bf16.mxu0 0
        %3790 = vmatpush1.bf16.msra.mxu0 %v3751
        %3791 = vmatprep.subr.bf16.mxu0 0
        %3792 = vmatpush1.bf16.msra.mxu0 %v3752
        %3793 = vmatprep.subr.bf16.mxu0 0
        %3794 = vmatpush1.bf16.msra.mxu0 %v3753
        %3795 = vmatprep.subr.bf16.mxu0 0
        %3796 = vmatpush1.bf16.msra.mxu0 %v3754
        %3797 = vmatprep.subr.bf16.mxu0 0
        %3798 = vmatpush1.bf16.msra.mxu0 %v3755
        %3799 = vmatprep.subr.bf16.mxu0 0
        %3800 = vmatpush1.bf16.msra.mxu0 %v3756
        %3801 = vmatprep.subr.bf16.mxu0 0
        %3802 = vmatpush1.bf16.msra.mxu0 %v3757
        %3803 = vmatprep.subr.bf16.mxu0 0
        %3804 = vmatpush1.bf16.msra.mxu0 %v3758
        %3805 = vmatprep.subr.bf16.mxu0 0
        %3806 = vmatpush1.bf16.msra.mxu0 %v3759
        %3807 = vmatprep.subr.bf16.mxu0 0
        %3808 = vmatpush1.bf16.msra.mxu0 %v3760
        %3809 = vmatprep.mubr.bf16.mxu0 %v3641
        %3810 = vmatmul.mubr.bf16.gmra.mrb[0].mxu0 %v3640
        %v3811 = vpop.f32.mrb[0].mxu0
        %v3812 = vadd.f32 %v3679, %v3811
        %v3813 = vpop.f32.mrb[0].mxu0
        %v3814 = vpop.f32.mrb[0].mxu0
        %v3815 = vadd.f32 %v3679, %v3814
        %v3816 = vpop.f32.mrb[0].mxu0
        %3817 = vdwg.mxu0
        %v3818 = vadd.f32 %v3410, %v3812
        %v3819 = vadd.f32 %v3411, %v3815
        %3820 = vst [vmem:[#allocation2] sm:$0xff] %v3818
        %3821 = vst [vmem:[#allocation2 + $0x8] sm:$0xff] %v3819
        %p3822 = scmp.eq.s32.totalorder %s54, 1
        // Predicated region
        $region173: #{tpu_custom_call.1} parent=103 // pred_check
          %p3823 = pneg %p3822
        $region174: #{tpu_custom_call.1} parent=103 // pred_check_branch
          %3825 = sbr.rel (%p3823) target = $region176
        $region175: #{tpu_custom_call.1} parent=103 // pred_region
          %v3827 = vrot.slane %v3819, 7
          %vm3829 = vcmask 1040384
          %v3830 = vsel %vm3829, %v3818, %v3827
          %v3831 = vld [vmem:[#allocation26] sm:$0x1]
          %v3832 = vld [vmem:[#allocation27] sm:$0x1]
          %vm3833 = vcmask 1041408
          %v3834 = vsel %vm3833, %v3830, 0.0
          %3835 = vadd.xlane.f32.xlu0 %v3834
          %v3836 = vpop.xlane.xlu0 %3835
          %v3837 = vmul.f32 %v3836, %v1641
          %v3838 = vsub.f32 %v3830, %v3837
          %v3839 = vmul.f32 %v3838, %v3838
          %v3840 = vsel %vm3833, %v3839, 0.0
          %3841 = vadd.xlane.f32.xlu0 %v3840
          %v3842 = vpop.xlane.xlu0 %3841
          %v3843 = vmul.f32 %v3842, %v1641
          %v3844 = vadd.f32 %v3843, 1e-06
          %v3845 = vrsqrt.pop %v3844
          %v3846 = vmul.f32 %v3838, %v3845
          %v3848 = vlaneseq
          %v3849 = vshrl.u32 %v3848, 7
          %v3850 = vsub.s32 0, %v3849
          %v3851 = vrot.slane %v3831, %v3850
          %v3853 = vmul.f32 %v3846, %v3851
          %v3855 = vlaneseq
          %v3856 = vshrl.u32 %v3855, 7
          %v3857 = vsub.s32 0, %v3856
          %v3858 = vrot.slane %v3832, %v3857
          %v3860 = vadd.f32 %v3853, %v3858
          %v3861 = vld [vmem:[%s17] sm:$0xff]
          %v3862 = vld [vmem:[%s17 + $0x8] sm:$0xff]
          %v3863 = vld [vmem:[%s17 + $0x10] sm:$0xff]
          %v3864 = vld [vmem:[%s17 + $0x18] sm:$0xff]
          %v3865 = vld [vmem:[%s17 + $0x20] sm:$0xff]
          %v3866 = vld [vmem:[%s17 + $0x28] sm:$0xff]
          %v3867 = vld [vmem:[%s17 + $0x30] sm:$0xff]
          %v3868 = vld [vmem:[%s17 + $0x38] sm:$0xff]
          %v3869 = vld [vmem:[%s17 + $0x40] sm:$0xff]
          %v3870 = vld [vmem:[%s17 + $0x48] sm:$0xff]
          %v3871 = vld [vmem:[%s17 + $0x50] sm:$0xff]
          %v3872 = vld [vmem:[%s17 + $0x58] sm:$0xff]
          %v3873 = vld [vmem:[%s17 + $0x60] sm:$0xff]
          %v3874 = vld [vmem:[%s17 + $0x68] sm:$0xff]
          %v3875 = vld [vmem:[%s17 + $0x70] sm:$0xff]
          %v3876 = vld [vmem:[%s17 + $0x78] sm:$0xff]
          %v3877 = vld [vmem:[%s18] sm:$0x1]
          %v3879 = vlaneseq
          %v3880 = vshrl.u32 %v3879, 7
          %v3881 = vsub.s32 0, %v3880
          %v3882 = vrot.slane %v3877, %v3881
          %3884 = vmatprep.subr.mxu0 0.0
          %3885 = vmatpush1.msra.mxu0 %v3861
          %3886 = vmatprep.subr.mxu0 0.0
          %3887 = vmatpush1.msra.mxu0 %v3862
          %3888 = vmatprep.subr.mxu0 0.0
          %3889 = vmatpush1.msra.mxu0 %v3863
          %3890 = vmatprep.subr.mxu0 0.0
          %3891 = vmatpush1.msra.mxu0 %v3864
          %3892 = vmatprep.subr.mxu0 0.0
          %3893 = vmatpush1.msra.mxu0 %v3865
          %3894 = vmatprep.subr.mxu0 0.0
          %3895 = vmatpush1.msra.mxu0 %v3866
          %3896 = vmatprep.subr.mxu0 0.0
          %3897 = vmatpush1.msra.mxu0 %v3867
          %3898 = vmatprep.subr.mxu0 0.0
          %3899 = vmatpush1.msra.mxu0 %v3868
          %3900 = vmatprep.subr.mxu0 0.0
          %3901 = vmatpush1.msra.mxu0 %v3869
          %3902 = vmatprep.subr.mxu0 0.0
          %3903 = vmatpush1.msra.mxu0 %v3870
          %3904 = vmatprep.subr.mxu0 0.0
          %3905 = vmatpush1.msra.mxu0 %v3871
          %3906 = vmatprep.subr.mxu0 0.0
          %3907 = vmatpush1.msra.mxu0 %v3872
          %3908 = vmatprep.subr.mxu0 0.0
          %3909 = vmatpush1.msra.mxu0 %v3873
          %3910 = vmatprep.subr.mxu0 0.0
          %3911 = vmatpush1.msra.mxu0 %v3874
          %3912 = vmatprep.subr.mxu0 0.0
          %3913 = vmatpush1.msra.mxu0 %v3875
          %3914 = vmatprep.subr.mxu0 0.0
          %3915 = vmatpush1.msra.mxu0 %v3876
          %3916 = vmatprep.subr.mxu0 0.0
          %3917 = vmatpush1.msra.mxu0 0.0
          %3918 = vmatprep.subr.mxu0 0.0
          %3919 = vmatpush1.msra.mxu0 0.0
          %3920 = vmatprep.subr.mxu0 0.0
          %3921 = vmatpush1.msra.mxu0 0.0
          %3922 = vmatprep.subr.mxu0 0.0
          %3923 = vmatpush1.msra.mxu0 0.0
          %3924 = vmatprep.subr.mxu0 0.0
          %3925 = vmatpush1.msra.mxu0 0.0
          %3926 = vmatprep.subr.mxu0 0.0
          %3927 = vmatpush1.msra.mxu0 0.0
          %3928 = vmatprep.subr.mxu0 0.0
          %3929 = vmatpush1.msra.mxu0 0.0
          %3930 = vmatprep.subr.mxu0 0.0
          %3931 = vmatpush1.msra.mxu0 0.0
          %3932 = vmatprep.subr.mxu0 0.0
          %3933 = vmatpush1.msra.mxu0 0.0
          %3934 = vmatprep.subr.mxu0 0.0
          %3935 = vmatpush1.msra.mxu0 0.0
          %3936 = vmatprep.subr.mxu0 0.0
          %3937 = vmatpush1.msra.mxu0 0.0
          %3938 = vmatprep.subr.mxu0 0.0
          %3939 = vmatpush1.msra.mxu0 0.0
          %3940 = vmatprep.subr.mxu0 0.0
          %3941 = vmatpush1.msra.mxu0 0.0
          %3942 = vmatprep.subr.mxu0 0.0
          %3943 = vmatpush1.msra.mxu0 0.0
          %3944 = vmatprep.subr.mxu0 0.0
          %3945 = vmatpush1.msra.mxu0 0.0
          %3946 = vmatprep.subr.mxu0 0.0
          %3947 = vmatpush1.msra.mxu0 0.0
          %3948 = vmatprep.mubr.f32.mxu0 0.0
          %3949 = vmatmul.mubr.f32.gmra.mrb[0].mxu0 %v3860
          %v3950 = vpop.f32.mrb[0].mxu0
          %v3951 = vadd.f32 %v3882, %v3950
          %v3952 = vpop.f32.mrb[0].mxu0
          %3953 = vdwg.mxu0
          %v3954 = vmax.f32 %v3951, 0.0
          %v3955 = vld [vmem:[%s19] sm:$0xff]
          %v3956 = vld [vmem:[%s19 + $0x8] sm:$0xff]
          %v3957 = vld [vmem:[%s19 + $0x10] sm:$0xff]
          %v3958 = vld [vmem:[%s19 + $0x18] sm:$0xff]
          %v3959 = vld [vmem:[%s19 + $0x20] sm:$0xff]
          %v3960 = vld [vmem:[%s19 + $0x28] sm:$0xff]
          %v3961 = vld [vmem:[%s19 + $0x30] sm:$0xff]
          %v3962 = vld [vmem:[%s19 + $0x38] sm:$0xff]
          %v3963 = vld [vmem:[%s20] sm:$0x1]
          %v3965 = vlaneseq
          %v3966 = vshrl.u32 %v3965, 7
          %v3967 = vsub.s32 0, %v3966
          %v3968 = vrot.slane %v3963, %v3967
          %v3971 = vsel %vm2616, %v3954, 0
          %3973 = vmatprep.subr.mxu0 0.0
          %3974 = vmatpush1.msra.mxu0 %v3955
          %3975 = vmatprep.subr.mxu0 0.0
          %3976 = vmatpush1.msra.mxu0 %v3956
          %3977 = vmatprep.subr.mxu0 0.0
          %3978 = vmatpush1.msra.mxu0 %v3957
          %3979 = vmatprep.subr.mxu0 0.0
          %3980 = vmatpush1.msra.mxu0 %v3958
          %3981 = vmatprep.subr.mxu0 0.0
          %3982 = vmatpush1.msra.mxu0 %v3959
          %3983 = vmatprep.subr.mxu0 0.0
          %3984 = vmatpush1.msra.mxu0 %v3960
          %3985 = vmatprep.subr.mxu0 0.0
          %3986 = vmatpush1.msra.mxu0 %v3961
          %3987 = vmatprep.subr.mxu0 0.0
          %3988 = vmatpush1.msra.mxu0 %v3962
          %3989 = vmatprep.subr.mxu0 0.0
          %3990 = vmatpush1.msra.mxu0 0.0
          %3991 = vmatprep.subr.mxu0 0.0
          %3992 = vmatpush1.msra.mxu0 0.0
          %3993 = vmatprep.subr.mxu0 0.0
          %3994 = vmatpush1.msra.mxu0 0.0
          %3995 = vmatprep.subr.mxu0 0.0
          %3996 = vmatpush1.msra.mxu0 0.0
          %3997 = vmatprep.subr.mxu0 0.0
          %3998 = vmatpush1.msra.mxu0 0.0
          %3999 = vmatprep.subr.mxu0 0.0
          %4000 = vmatpush1.msra.mxu0 0.0
          %4001 = vmatprep.subr.mxu0 0.0
          %4002 = vmatpush1.msra.mxu0 0.0
          %4003 = vmatprep.subr.mxu0 0.0
          %4004 = vmatpush1.msra.mxu0 0.0
          %4005 = vmatprep.subr.mxu0 0.0
          %4006 = vmatpush1.msra.mxu0 0.0
          %4007 = vmatprep.subr.mxu0 0.0
          %4008 = vmatpush1.msra.mxu0 0.0
          %4009 = vmatprep.subr.mxu0 0.0
          %4010 = vmatpush1.msra.mxu0 0.0
          %4011 = vmatprep.subr.mxu0 0.0
          %4012 = vmatpush1.msra.mxu0 0.0
          %4013 = vmatprep.subr.mxu0 0.0
          %4014 = vmatpush1.msra.mxu0 0.0
          %4015 = vmatprep.subr.mxu0 0.0
          %4016 = vmatpush1.msra.mxu0 0.0
          %4017 = vmatprep.subr.mxu0 0.0
          %4018 = vmatpush1.msra.mxu0 0.0
          %4019 = vmatprep.subr.mxu0 0.0
          %4020 = vmatpush1.msra.mxu0 0.0
          %4021 = vmatprep.subr.mxu0 0.0
          %4022 = vmatpush1.msra.mxu0 0.0
          %4023 = vmatprep.subr.mxu0 0.0
          %4024 = vmatpush1.msra.mxu0 0.0
          %4025 = vmatprep.subr.mxu0 0.0
          %4026 = vmatpush1.msra.mxu0 0.0
          %4027 = vmatprep.subr.mxu0 0.0
          %4028 = vmatpush1.msra.mxu0 0.0
          %4029 = vmatprep.subr.mxu0 0.0
          %4030 = vmatpush1.msra.mxu0 0.0
          %4031 = vmatprep.subr.mxu0 0.0
          %4032 = vmatpush1.msra.mxu0 0.0
          %4033 = vmatprep.subr.mxu0 0.0
          %4034 = vmatpush1.msra.mxu0 0.0
          %4035 = vmatprep.subr.mxu0 0.0
          %4036 = vmatpush1.msra.mxu0 0.0
          %4037 = vmatprep.mubr.f32.mxu0 0.0
          %4038 = vmatmul.mubr.f32.gmra.mrb[0].mxu0 %v3971
          %v4039 = vpop.f32.mrb[0].mxu0
          %v4040 = vadd.f32 %v3968, %v4039
          %v4041 = vpop.f32.mrb[0].mxu0
          %4042 = vdwg.mxu0
          %vm4043 = vcmask 25600
          %4044 = vst.msk [vmem:[#allocation29] sm:$0x3] %vm4043, %v4040
        $region176: #{tpu_custom_call.1} parent=103 // pred_fallthru
          _
        // Predicated region
        $region177: #{tpu_custom_call.1} parent=103 // pred_check
          %p4045 = pneg %p568
        $region178: #{tpu_custom_call.1} parent=103 // pred_check_branch
          %4047 = sbr.rel (%p4045) target = $region180
        $region179: #{tpu_custom_call.1} parent=103 // pred_region
          %s4049 = ssub.s32 32, 32
          %4050 = vsyncadd [#allocation5], %s4049
          %s4052 = sshll.u32 [#allocation29], 4
          %s4053 = int_to_ptr.vmem [resolvable:$true] %s4052
          %4055 = dma.vmem_to_hbm [thread:$0]  %s4053, 32, %s21, [#allocation5]
        $region180: #{tpu_custom_call.1} parent=103 // pred_fallthru
          _
        // Predicated region
        $region181: #{tpu_custom_call.1} parent=103 // pred_check
          %p4056 = pneg %p568
        $region182: #{tpu_custom_call.1} parent=103 // pred_check_branch
          %4058 = sbr.rel (%p4056) target = $region184
        $region183: #{tpu_custom_call.1} parent=103 // pred_region
          %4059 = dma.done [#allocation5], 32
        $region184: #{tpu_custom_call.1} parent=103 // pred_fallthru
          _
      $region104: #{tpu_custom_call.1} parent=5 // pred_fallthru
        _
      %p4060 = scmp.le.s32.totalorder 2, %s49
      // Predicated region
      $region185: #{tpu_custom_call.1} parent=5 // pred_check
        %p4061 = pneg %p4060
      $region186: #{tpu_custom_call.1} parent=5 // pred_check_branch
        %4063 = sbr.rel (%p4061) target = $region188
      $region187: #{tpu_custom_call.1} parent=5 // pred_region
        %s4064 = ssub.s32 %s49, 2
      $region188: #{tpu_custom_call.1} parent=5 // pred_fallthru
        _
    $region6: #{tpu_custom_call.1} parent=1 // loop_footer
      %s53 = sadd.s32 1, %s49
    $region7: #{tpu_custom_call.1} parent=1 // loop_footer_branch
      %48 = sbr.rel target = $region3
    $region8: #{tpu_custom_call.1} parent=1 // loop_exit
      _
    %4065 = vsyncpa [#allocation4], 1
    %s4066 = scalar_lea.sflag [#allocation4], 1
    %4067 = vsyncpa %s4066, 1
    %4068 = vsyncpa [#allocation7], 1
    %4069 = vsyncpa [#allocation10], 1
    %s4070 = scalar_lea.sflag [#allocation10], 1
    %4071 = vsyncpa %s4070, 1
    %4072 = vsyncpa [#allocation13], 1
    %s4073 = scalar_lea.sflag [#allocation13], 1
    %4074 = vsyncpa %s4073, 1
    %4075 = vsyncpa [#allocation16], 1
    %s4076 = scalar_lea.sflag [#allocation16], 1
    %4077 = vsyncpa %s4076, 1
    %4078 = vsyncpa [#allocation19], 1
    %s4079 = scalar_lea.sflag [#allocation19], 1
    %4080 = vsyncpa %s4079, 1
    %4081 = vsyncpa [#allocation22], 1
    %s4082 = scalar_lea.sflag [#allocation22], 1
    %4083 = vsyncpa %s4082, 1
    %4084 = vsyncpa [#allocation25], 1
    %s4085 = scalar_lea.sflag [#allocation25], 1
    %4086 = vsyncpa %s4085, 1
    %4087 = vsyncpa [#allocation28], 1
    %4088 = vsyncpa [#allocation5], 1
    %s4089 = scalar_lea.sflag [#allocation5], 1
    %4090 = vsyncpa %s4089, 1

</llo_original>
